<compile_context>
chip_gen: v7x
topology: tpu7x:2x2x1
jax: 0.10.0
libtpu: 0.0.40
codegen_flags: <defaults>
</compile_context>

<pallas_src>
import functools
import math

import jax
import jax.numpy as jnp
from jax import lax
from jax.experimental import pallas as pl
from jax.experimental.pallas import tpu as pltpu

LN10 = math.log(10.0)
BN_EPS = 1e-5  # torch.nn.BatchNorm1d default eps


def logtbn_kernel(x_ref, a_ref, gamma_ref, beta_ref, o_ref, cand_ref, *, chunk, t_real):
    B, bf, Tp = x_ref.shape            # Tp is the 128-padded time length
    N = B * bf
    n = B * t_real                     # BN sample count (real frames only)
    k = (t_real - 1) // 2              # torch lower-median rank
    n_chunks = Tp // chunk

    x = x_ref[...]                     # (B, bf, Tp)
    a = a_ref[...]                     # (bf, 1) per-band 'a'

    # ---- Log1p: log(1 + 10**a * x) ----
    scale = jnp.exp(a * LN10)                       # 10**a, hoisted out of all loops
    y = jnp.log1p(scale[None, :, :] * x)            # (B, bf, Tp)

    # validity mask over the (possibly padded) time axis
    tmask = lax.broadcasted_iota(jnp.int32, (1, Tp), 1) < t_real   # (1, Tp)
    w3 = tmask.astype(jnp.float32)[None]                           # (1, 1, Tp)

    # ---- lower median over time (== torch.median) ----
    # m = max{ y_c : #(y_t < y_c) <= k } is exactly the k-th smallest element, so one
    # strict-less count per candidate suffices.  Orientation: T on lanes, candidates on
    # sublanes; the count is a fused VPU compare + lane-sum (no materialized compare matrix,
    # no MXU weight traffic).  Padded frames are +inf: they never count and never win.
    y2 = y.reshape(N, Tp)
    y_med = jnp.where(tmask, y2, jnp.inf)           # (N, Tp)
    cand_ref[...] = y_med                           # candidate source in VMEM scratch
    y3 = y_med.reshape(N, 1, Tp)                    # compare source (hoisted sublane splat)
    kf = jnp.float32(k)
    neg_inf = jnp.float32(-jnp.inf)

    def chunk_body(i, m_acc):
        s = pl.multiple_of(i * chunk, chunk)
        cand = cand_ref[:, pl.ds(s, chunk)]                     # (N, chunk), lane-dense
        lt = y3 < cand[:, :, None]                              # (N, chunk, Tp), T on lanes
        cnt = jnp.sum(jnp.where(lt, 1.0, 0.0), axis=-1)         # (N, chunk) exact f32 counts
        keep = jnp.where(cnt <= kf, cand, neg_inf)              # excluded candidates -> -inf
        return jnp.maximum(m_acc, jnp.max(keep, axis=-1, keepdims=True))

    m0 = jnp.full((N, 1), -jnp.inf, dtype=jnp.float32)
    m = lax.fori_loop(0, n_chunks, chunk_body, m0).reshape(B, bf, 1)   # per-(b, band) median

    # ---- TemporalBatchNorm (training-mode batch stats), centered two-pass for numerics ----
    def _bsum(v):  # sum over (batch, time) with keepdims, masked frames already zeroed
        return jnp.sum(jnp.sum(v, axis=2, keepdims=True), axis=0, keepdims=True)

    inv_n = jnp.float32(1.0 / n)
    mean0 = _bsum(y * w3) * inv_n                   # (1, bf, 1)
    d0 = (y - mean0) * w3
    var0 = _bsum(d0 * d0) * inv_n                   # biased variance (BN training mode)

    c1 = (y - m) * w3                               # ch1 = y - median
    mean1 = _bsum(c1) * inv_n
    d1 = (c1 - mean1) * w3
    var1 = _bsum(d1 * d1) * inv_n

    # Fold mean / rsqrt / gamma / beta (and the median subtraction for ch1) into one scale and
    # one bias, so the large (B, bf, Tp) write-out is a single multiply-add per element.
    g0 = gamma_ref[0][None]                         # (1, bf, 1)
    b0 = beta_ref[0][None]
    g1 = gamma_ref[1][None]
    b1 = beta_ref[1][None]
    s0 = lax.rsqrt(var0 + BN_EPS) * g0
    o0 = b0 - mean0 * s0
    s1 = lax.rsqrt(var1 + BN_EPS) * g1
    o1 = b1 - (mean1 + m) * s1                      # (B, bf, 1): median folded into the bias

    o_ref[:, 0, :, :] = (y * s0 + o0).astype(o_ref.dtype)
    o_ref[:, 1, :, :] = (y * s1 + o1).astype(o_ref.dtype)


def _default_vmem_limit_bytes():
    cap = 64 * 1024 * 1024              # conservative default (v7x per-core VMEM)
    try:
        info = pltpu.get_tpu_info()
        cap = int(getattr(info, "vmem_capacity_bytes", cap)) or cap
    except Exception:
        pass
    # ~3/4 of physical VMEM as the scoped limit (v5e/v6e: 96 MiB, v7x/unknown: 48 MiB)
    return min(max(int(cap * 3 // 4), 32 * 1024 * 1024), 100 * 1024 * 1024)


def _pick_tiling(B, F, Tp, vmem_limit_bytes):
    """Pick (band_block, candidate_chunk).  Prefers the largest legal band block that keeps
    >= 2 grid steps (so the 'parallel' band axis shards across v7x's 2 TensorCores), then the
    largest candidate chunk (power of two <= 128, always divides the 128-padded Tp) whose
    per-chunk compare live set plus the double-buffered IO tiles fits the VMEM budget."""
    budget = int(vmem_limit_bytes * 0.5)
    cands = [d for d in range(1, F + 1) if F % d == 0 and (d % 8 == 0 or d == F)]
    multi = sorted([d for d in cands if F // d >= 2], reverse=True)
    single = sorted([d for d in cands if F // d < 2], reverse=True)

    def bytes_needed(d, ch):
        rows = B * d
        io = 24 * B * d * Tp        # double-buffered f32 (B,d,Tp) in + (B,2,d,Tp) out tiles
        work = 24 * B * d * Tp      # y / candidate scratch / centered-BN & write-out temps
        med = 6 * rows * ch * Tp    # live compare+count set of one candidate chunk (f32+slack)
        return io + work + med

    def chunk_for(d):
        ch = 128
        while ch > 8 and bytes_needed(d, ch) > budget:
            ch //= 2
        return ch if bytes_needed(d, ch) <= budget else None

    for d in multi + single:
        ch = chunk_for(d)
        if ch is not None:
            return d, ch
    # Nothing meets the (deliberately pessimistic) budget: smallest legal block, smallest chunk.
    return min(cands), 8


def logtbn(x, a, gamma, beta, *, band_block=None, chunk=None, vmem_limit_bytes=None):
    """x: (B, F, T) float; a: (F,) per-band Log1p exponent;
    gamma/beta: (2*F,) BatchNorm1d affine params (feature index = channel*F + band)."""
    B, F, T = x.shape
    assert T >= 1
    Tp = ((T + 127) // 128) * 128                   # lane-dense time axis
    if vmem_limit_bytes is None:
        vmem_limit_bytes = _default_vmem_limit_bytes()
    auto_bb, auto_ck = _pick_tiling(B, F, Tp, vmem_limit_bytes)
    if band_block is None:
        band_block = auto_bb
    if chunk is None:
        chunk = auto_ck
    assert F % band_block == 0 and (band_block % 8 == 0 or band_block == F)
    assert chunk >= 1 and Tp % chunk == 0

    x_in = x.astype(jnp.float32)
    if Tp != T:
        x_in = jnp.pad(x_in, ((0, 0), (0, 0), (0, Tp - T)))
    a2 = a.reshape(F, 1).astype(jnp.float32)
    g = gamma.reshape(2, F, 1).astype(jnp.float32)
    b = beta.reshape(2, F, 1).astype(jnp.float32)

    kernel = functools.partial(logtbn_kernel, chunk=int(chunk), t_real=int(T))
    out = pl.pallas_call(
        kernel,
        out_shape=jax.ShapeDtypeStruct((B, 2, F, Tp), jnp.float32),
        grid_spec=pltpu.PrefetchScalarGridSpec(
            num_scalar_prefetch=0,
            grid=(F // band_block,),
            in_specs=[
                pl.BlockSpec((B, band_block, Tp), lambda i: (0, i, 0)),
                pl.BlockSpec((band_block, 1), lambda i: (i, 0)),
                pl.BlockSpec((2, band_block, 1), lambda i: (0, i, 0)),
                pl.BlockSpec((2, band_block, 1), lambda i: (0, i, 0)),
            ],
            out_specs=pl.BlockSpec((B, 2, band_block, Tp), lambda i: (0, 0, i, 0)),
            scratch_shapes=[pltpu.VMEM((B * band_block, Tp), jnp.float32)],
        ),
        compiler_params=pltpu.CompilerParams(
            dimension_semantics=("parallel",),
            vmem_limit_bytes=int(vmem_limit_bytes),
        ),
    )(x_in, a2, g, b)
    if Tp != T:
        out = out[..., :T]
    return out.astype(x.dtype)


def logtbn_ref(x, a, gamma, beta):
    """Plain-JAX reference reproducing the PyTorch forward (training-mode BN)."""
    B, F, T = x.shape
    y = jnp.log1p((10.0 ** a)[None, :, None] * x)            # Log1p, per-band 'a'
    x4 = y[:, None]                                           # (B, 1, F, T)
    k = (T - 1) // 2
    m = jnp.sort(x4, axis=-1)[..., k:k + 1]                   # torch lower median
    x4 = jnp.concatenate([x4, x4 - m], axis=1)                # append filtered channel
    v = x4.reshape(B, 2 * F, T)                               # TBN per_channel reshape
    mean = jnp.mean(v, axis=(0, 2), keepdims=True)
    var = jnp.mean((v - mean) ** 2, axis=(0, 2), keepdims=True)
    out = (v - mean) / jnp.sqrt(var + BN_EPS) * gamma[None, :, None] + beta[None, :, None]
    return out.reshape(B, 2, F, T)


if __name__ == "__main__":
    key = jax.random.PRNGKey(0)

    def run_case(B, F, T):
        x = jax.random.uniform(jax.random.fold_in(key, T), (B, F, T), dtype=jnp.float32)
        # deterministic synthetic parameters (shapes from __init__: a->(F,), BN weight/bias->(2*F,))
        a = 0.3 + 0.01 * jnp.arange(F, dtype=jnp.float32)
        gamma = 1.0 + 0.05 * jnp.arange(2 * F, dtype=jnp.float32)
        beta = -0.1 + 0.02 * jnp.arange(2 * F, dtype=jnp.float32)

        out = jax.block_until_ready(logtbn(x, a, gamma, beta))
        ref = logtbn_ref(x, a, gamma, beta)

        assert out.shape == (B, 2, F, T) and out.dtype == jnp.float32
        err = float(jnp.max(jnp.abs(out - ref)))
        assert jnp.allclose(out, ref, atol=1e-4, rtol=1e-4), err

    run_case(2, 16, 128)   # lane-aligned T; band axis splits into 2 'parallel' grid steps
    run_case(2, 16, 100)   # non-multiple-of-128 T exercises the pad + in-kernel mask path
    print("KERNEL_OK")
</pallas_src>

<mosaic_0001>
module attributes {stable_mosaic.version = 11 : i64} {
  func.func @logtbn_kernel(%arg0: i32, %arg1: memref<2x8x128xf32, #tpu.memory_space<vmem>>, %arg2: memref<8x1xf32, #tpu.memory_space<vmem>>, %arg3: memref<2x8x1xf32, #tpu.memory_space<vmem>>, %arg4: memref<2x8x1xf32, #tpu.memory_space<vmem>>, %arg5: memref<2x2x8x128xf32, #tpu.memory_space<vmem>>, %arg6: memref<16x128xf32, #tpu.memory_space<vmem>>) attributes {dimension_semantics = [#tpu.dimension_semantics<parallel>], iteration_bounds = array<i64: 2>, scalar_prefetch = 0 : i64, scratch_operands = 1 : i64, tpu.core_type = #tpu.core_type<tc>, window_params = [{transform_indices = @transform_0, window_bounds = array<i64: 2, 8, 128>}, {transform_indices = @transform_1, window_bounds = array<i64: 8, 1>}, {transform_indices = @transform_2, window_bounds = array<i64: 2, 8, 1>}, {transform_indices = @transform_3, window_bounds = array<i64: 2, 8, 1>}, {transform_indices = @transform_4, window_bounds = array<i64: 2, 2, 8, 128>}]} {
    %c0 = arith.constant 0 : index
    %c0_0 = arith.constant 0 : index
    %c0_1 = arith.constant 0 : index
    %0 = vector.load %arg1[%c0, %c0_0, %c0_1] : memref<2x8x128xf32, #tpu.memory_space<vmem>>, vector<2x8x128xf32>
    %c0_2 = arith.constant 0 : index
    %c0_3 = arith.constant 0 : index
    %1 = vector.load %arg2[%c0_2, %c0_3] : memref<8x1xf32, #tpu.memory_space<vmem>>, vector<8x1xf32>
    %cst = arith.constant 2.30258512 : f32
    %2 = vector.broadcast %cst : f32 to vector<8x1xf32>
    %3 = arith.mulf %1, %2 : vector<8x1xf32>
    %4 = math.exp %3 : vector<8x1xf32>
    %5 = vector.shape_cast %4 : vector<8x1xf32> to vector<1x8x1xf32>
    %6 = vector.broadcast %5 : vector<1x8x1xf32> to vector<2x8x128xf32>
    %7 = arith.mulf %6, %0 : vector<2x8x128xf32>
    %8 = math.log1p %7 : vector<2x8x128xf32>
    %9 = tpu.iota {dimensions = array<i32: 1>} : vector<1x128xi32>
    %c128_i32 = arith.constant 128 : i32
    %10 = vector.broadcast %c128_i32 : i32 to vector<1x128xi32>
    %11 = arith.cmpi slt, %9, %10 : vector<1x128xi32>
    %12 = arith.extui %11 : vector<1x128xi1> to vector<1x128xi32>
    %13 = arith.sitofp %12 : vector<1x128xi32> to vector<1x128xf32>
    %14 = vector.shape_cast %13 : vector<1x128xf32> to vector<1x1x128xf32>
    %15 = vector.shape_cast %8 : vector<2x8x128xf32> to vector<16x128xf32>
    %cst_4 = arith.constant 0x7F800000 : f32
    %16 = vector.shape_cast %11 : vector<1x128xi1> to vector<1x128xi1>
    %17 = vector.broadcast %16 : vector<1x128xi1> to vector<16x128xi1>
    %18 = vector.broadcast %cst_4 : f32 to vector<16x128xf32>
    %19 = arith.select %17, %15, %18 : vector<16x128xi1>, vector<16x128xf32>
    %c0_5 = arith.constant 0 : index
    %c0_6 = arith.constant 0 : index
    %20 = vector.load %arg6[%c0_5, %c0_6] : memref<16x128xf32, #tpu.memory_space<vmem>>, vector<16x128xf32>
    tpu.vector_store %arg6[%c0_5, %c0_6], %19 {strides = array<i32>} : memref<16x128xf32, #tpu.memory_space<vmem>>, vector<16x128xf32>,
    %21 = vector.shape_cast %19 : vector<16x128xf32> to vector<16x1x128xf32>
    %cst_7 = arith.constant 0xFF800000 : f32
    %22 = vector.broadcast %cst_7 : f32 to vector<16x1xf32>
    %cst_8 = arith.constant 6.300000e+01 : f32
    %cst_9 = arith.constant 0xFF800000 : f32
    %c0_i32 = arith.constant 0 : i32
    %c128_i32_10 = arith.constant 128 : i32
    %23 = arith.muli %c0_i32, %c128_i32_10 : i32
    %24 = tpu.assume_multiple %23, 128 : i32
    %c0_11 = arith.constant 0 : index
    %25 = arith.index_cast %24 : i32 to index
    %26 = vector.load %arg6[%c0_11, %25] : memref<16x128xf32, #tpu.memory_space<vmem>>, vector<16x128xf32>
    %27 = vector.shape_cast %26 : vector<16x128xf32> to vector<16x128x1xf32>
    %28 = vector.broadcast %21 : vector<16x1x128xf32> to vector<16x128x128xf32>
    %29 = vector.broadcast %27 : vector<16x128x1xf32> to vector<16x128x128xf32>
    %30 = arith.cmpf olt, %28, %29 : vector<16x128x128xf32>
    %cst_12 = arith.constant 1.000000e+00 : f32
    %cst_13 = arith.constant 0.000000e+00 : f32
    %31 = vector.broadcast %cst_12 : f32 to vector<16x128x128xf32>
    %32 = vector.broadcast %cst_13 : f32 to vector<16x128x128xf32>
    %33 = arith.select %30, %31, %32 : vector<16x128x128xi1>, vector<16x128x128xf32>
    %cst_14 = arith.constant dense<0.000000e+00> : vector<16x128xf32>
    %34 = vector.multi_reduction <add>, %33, %cst_14 [2] : vector<16x128x128xf32> to vector<16x128xf32>
    %35 = vector.broadcast %cst_8 : f32 to vector<16x128xf32>
    %36 = arith.cmpf ole, %34, %35 : vector<16x128xf32>
    %37 = vector.broadcast %cst_9 : f32 to vector<16x128xf32>
    %38 = arith.select %36, %26, %37 : vector<16x128xi1>, vector<16x128xf32>
    %cst_15 = arith.constant dense<0xFF800000> : vector<16xf32>
    %39 = vector.multi_reduction <maximumf>, %38, %cst_15 [1] : vector<16x128xf32> to vector<16xf32>
    %40 = vector.shape_cast %39 : vector<16xf32> to vector<16x1xf32>
    %41 = arith.maximumf %22, %40 : vector<16x1xf32>
    %c1_i32 = arith.constant 1 : i32
    %42 = vector.shape_cast %41 : vector<16x1xf32> to vector<2x8x1xf32>
    %43 = vector.broadcast %14 : vector<1x1x128xf32> to vector<2x8x128xf32>
    %44 = arith.mulf %8, %43 : vector<2x8x128xf32>
    %cst_16 = arith.constant dense<0.000000e+00> : vector<2x8xf32>
    %45 = vector.multi_reduction <add>, %44, %cst_16 [2] : vector<2x8x128xf32> to vector<2x8xf32>
    %46 = vector.shape_cast %45 : vector<2x8xf32> to vector<2x8x1xf32>
    %cst_17 = arith.constant dense<0.000000e+00> : vector<8x1xf32>
    %47 = vector.multi_reduction <add>, %46, %cst_17 [0] : vector<2x8x1xf32> to vector<8x1xf32>
    %48 = vector.shape_cast %47 : vector<8x1xf32> to vector<1x8x1xf32>
    %cst_18 = arith.constant 3.906250e-03 : f32
    %49 = vector.broadcast %cst_18 : f32 to vector<1x8x1xf32>
    %50 = arith.mulf %48, %49 : vector<1x8x1xf32>
    %51 = vector.broadcast %50 : vector<1x8x1xf32> to vector<2x8x128xf32>
    %52 = arith.subf %8, %51 : vector<2x8x128xf32>
    %53 = vector.broadcast %14 : vector<1x1x128xf32> to vector<2x8x128xf32>
    %54 = arith.mulf %52, %53 : vector<2x8x128xf32>
    %55 = arith.mulf %54, %54 : vector<2x8x128xf32>
    %cst_19 = arith.constant dense<0.000000e+00> : vector<2x8xf32>
    %56 = vector.multi_reduction <add>, %55, %cst_19 [2] : vector<2x8x128xf32> to vector<2x8xf32>
    %57 = vector.shape_cast %56 : vector<2x8xf32> to vector<2x8x1xf32>
    %cst_20 = arith.constant dense<0.000000e+00> : vector<8x1xf32>
    %58 = vector.multi_reduction <add>, %57, %cst_20 [0] : vector<2x8x1xf32> to vector<8x1xf32>
    %59 = vector.shape_cast %58 : vector<8x1xf32> to vector<1x8x1xf32>
    %cst_21 = arith.constant 3.906250e-03 : f32
    %60 = vector.broadcast %cst_21 : f32 to vector<1x8x1xf32>
    %61 = arith.mulf %59, %60 : vector<1x8x1xf32>
    %62 = vector.broadcast %42 : vector<2x8x1xf32> to vector<2x8x128xf32>
    %63 = arith.subf %8, %62 : vector<2x8x128xf32>
    %64 = vector.broadcast %14 : vector<1x1x128xf32> to vector<2x8x128xf32>
    %65 = arith.mulf %63, %64 : vector<2x8x128xf32>
    %cst_22 = arith.constant dense<0.000000e+00> : vector<2x8xf32>
    %66 = vector.multi_reduction <add>, %65, %cst_22 [2] : vector<2x8x128xf32> to vector<2x8xf32>
    %67 = vector.shape_cast %66 : vector<2x8xf32> to vector<2x8x1xf32>
    %cst_23 = arith.constant dense<0.000000e+00> : vector<8x1xf32>
    %68 = vector.multi_reduction <add>, %67, %cst_23 [0] : vector<2x8x1xf32> to vector<8x1xf32>
    %69 = vector.shape_cast %68 : vector<8x1xf32> to vector<1x8x1xf32>
    %cst_24 = arith.constant 3.906250e-03 : f32
    %70 = vector.broadcast %cst_24 : f32 to vector<1x8x1xf32>
    %71 = arith.mulf %69, %70 : vector<1x8x1xf32>
    %72 = vector.broadcast %71 : vector<1x8x1xf32> to vector<2x8x128xf32>
    %73 = arith.subf %65, %72 : vector<2x8x128xf32>
    %74 = vector.broadcast %14 : vector<1x1x128xf32> to vector<2x8x128xf32>
    %75 = arith.mulf %73, %74 : vector<2x8x128xf32>
    %76 = arith.mulf %75, %75 : vector<2x8x128xf32>
    %cst_25 = arith.constant dense<0.000000e+00> : vector<2x8xf32>
    %77 = vector.multi_reduction <add>, %76, %cst_25 [2] : vector<2x8x128xf32> to vector<2x8xf32>
    %78 = vector.shape_cast %77 : vector<2x8xf32> to vector<2x8x1xf32>
    %cst_26 = arith.constant dense<0.000000e+00> : vector<8x1xf32>
    %79 = vector.multi_reduction <add>, %78, %cst_26 [0] : vector<2x8x1xf32> to vector<8x1xf32>
    %80 = vector.shape_cast %79 : vector<8x1xf32> to vector<1x8x1xf32>
    %cst_27 = arith.constant 3.906250e-03 : f32
    %81 = vector.broadcast %cst_27 : f32 to vector<1x8x1xf32>
    %82 = arith.mulf %80, %81 : vector<1x8x1xf32>
    %c0_28 = arith.constant 0 : index
    %c0_29 = arith.constant 0 : index
    %c0_30 = arith.constant 0 : index
    %83 = vector.load %arg3[%c0_28, %c0_29, %c0_30] : memref<2x8x1xf32, #tpu.memory_space<vmem>>, vector<1x8x1xf32>
    %84 = vector.shape_cast %83 : vector<1x8x1xf32> to vector<8x1xf32>
    %85 = vector.shape_cast %84 : vector<8x1xf32> to vector<1x8x1xf32>
    %c0_31 = arith.constant 0 : index
    %c0_32 = arith.constant 0 : index
    %c0_33 = arith.constant 0 : index
    %86 = vector.load %arg4[%c0_31, %c0_32, %c0_33] : memref<2x8x1xf32, #tpu.memory_space<vmem>>, vector<1x8x1xf32>
    %87 = vector.shape_cast %86 : vector<1x8x1xf32> to vector<8x1xf32>
    %88 = vector.shape_cast %87 : vector<8x1xf32> to vector<1x8x1xf32>
    %c1 = arith.constant 1 : index
    %c0_34 = arith.constant 0 : index
    %c0_35 = arith.constant 0 : index
    %89 = vector.load %arg3[%c1, %c0_34, %c0_35] : memref<2x8x1xf32, #tpu.memory_space<vmem>>, vector<1x8x1xf32>
    %90 = vector.shape_cast %89 : vector<1x8x1xf32> to vector<8x1xf32>
    %91 = vector.shape_cast %90 : vector<8x1xf32> to vector<1x8x1xf32>
    %c1_36 = arith.constant 1 : index
    %c0_37 = arith.constant 0 : index
    %c0_38 = arith.constant 0 : index
    %92 = vector.load %arg4[%c1_36, %c0_37, %c0_38] : memref<2x8x1xf32, #tpu.memory_space<vmem>>, vector<1x8x1xf32>
    %93 = vector.shape_cast %92 : vector<1x8x1xf32> to vector<8x1xf32>
    %94 = vector.shape_cast %93 : vector<8x1xf32> to vector<1x8x1xf32>
    %cst_39 = arith.constant 9.99999974E-6 : f32
    %95 = vector.broadcast %cst_39 : f32 to vector<1x8x1xf32>
    %96 = arith.addf %61, %95 : vector<1x8x1xf32>
    %97 = math.rsqrt %96 : vector<1x8x1xf32>
    %98 = arith.mulf %97, %85 : vector<1x8x1xf32>
    %99 = arith.mulf %50, %98 : vector<1x8x1xf32>
    %100 = arith.subf %88, %99 : vector<1x8x1xf32>
    %cst_40 = arith.constant 9.99999974E-6 : f32
    %101 = vector.broadcast %cst_40 : f32 to vector<1x8x1xf32>
    %102 = arith.addf %82, %101 : vector<1x8x1xf32>
    %103 = math.rsqrt %102 : vector<1x8x1xf32>
    %104 = arith.mulf %103, %91 : vector<1x8x1xf32>
    %105 = vector.broadcast %71 : vector<1x8x1xf32> to vector<2x8x1xf32>
    %106 = arith.addf %105, %42 : vector<2x8x1xf32>
    %107 = vector.broadcast %104 : vector<1x8x1xf32> to vector<2x8x1xf32>
    %108 = arith.mulf %106, %107 : vector<2x8x1xf32>
    %109 = vector.broadcast %94 : vector<1x8x1xf32> to vector<2x8x1xf32>
    %110 = arith.subf %109, %108 : vector<2x8x1xf32>
    %111 = vector.broadcast %98 : vector<1x8x1xf32> to vector<2x8x128xf32>
    %112 = arith.mulf %8, %111 : vector<2x8x128xf32>
    %113 = vector.broadcast %100 : vector<1x8x1xf32> to vector<2x8x128xf32>
    %114 = arith.addf %112, %113 : vector<2x8x128xf32>
    %c0_41 = arith.constant 0 : index
    %c0_42 = arith.constant 0 : index
    %c0_43 = arith.constant 0 : index
    %c0_44 = arith.constant 0 : index
    %115 = vector.load %arg5[%c0_41, %c0_42, %c0_43, %c0_44] : memref<2x2x8x128xf32, #tpu.memory_space<vmem>>, vector<2x1x8x128xf32>
    %116 = vector.shape_cast %115 : vector<2x1x8x128xf32> to vector<2x8x128xf32>
    %117 = vector.shape_cast %114 : vector<2x8x128xf32> to vector<2x1x8x128xf32>
    tpu.vector_store %arg5[%c0_41, %c0_42, %c0_43, %c0_44], %117 {strides = array<i32>} : memref<2x2x8x128xf32, #tpu.memory_space<vmem>>, vector<2x1x8x128xf32>,
    %118 = vector.broadcast %104 : vector<1x8x1xf32> to vector<2x8x128xf32>
    %119 = arith.mulf %8, %118 : vector<2x8x128xf32>
    %120 = vector.broadcast %110 : vector<2x8x1xf32> to vector<2x8x128xf32>
    %121 = arith.addf %119, %120 : vector<2x8x128xf32>
    %c0_45 = arith.constant 0 : index
    %c1_46 = arith.constant 1 : index
    %c0_47 = arith.constant 0 : index
    %c0_48 = arith.constant 0 : index
    %122 = vector.load %arg5[%c0_45, %c1_46, %c0_47, %c0_48] : memref<2x2x8x128xf32, #tpu.memory_space<vmem>>, vector<2x1x8x128xf32>
    %123 = vector.shape_cast %122 : vector<2x1x8x128xf32> to vector<2x8x128xf32>
    %124 = vector.shape_cast %121 : vector<2x8x128xf32> to vector<2x1x8x128xf32>
    tpu.vector_store %arg5[%c0_45, %c1_46, %c0_47, %c0_48], %124 {strides = array<i32>} : memref<2x2x8x128xf32, #tpu.memory_space<vmem>>, vector<2x1x8x128xf32>,
    return
  }
  func.func @transform_0(%arg0: i32) -> (i32, i32, i32) {
    %c0_i32 = arith.constant 0 : i32
    %c0_i32_0 = arith.constant 0 : i32
    %c0_i32_1 = arith.constant 0 : i32
    return %c0_i32, %arg0, %c0_i32_0 : i32, i32, i32
  }
  func.func @transform_1(%arg0: i32) -> (i32, i32) {
    %c0_i32 = arith.constant 0 : i32
    %c0_i32_0 = arith.constant 0 : i32
    return %arg0, %c0_i32 : i32, i32
  }
  func.func @transform_2(%arg0: i32) -> (i32, i32, i32) {
    %c0_i32 = arith.constant 0 : i32
    %c0_i32_0 = arith.constant 0 : i32
    %c0_i32_1 = arith.constant 0 : i32
    return %c0_i32, %arg0, %c0_i32_0 : i32, i32, i32
  }
  func.func @transform_3(%arg0: i32) -> (i32, i32, i32) {
    %c0_i32 = arith.constant 0 : i32
    %c0_i32_0 = arith.constant 0 : i32
    %c0_i32_1 = arith.constant 0 : i32
    return %c0_i32, %arg0, %c0_i32_0 : i32, i32, i32
  }
  func.func @transform_4(%arg0: i32) -> (i32, i32, i32, i32) {
    %c0_i32 = arith.constant 0 : i32
    %c0_i32_0 = arith.constant 0 : i32
    %c0_i32_1 = arith.constant 0 : i32
    %c0_i32_2 = arith.constant 0 : i32
    return %c0_i32, %c0_i32_0, %arg0, %c0_i32_1 : i32, i32, i32, i32
  }
}

</mosaic_0001>

<llo_original>
// kernel: tpu_custom_call.1
$region0: #{tpu_custom_call.1}
  #allocation0 [shape = 'u32[]', space=smem, size = 0x4, offset = 0x4, fixed_abs, tag = 'smem constant byte address 0x4 - core index']
  #allocation1 [shape = 'u32[144,128]{1,0:T(1,128)}', space=vmem, size = 0x12000, scoped, tag = 'internal scratch']
  #allocation2 [shape = 'f32[16,128]{1,0:T(8,128)}', space=vmem, size = 0x2000, scoped, tag = 'scratch operand']
  %s0 = inlined_call_operand.vmem [shape: f32[2,16,128], index: 0, kind: input, shape index: {}]
  %s1 = inlined_call_operand.vmem [shape: f32[16,1], index: 1, kind: input, shape index: {}]
  %s2 = inlined_call_operand.vmem [shape: f32[2,16,1], index: 2, kind: input, shape index: {}]
  %s3 = inlined_call_operand.vmem [shape: f32[2,16,1], index: 3, kind: input, shape index: {}]
  %s4 = inlined_call_operand.hbm [shape: f32[2,2,16,128], index: 4, kind: output, shape index: {}]
  %s5 = sld [smem:[#allocation0]]
  $region163: #{tpu_custom_call.1} parent=0
    _
  %s7 = ssub.s32 1, %s5
  %s8 = scalar_select 0, %s7, %s5
  $region1: #{tpu_custom_call.1} parent=0
    #allocation3 [shape = 'u8[16384]{0}', space=vmem, size = 0x4000, scoped, tag = 'input window, operand 0']
    #allocation4 [shape = 'u8[16384]{0}', space=vmem, size = 0x4000, scoped, tag = 'input window, operand 2']
    #allocation5 [shape = 'u8[16384]{0}', space=vmem, size = 0x4000, scoped, tag = 'input window, operand 3']
    #allocation6 [shape = 'u8[32768]{0}', space=vmem, size = 0x8000, scoped, tag = 'output window, operand 0']
    #allocation7 [shape = 's32[2]{0}', space=sflag, size = 0x8, scoped, tag = 'scoped memory for tpu_custom_call.1']
    %9 = vsyncpa [#allocation7], 0
    %s10 = scalar_lea.sflag [#allocation7], 1
    %11 = vsyncpa %s10, 0
    loop: start=0, step=1, limit=4
    $region2: #{tpu_custom_call.1} parent=1 // loop_pre_header
      _
    $region3: #{tpu_custom_call.1} parent=1 // loop_header
      %s13 = sphi 0, %s17
      %p14 = scmp.ge.s32.totalorder %s13, 4
      %s23 = sphi 0, %s25
      %s26 = sphi 0, %s23
      %s27 = sphi 0, %s26
      %s43 = sphi 0, %s27
      %s49 = sphi 0, %s51
      %s52 = sphi 0, %s49
      %s53 = sphi 0, %s52
      %s69 = sphi 0, %s53
      %s75 = sphi 0, %s77
      %s78 = sphi 0, %s75
      %s79 = sphi 0, %s78
      %s95 = sphi 0, %s79
      %s101 = sphi 0, %s103
      %s104 = sphi 0, %s101
      %s105 = sphi 0, %s104
      %s121 = sphi 0, %s105
      %s127 = sphi 0, %s129
      %s130 = sphi 0, %s127
      %s131 = sphi 0, %s130
      %s147 = sphi 0, %s131
    $region4: #{tpu_custom_call.1} parent=1 // loop_header_branch
      %16 = sbr.rel (%p14) target = $region8
    $region5: #{tpu_custom_call.1} parent=1 // loop_body
      %s18 = ssub.s32 %s13, 1
      %s19 = ssub.s32 %s13, 2
      %s20 = sadd.s32 %s13, 1
      %s21 = ssub.s32 %s13, %s20
      %p22 = scmp.eq.s32.totalorder %s21, 0
      %s24 = sadd.s32 %s23, 1
      %s25 = scalar_select %p22, %s23, %s24
      %p28 = pneg %p22
      %p29 = scmp.eq.s32.totalorder %s13, 1
      %p30 = por %p28, %p29
      %p31 = scmp.ne.s32.totalorder %s23, %s26
      %p32 = scmp.eq.s32.totalorder %s13, 0
      %p33 = por %p31, %p32
      %p34 = scmp.ne.s32.totalorder %s23, %s26
      %p35 = scmp.eq.s32.totalorder %s18, 1
      %p36 = por %p34, %p35
      %p37 = scmp.ne.s32.totalorder %s26, %s27
      %p38 = scmp.eq.s32.totalorder %s18, 0
      %p39 = por %p37, %p38
      %p40 = scmp.ne.s32.totalorder %s26, %s27
      %p41 = scmp.eq.s32.totalorder %s19, 1
      %p42 = por %p40, %p41
      %p44 = scmp.ne.s32.totalorder %s27, %s43
      %p45 = scmp.eq.s32.totalorder %s19, 0
      %p46 = por %p44, %p45
      %s47 = ssub.s32 %s13, %s20
      %p48 = scmp.eq.s32.totalorder %s47, 0
      %s50 = sadd.s32 %s49, 1
      %s51 = scalar_select %p48, %s49, %s50
      %p54 = pneg %p48
      %p55 = scmp.eq.s32.totalorder %s13, 1
      %p56 = por %p54, %p55
      %p57 = scmp.ne.s32.totalorder %s49, %s52
      %p58 = scmp.eq.s32.totalorder %s13, 0
      %p59 = por %p57, %p58
      %p60 = scmp.ne.s32.totalorder %s49, %s52
      %p61 = scmp.eq.s32.totalorder %s18, 1
      %p62 = por %p60, %p61
      %p63 = scmp.ne.s32.totalorder %s52, %s53
      %p64 = scmp.eq.s32.totalorder %s18, 0
      %p65 = por %p63, %p64
      %p66 = scmp.ne.s32.totalorder %s52, %s53
      %p67 = scmp.eq.s32.totalorder %s19, 1
      %p68 = por %p66, %p67
      %p70 = scmp.ne.s32.totalorder %s53, %s69
      %p71 = scmp.eq.s32.totalorder %s19, 0
      %p72 = por %p70, %p71
      %s73 = ssub.s32 %s13, %s20
      %p74 = scmp.eq.s32.totalorder %s73, 0
      %s76 = sadd.s32 %s75, 1
      %s77 = scalar_select %p74, %s75, %s76
      %p80 = pneg %p74
      %p81 = scmp.eq.s32.totalorder %s13, 1
      %p82 = por %p80, %p81
      %p83 = scmp.ne.s32.totalorder %s75, %s78
      %p84 = scmp.eq.s32.totalorder %s13, 0
      %p85 = por %p83, %p84
      %p86 = scmp.ne.s32.totalorder %s75, %s78
      %p87 = scmp.eq.s32.totalorder %s18, 1
      %p88 = por %p86, %p87
      %p89 = scmp.ne.s32.totalorder %s78, %s79
      %p90 = scmp.eq.s32.totalorder %s18, 0
      %p91 = por %p89, %p90
      %p92 = scmp.ne.s32.totalorder %s78, %s79
      %p93 = scmp.eq.s32.totalorder %s19, 1
      %p94 = por %p92, %p93
      %p96 = scmp.ne.s32.totalorder %s79, %s95
      %p97 = scmp.eq.s32.totalorder %s19, 0
      %p98 = por %p96, %p97
      %s99 = ssub.s32 %s13, %s20
      %p100 = scmp.eq.s32.totalorder %s99, 0
      %s102 = sadd.s32 %s101, 1
      %s103 = scalar_select %p100, %s101, %s102
      %p106 = pneg %p100
      %p107 = scmp.eq.s32.totalorder %s13, 1
      %p108 = por %p106, %p107
      %p109 = scmp.ne.s32.totalorder %s101, %s104
      %p110 = scmp.eq.s32.totalorder %s13, 0
      %p111 = por %p109, %p110
      %p112 = scmp.ne.s32.totalorder %s101, %s104
      %p113 = scmp.eq.s32.totalorder %s18, 1
      %p114 = por %p112, %p113
      %p115 = scmp.ne.s32.totalorder %s104, %s105
      %p116 = scmp.eq.s32.totalorder %s18, 0
      %p117 = por %p115, %p116
      %p118 = scmp.ne.s32.totalorder %s104, %s105
      %p119 = scmp.eq.s32.totalorder %s19, 1
      %p120 = por %p118, %p119
      %p122 = scmp.ne.s32.totalorder %s105, %s121
      %p123 = scmp.eq.s32.totalorder %s19, 0
      %p124 = por %p122, %p123
      %s125 = ssub.s32 %s13, %s20
      %p126 = scmp.eq.s32.totalorder %s125, 0
      %s128 = sadd.s32 %s127, 1
      %s129 = scalar_select %p126, %s127, %s128
      %p132 = pneg %p126
      %p133 = scmp.eq.s32.totalorder %s13, 1
      %p134 = por %p132, %p133
      %p135 = scmp.ne.s32.totalorder %s127, %s130
      %p136 = scmp.eq.s32.totalorder %s13, 0
      %p137 = por %p135, %p136
      %p138 = scmp.ne.s32.totalorder %s127, %s130
      %p139 = scmp.eq.s32.totalorder %s18, 1
      %p140 = por %p138, %p139
      %p141 = scmp.ne.s32.totalorder %s130, %s131
      %p142 = scmp.eq.s32.totalorder %s18, 0
      %p143 = por %p141, %p142
      %p144 = scmp.ne.s32.totalorder %s130, %s131
      %p145 = scmp.eq.s32.totalorder %s19, 1
      %p146 = por %p144, %p145
      %p148 = scmp.ne.s32.totalorder %s131, %s147
      %p149 = scmp.eq.s32.totalorder %s19, 0
      %p150 = por %p148, %p149
      %p151 = scmp.le.s32.totalorder 1, %s13
      %p152 = scmp.lt.s32.totalorder %s13, 3
      %p153 = pnand %p151, %p152
      %p154 = pneg %p153
      // Predicated region
      $region9: #{tpu_custom_call.1} parent=5 // pred_check
        _
      $region10: #{tpu_custom_call.1} parent=5 // pred_check_branch
        %156 = sbr.rel (%p153) target = $region12
      $region11: #{tpu_custom_call.1} parent=5 // pred_region
        %s157 = ssub.s32 %s13, 1
      $region12: #{tpu_custom_call.1} parent=5 // pred_fallthru
        _
      %p158 = scmp.lt.s32.totalorder %s13, 2
      // Predicated region
      $region13: #{tpu_custom_call.1} parent=5 // pred_check
        %p159 = pneg %p158
      $region14: #{tpu_custom_call.1} parent=5 // pred_check_branch
        %161 = sbr.rel (%p159) target = $region16
      $region15: #{tpu_custom_call.1} parent=5 // pred_region
        // Predicated region
        $region17: #{tpu_custom_call.1} parent=15 // pred_check
          %p162 = pneg %p33
        $region18: #{tpu_custom_call.1} parent=15 // pred_check_branch
          %164 = sbr.rel (%p162) target = $region20
        $region19: #{tpu_custom_call.1} parent=15 // pred_region
          %s165 = sand.u32 %s23, 1
          %s166 = sand.u32 %s23, 1
          %s167 = smul.addr %s166, 16
          %s168 = scalar_lea.vmem [#allocation3], %s167
          %s169 = smul.addr %s13, 8
          %s170 = scalar_lea.vmem %s0, %s169
          // Predicated region
          $region21: #{tpu_custom_call.1} parent=19 // pred_check
            _
          $region22: #{tpu_custom_call.1} parent=19 // pred_check_branch
            %172 = sbr.rel (0) target = $region24
          $region23: #{tpu_custom_call.1} parent=19 // pred_region
            // Predicated region
            $region25: #{tpu_custom_call.1} parent=23 // pred_check
              _
            $region26: #{tpu_custom_call.1} parent=23 // pred_check_branch
              %174 = sbr.rel (0) target = $region28
            $region27: #{tpu_custom_call.1} parent=23 // pred_region
              // Predicated region
              $region40: #{tpu_custom_call.1} parent=27 // pred_check
                _
              $region41: #{tpu_custom_call.1} parent=27 // pred_check_branch
                %191 = sbr.rel (0) target = $region43
              $region42: #{tpu_custom_call.1} parent=27 // pred_region
                loop: start=0, step=1, limit=1
                $region44: #{tpu_custom_call.1} parent=42 // loop_pre_header
                  _
                $region45: #{tpu_custom_call.1} parent=42 // loop_header
                  %s193 = sphi 0, %s197
                  %p194 = scmp.ge.s32.totalorder %s193, 1
                  %s198 = sphi %s170, %s170
                  %s199 = sphi %s168, %s168
                $region46: #{tpu_custom_call.1} parent=42 // loop_header_branch
                  %196 = sbr.rel (%p194) target = $region50
                $region47: #{tpu_custom_call.1} parent=42 // loop_body
                  %v200 = vld [vmem:[%s198] sm:$0xff]
                  %201 = vst [vmem:[%s199] sm:$0xff] %v200
                  %v202 = vld [vmem:[%s198 + $0x10] sm:$0xff]
                  %203 = vst [vmem:[%s199 + $0x8] sm:$0xff] %v202
                $region48: #{tpu_custom_call.1} parent=42 // loop_footer
                  %s197 = sadd.s32 1, %s193
                $region49: #{tpu_custom_call.1} parent=42 // loop_footer_branch
                  %192 = sbr.rel target = $region45
                $region50: #{tpu_custom_call.1} parent=42 // loop_exit
                  _
              $region43: #{tpu_custom_call.1} parent=27 // pred_fallthru
                _
              // Predicated region
              $region51: #{tpu_custom_call.1} parent=27 // pred_check
                _
              $region52: #{tpu_custom_call.1} parent=27 // pred_check_branch
                %205 = sbr.rel target = $region54
              $region53: #{tpu_custom_call.1} parent=27 // pred_region
                _
              $region54: #{tpu_custom_call.1} parent=27 // pred_fallthru
                _
            $region28: #{tpu_custom_call.1} parent=23 // pred_fallthru
              _
            // Predicated region
            $region29: #{tpu_custom_call.1} parent=23 // pred_check
              _
            $region30: #{tpu_custom_call.1} parent=23 // pred_check_branch
              %176 = sbr.rel target = $region32
            $region31: #{tpu_custom_call.1} parent=23 // pred_region
              loop: start=0, step=1, limit=1
              $region33: #{tpu_custom_call.1} parent=31 // loop_pre_header
                _
              $region34: #{tpu_custom_call.1} parent=31 // loop_header
                %s179 = sphi 0, %s183
                %p180 = scmp.ge.s32.totalorder %s179, 1
                %s184 = sphi %s170, %s170
                %s185 = sphi %s168, %s168
              $region35: #{tpu_custom_call.1} parent=31 // loop_header_branch
                %182 = sbr.rel (%p180) target = $region39
              $region36: #{tpu_custom_call.1} parent=31 // loop_body
                %v186 = vld [vmem:[%s184] sm:$0xff]
                %187 = vst [vmem:[%s185] sm:$0xff] %v186
                %v188 = vld [vmem:[%s184 + $0x10] sm:$0xff]
                %189 = vst [vmem:[%s185 + $0x8] sm:$0xff] %v188
              $region37: #{tpu_custom_call.1} parent=31 // loop_footer
                %s183 = sadd.s32 1, %s179
              $region38: #{tpu_custom_call.1} parent=31 // loop_footer_branch
                %178 = sbr.rel target = $region34
              $region39: #{tpu_custom_call.1} parent=31 // loop_exit
                _
            $region32: #{tpu_custom_call.1} parent=23 // pred_fallthru
              _
          $region24: #{tpu_custom_call.1} parent=19 // pred_fallthru
            _
          %206 = vnop
        $region20: #{tpu_custom_call.1} parent=15 // pred_fallthru
          _
        // Predicated region
        $region55: #{tpu_custom_call.1} parent=15 // pred_check
          %p207 = pneg %p59
        $region56: #{tpu_custom_call.1} parent=15 // pred_check_branch
          %209 = sbr.rel (%p207) target = $region58
        $region57: #{tpu_custom_call.1} parent=15 // pred_region
          %p210 = scmp.lt.s32.totalorder %s13, 1
          %s211 = scalar_select %p210, %s13, 1
          %s212 = smul.addr %s211, 8
          %s213 = scalar_lea.vmem %s1, %s212
        $region58: #{tpu_custom_call.1} parent=15 // pred_fallthru
          _
        // Predicated region
        $region59: #{tpu_custom_call.1} parent=15 // pred_check
          %p214 = pneg %p85
        $region60: #{tpu_custom_call.1} parent=15 // pred_check_branch
          %216 = sbr.rel (%p214) target = $region62
        $region61: #{tpu_custom_call.1} parent=15 // pred_region
          %s217 = sand.u32 %s75, 1
          %s218 = sand.u32 %s75, 1
          %s219 = smul.addr %s218, 16
          %s220 = scalar_lea.vmem [#allocation4], %s219
          %s221 = smul.addr %s13, 8
          %s222 = scalar_lea.vmem %s2, %s221
          // Predicated region
          $region63: #{tpu_custom_call.1} parent=61 // pred_check
            _
          $region64: #{tpu_custom_call.1} parent=61 // pred_check_branch
            %224 = sbr.rel (0) target = $region66
          $region65: #{tpu_custom_call.1} parent=61 // pred_region
            // Predicated region
            $region67: #{tpu_custom_call.1} parent=65 // pred_check
              _
            $region68: #{tpu_custom_call.1} parent=65 // pred_check_branch
              %226 = sbr.rel (0) target = $region70
            $region69: #{tpu_custom_call.1} parent=65 // pred_region
              // Predicated region
              $region82: #{tpu_custom_call.1} parent=69 // pred_check
                _
              $region83: #{tpu_custom_call.1} parent=69 // pred_check_branch
                %243 = sbr.rel (0) target = $region85
              $region84: #{tpu_custom_call.1} parent=69 // pred_region
                loop: start=0, step=1, limit=1
                $region86: #{tpu_custom_call.1} parent=84 // loop_pre_header
                  _
                $region87: #{tpu_custom_call.1} parent=84 // loop_header
                  %s245 = sphi 0, %s249
                  %p246 = scmp.ge.s32.totalorder %s245, 1
                  %s250 = sphi %s222, %s222
                  %s251 = sphi %s220, %s220
                $region88: #{tpu_custom_call.1} parent=84 // loop_header_branch
                  %248 = sbr.rel (%p246) target = $region92
                $region89: #{tpu_custom_call.1} parent=84 // loop_body
                  %v252 = vld [vmem:[%s250] sm:$0xff]
                  %253 = vst [vmem:[%s251] sm:$0xff] %v252
                  %v254 = vld [vmem:[%s250 + $0x10] sm:$0xff]
                  %255 = vst [vmem:[%s251 + $0x8] sm:$0xff] %v254
                $region90: #{tpu_custom_call.1} parent=84 // loop_footer
                  %s249 = sadd.s32 1, %s245
                $region91: #{tpu_custom_call.1} parent=84 // loop_footer_branch
                  %244 = sbr.rel target = $region87
                $region92: #{tpu_custom_call.1} parent=84 // loop_exit
                  _
              $region85: #{tpu_custom_call.1} parent=69 // pred_fallthru
                _
              // Predicated region
              $region93: #{tpu_custom_call.1} parent=69 // pred_check
                _
              $region94: #{tpu_custom_call.1} parent=69 // pred_check_branch
                %257 = sbr.rel target = $region96
              $region95: #{tpu_custom_call.1} parent=69 // pred_region
                _
              $region96: #{tpu_custom_call.1} parent=69 // pred_fallthru
                _
            $region70: #{tpu_custom_call.1} parent=65 // pred_fallthru
              _
            // Predicated region
            $region71: #{tpu_custom_call.1} parent=65 // pred_check
              _
            $region72: #{tpu_custom_call.1} parent=65 // pred_check_branch
              %228 = sbr.rel target = $region74
            $region73: #{tpu_custom_call.1} parent=65 // pred_region
              loop: start=0, step=1, limit=1
              $region75: #{tpu_custom_call.1} parent=73 // loop_pre_header
                _
              $region76: #{tpu_custom_call.1} parent=73 // loop_header
                %s231 = sphi 0, %s235
                %p232 = scmp.ge.s32.totalorder %s231, 1
                %s236 = sphi %s222, %s222
                %s237 = sphi %s220, %s220
              $region77: #{tpu_custom_call.1} parent=73 // loop_header_branch
                %234 = sbr.rel (%p232) target = $region81
              $region78: #{tpu_custom_call.1} parent=73 // loop_body
                %v238 = vld [vmem:[%s236] sm:$0xff]
                %239 = vst [vmem:[%s237] sm:$0xff] %v238
                %v240 = vld [vmem:[%s236 + $0x10] sm:$0xff]
                %241 = vst [vmem:[%s237 + $0x8] sm:$0xff] %v240
              $region79: #{tpu_custom_call.1} parent=73 // loop_footer
                %s235 = sadd.s32 1, %s231
              $region80: #{tpu_custom_call.1} parent=73 // loop_footer_branch
                %230 = sbr.rel target = $region76
              $region81: #{tpu_custom_call.1} parent=73 // loop_exit
                _
            $region74: #{tpu_custom_call.1} parent=65 // pred_fallthru
              _
          $region66: #{tpu_custom_call.1} parent=61 // pred_fallthru
            _
          %258 = vnop
        $region62: #{tpu_custom_call.1} parent=15 // pred_fallthru
          _
        // Predicated region
        $region97: #{tpu_custom_call.1} parent=15 // pred_check
          %p259 = pneg %p111
        $region98: #{tpu_custom_call.1} parent=15 // pred_check_branch
          %261 = sbr.rel (%p259) target = $region100
        $region99: #{tpu_custom_call.1} parent=15 // pred_region
          %s262 = sand.u32 %s101, 1
          %s263 = sand.u32 %s101, 1
          %s264 = smul.addr %s263, 16
          %s265 = scalar_lea.vmem [#allocation5], %s264
          %s266 = smul.addr %s13, 8
          %s267 = scalar_lea.vmem %s3, %s266
          // Predicated region
          $region101: #{tpu_custom_call.1} parent=99 // pred_check
            _
          $region102: #{tpu_custom_call.1} parent=99 // pred_check_branch
            %269 = sbr.rel (0) target = $region104
          $region103: #{tpu_custom_call.1} parent=99 // pred_region
            // Predicated region
            $region105: #{tpu_custom_call.1} parent=103 // pred_check
              _
            $region106: #{tpu_custom_call.1} parent=103 // pred_check_branch
              %271 = sbr.rel (0) target = $region108
            $region107: #{tpu_custom_call.1} parent=103 // pred_region
              // Predicated region
              $region120: #{tpu_custom_call.1} parent=107 // pred_check
                _
              $region121: #{tpu_custom_call.1} parent=107 // pred_check_branch
                %288 = sbr.rel (0) target = $region123
              $region122: #{tpu_custom_call.1} parent=107 // pred_region
                loop: start=0, step=1, limit=1
                $region124: #{tpu_custom_call.1} parent=122 // loop_pre_header
                  _
                $region125: #{tpu_custom_call.1} parent=122 // loop_header
                  %s290 = sphi 0, %s294
                  %p291 = scmp.ge.s32.totalorder %s290, 1
                  %s295 = sphi %s267, %s267
                  %s296 = sphi %s265, %s265
                $region126: #{tpu_custom_call.1} parent=122 // loop_header_branch
                  %293 = sbr.rel (%p291) target = $region130
                $region127: #{tpu_custom_call.1} parent=122 // loop_body
                  %v297 = vld [vmem:[%s295] sm:$0xff]
                  %298 = vst [vmem:[%s296] sm:$0xff] %v297
                  %v299 = vld [vmem:[%s295 + $0x10] sm:$0xff]
                  %300 = vst [vmem:[%s296 + $0x8] sm:$0xff] %v299
                $region128: #{tpu_custom_call.1} parent=122 // loop_footer
                  %s294 = sadd.s32 1, %s290
                $region129: #{tpu_custom_call.1} parent=122 // loop_footer_branch
                  %289 = sbr.rel target = $region125
                $region130: #{tpu_custom_call.1} parent=122 // loop_exit
                  _
              $region123: #{tpu_custom_call.1} parent=107 // pred_fallthru
                _
              // Predicated region
              $region131: #{tpu_custom_call.1} parent=107 // pred_check
                _
              $region132: #{tpu_custom_call.1} parent=107 // pred_check_branch
                %302 = sbr.rel target = $region134
              $region133: #{tpu_custom_call.1} parent=107 // pred_region
                _
              $region134: #{tpu_custom_call.1} parent=107 // pred_fallthru
                _
            $region108: #{tpu_custom_call.1} parent=103 // pred_fallthru
              _
            // Predicated region
            $region109: #{tpu_custom_call.1} parent=103 // pred_check
              _
            $region110: #{tpu_custom_call.1} parent=103 // pred_check_branch
              %273 = sbr.rel target = $region112
            $region111: #{tpu_custom_call.1} parent=103 // pred_region
              loop: start=0, step=1, limit=1
              $region113: #{tpu_custom_call.1} parent=111 // loop_pre_header
                _
              $region114: #{tpu_custom_call.1} parent=111 // loop_header
                %s276 = sphi 0, %s280
                %p277 = scmp.ge.s32.totalorder %s276, 1
                %s281 = sphi %s267, %s267
                %s282 = sphi %s265, %s265
              $region115: #{tpu_custom_call.1} parent=111 // loop_header_branch
                %279 = sbr.rel (%p277) target = $region119
              $region116: #{tpu_custom_call.1} parent=111 // loop_body
                %v283 = vld [vmem:[%s281] sm:$0xff]
                %284 = vst [vmem:[%s282] sm:$0xff] %v283
                %v285 = vld [vmem:[%s281 + $0x10] sm:$0xff]
                %286 = vst [vmem:[%s282 + $0x8] sm:$0xff] %v285
              $region117: #{tpu_custom_call.1} parent=111 // loop_footer
                %s280 = sadd.s32 1, %s276
              $region118: #{tpu_custom_call.1} parent=111 // loop_footer_branch
                %275 = sbr.rel target = $region114
              $region119: #{tpu_custom_call.1} parent=111 // loop_exit
                _
            $region112: #{tpu_custom_call.1} parent=103 // pred_fallthru
              _
          $region104: #{tpu_custom_call.1} parent=99 // pred_fallthru
            _
          %303 = vnop
        $region100: #{tpu_custom_call.1} parent=15 // pred_fallthru
          _
      $region16: #{tpu_custom_call.1} parent=5 // pred_fallthru
        _
      %p304 = scmp.le.s32.totalorder 1, %s13
      %p305 = scmp.lt.s32.totalorder %s13, 3
      %p306 = pnand %p304, %p305
      %p307 = pneg %p306
      // Predicated region
      $region135: #{tpu_custom_call.1} parent=5 // pred_check
        _
      $region136: #{tpu_custom_call.1} parent=5 // pred_check_branch
        %309 = sbr.rel (%p306) target = $region138
      $region137: #{tpu_custom_call.1} parent=5 // pred_region
        %s310 = ssub.s32 %s13, 1
        %s311 = sand.u32 %s26, 1
        %s312 = sand.u32 %s26, 1
        %s313 = smul.addr %s312, 16
        %s314 = scalar_lea.vmem [#allocation3], %s313
        // Predicated region
        $region139: #{tpu_custom_call.1} parent=137 // pred_check
          %p315 = pneg %p39
        $region140: #{tpu_custom_call.1} parent=137 // pred_check_branch
          %317 = sbr.rel (%p315) target = $region142
        $region141: #{tpu_custom_call.1} parent=137 // pred_region
          _
        $region142: #{tpu_custom_call.1} parent=137 // pred_fallthru
          _
        %s318 = sand.u32 %s78, 1
        %s319 = sand.u32 %s78, 1
        %s320 = smul.addr %s319, 16
        %s321 = scalar_lea.vmem [#allocation4], %s320
        // Predicated region
        $region143: #{tpu_custom_call.1} parent=137 // pred_check
          %p322 = pneg %p91
        $region144: #{tpu_custom_call.1} parent=137 // pred_check_branch
          %324 = sbr.rel (%p322) target = $region146
        $region145: #{tpu_custom_call.1} parent=137 // pred_region
          _
        $region146: #{tpu_custom_call.1} parent=137 // pred_fallthru
          _
        %s325 = sand.u32 %s104, 1
        %s326 = sand.u32 %s104, 1
        %s327 = smul.addr %s326, 16
        %s328 = scalar_lea.vmem [#allocation5], %s327
        // Predicated region
        $region147: #{tpu_custom_call.1} parent=137 // pred_check
          %p329 = pneg %p117
        $region148: #{tpu_custom_call.1} parent=137 // pred_check_branch
          %331 = sbr.rel (%p329) target = $region150
        $region149: #{tpu_custom_call.1} parent=137 // pred_region
          _
        $region150: #{tpu_custom_call.1} parent=137 // pred_fallthru
          _
        %s332 = sand.u32 %s26, 1
        %s333 = sand.u32 %s26, 1
        %s334 = smul.addr %s333, 16
        %s335 = scalar_lea.vmem [#allocation3], %s334
        %p336 = pneg %p39
        %p337 = pneg %p36
        %p338 = scmp.lt.s32.totalorder %s18, 1
        %s339 = scalar_select %p338, %s18, 1
        %s340 = smul.addr %s339, 8
        %s341 = scalar_lea.vmem %s1, %s340
        %p342 = pneg %p65
        %p343 = pneg %p62
        %s344 = sand.u32 %s78, 1
        %s345 = sand.u32 %s78, 1
        %s346 = smul.addr %s345, 16
        %s347 = scalar_lea.vmem [#allocation4], %s346
        %p348 = pneg %p91
        %p349 = pneg %p88
        %s350 = sand.u32 %s104, 1
        %s351 = sand.u32 %s104, 1
        %s352 = smul.addr %s351, 16
        %s353 = scalar_lea.vmem [#allocation5], %s352
        %p354 = pneg %p117
        %p355 = pneg %p114
        %p356 = pneg %p143
        %p357 = pneg %p140
        %s358 = sand.u32 %s130, 1
        %s359 = scalar_lea.sflag [#allocation7], %s358
        %s360 = sand.u32 %s130, 1
        %s361 = smul.addr %s360, 32
        %s362 = scalar_lea.vmem [#allocation6], %s361
        %p363 = scmp.lt.s32.totalorder %s18, 1
        %s364 = scalar_select %p363, %s18, 1
        %s365 = smul.addr %s364, 8
        %s366 = scalar_lea.vmem %s1, %s365
        %v367 = vld [vmem:[%s314] sm:$0xff]
        %v368 = vld [vmem:[%s314 + $0x8] sm:$0xff]
        %v369 = vld [vmem:[%s366] sm:$0xff]
        %v370 = vmul.f32 %v369, 2.3025851
        %v371 = vmul.f32 %v370, 1.442695
        %v372 = vpow.pop %v371
        %374 = vset.pattern.permute.xlu0 0
        %375 = vperm.xlu0 %374, %v372
        %v376 = vpop.permute.xlu0 %375
        %v378 = vmul.f32 %v376, %v367
        %v379 = vmul.f32 %v376, %v368
        %v380 = vadd.f32 %v378, 1.0
        %v381 = vlog2.pop %v380
        %v382 = vmul.f32 %v381, 0.6931472
        %v383 = vmul.f32 -0.5, %v378
        %v384 = vadd.f32 %v383, 1.0
        %v385 = vmul.f32 %v384, %v378
        %v386 = vand.u32 2147483647, %v378
        %vm387 = vcmp.lt.f32.partialorder %v386, 0.0004427343
        %v388 = vsel %vm387, %v385, %v382
        %v389 = vadd.f32 %v379, 1.0
        %v390 = vlog2.pop %v389
        %v391 = vmul.f32 %v390, 0.6931472
        %v392 = vmul.f32 -0.5, %v379
        %v393 = vadd.f32 %v392, 1.0
        %v394 = vmul.f32 %v393, %v379
        %v395 = vand.u32 2147483647, %v379
        %vm396 = vcmp.lt.f32.partialorder %v395, 0.0004427343
        %v397 = vsel %vm396, %v394, %v391
        %v398 = vlaneseq
        %v399 = vand.u32 %v398, 127
        %vm400 = vcmp.lt.s32.totalorder %v399, 128
        %v401 = vsel %vm400, 1, 0
        %v402 = vcvt.s32.f32 %v401
        %vm403 = vcmp.eq.s32.totalorder %v401, 1
        %v404 = vsel %vm403, %v388, inf
        %v405 = vsel %vm403, %v397, inf
        %406 = vst [vmem:[#allocation2] sm:$0xff] %v404
        %407 = vst [vmem:[#allocation2 + $0x8] sm:$0xff] %v405
        %v410 = vcombine.high %v404, %v404
        %v412 = vunpack.c.l.s4 1966171168
        %v413 = vunpack.c.0.s8 %v412
        %v414 = vlaneseq
        %v415 = vshrl.u32 %v414, 7
        %v416 = vsub.s32 %v413, %v415
        %v417 = vrot.slane %v404, %v416
        %v419 = vunpack.c.l.s4 1966171168
        %v420 = vunpack.c.0.s8 %v419
        %v421 = vlaneseq
        %v422 = vshrl.u32 %v421, 7
        %v423 = vsub.s32 %v420, %v422
        %v424 = vrot.slane %v410, %v423
        %v425 = vcombine.high %v417, %v417
        %v426 = vcombine.high %v424, %v424
        %v428 = vunpack.c.l.s4 1966171168
        %v429 = vunpack.c.0.s8 %v428
        %v430 = vlaneseq
        %v431 = vshrl.u32 %v430, 7
        %v432 = vsub.s32 %v429, %v431
        %v433 = vrot.slane %v417, %v432
        %v435 = vunpack.c.l.s4 1966171168
        %v436 = vunpack.c.0.s8 %v435
        %v437 = vlaneseq
        %v438 = vshrl.u32 %v437, 7
        %v439 = vsub.s32 %v436, %v438
        %v440 = vrot.slane %v424, %v439
        %v442 = vunpack.c.l.s4 1966171168
        %v443 = vunpack.c.0.s8 %v442
        %v444 = vlaneseq
        %v445 = vshrl.u32 %v444, 7
        %v446 = vsub.s32 %v443, %v445
        %v447 = vrot.slane %v425, %v446
        %v449 = vunpack.c.l.s4 1966171168
        %v450 = vunpack.c.0.s8 %v449
        %v451 = vlaneseq
        %v452 = vshrl.u32 %v451, 7
        %v453 = vsub.s32 %v450, %v452
        %v454 = vrot.slane %v426, %v453
        %v455 = vcombine.high %v433, %v433
        %v456 = vcombine.high %v440, %v440
        %v457 = vcombine.high %v447, %v447
        %v458 = vcombine.high %v454, %v454
        %v459 = vcombine.high %v405, %v405
        %v461 = vunpack.c.l.s4 1966171168
        %v462 = vunpack.c.0.s8 %v461
        %v463 = vlaneseq
        %v464 = vshrl.u32 %v463, 7
        %v465 = vsub.s32 %v462, %v464
        %v466 = vrot.slane %v405, %v465
        %v468 = vunpack.c.l.s4 1966171168
        %v469 = vunpack.c.0.s8 %v468
        %v470 = vlaneseq
        %v471 = vshrl.u32 %v470, 7
        %v472 = vsub.s32 %v469, %v471
        %v473 = vrot.slane %v459, %v472
        %v474 = vcombine.high %v466, %v466
        %v475 = vcombine.high %v473, %v473
        %v477 = vunpack.c.l.s4 1966171168
        %v478 = vunpack.c.0.s8 %v477
        %v479 = vlaneseq
        %v480 = vshrl.u32 %v479, 7
        %v481 = vsub.s32 %v478, %v480
        %v482 = vrot.slane %v466, %v481
        %v484 = vunpack.c.l.s4 1966171168
        %v485 = vunpack.c.0.s8 %v484
        %v486 = vlaneseq
        %v487 = vshrl.u32 %v486, 7
        %v488 = vsub.s32 %v485, %v487
        %v489 = vrot.slane %v473, %v488
        %v491 = vunpack.c.l.s4 1966171168
        %v492 = vunpack.c.0.s8 %v491
        %v493 = vlaneseq
        %v494 = vshrl.u32 %v493, 7
        %v495 = vsub.s32 %v492, %v494
        %v496 = vrot.slane %v474, %v495
        %v498 = vunpack.c.l.s4 1966171168
        %v499 = vunpack.c.0.s8 %v498
        %v500 = vlaneseq
        %v501 = vshrl.u32 %v500, 7
        %v502 = vsub.s32 %v499, %v501
        %v503 = vrot.slane %v475, %v502
        %v504 = vcombine.high %v482, %v482
        %v505 = vcombine.high %v489, %v489
        %v506 = vcombine.high %v496, %v496
        %v507 = vcombine.high %v503, %v503
        %v508 = vld [vmem:[#allocation2] sm:$0xff]
        %v509 = vld [vmem:[#allocation2 + $0x8] sm:$0xff]
        %v510 = vlaneseq
        %v511 = vshrl.u32 %v510, 7
        %v512 = vsub.s32 0, %v511
        %v513 = vrot.slane %v508, %v512
        %515 = vbcast.lane.b32.xlu0 %v513, 256
        %v516 = vpop.permute.xlu0 %515
        %s518 = sor.u32 256, 8
        %519 = vbcast.lane.b32.xlu0 %v513, %s518
        %v520 = vpop.permute.xlu0 %519
        %s522 = sor.u32 256, 16
        %523 = vbcast.lane.b32.xlu0 %v513, %s522
        %v524 = vpop.permute.xlu0 %523
        %s526 = sor.u32 256, 24
        %527 = vbcast.lane.b32.xlu0 %v513, %s526
        %v528 = vpop.permute.xlu0 %527
        %s530 = sor.u32 256, 32
        %531 = vbcast.lane.b32.xlu0 %v513, %s530
        %v532 = vpop.permute.xlu0 %531
        %s534 = sor.u32 256, 40
        %535 = vbcast.lane.b32.xlu0 %v513, %s534
        %v536 = vpop.permute.xlu0 %535
        %s538 = sor.u32 256, 48
        %539 = vbcast.lane.b32.xlu0 %v513, %s538
        %v540 = vpop.permute.xlu0 %539
        %s542 = sor.u32 256, 56
        %543 = vbcast.lane.b32.xlu0 %v513, %s542
        %v544 = vpop.permute.xlu0 %543
        %s546 = sor.u32 256, 64
        %547 = vbcast.lane.b32.xlu0 %v513, %s546
        %v548 = vpop.permute.xlu0 %547
        %s550 = sor.u32 256, 72
        %551 = vbcast.lane.b32.xlu0 %v513, %s550
        %v552 = vpop.permute.xlu0 %551
        %s554 = sor.u32 256, 80
        %555 = vbcast.lane.b32.xlu0 %v513, %s554
        %v556 = vpop.permute.xlu0 %555
        %s558 = sor.u32 256, 88
        %559 = vbcast.lane.b32.xlu0 %v513, %s558
        %v560 = vpop.permute.xlu0 %559
        %s562 = sor.u32 256, 96
        %563 = vbcast.lane.b32.xlu0 %v513, %s562
        %v564 = vpop.permute.xlu0 %563
        %s566 = sor.u32 256, 104
        %567 = vbcast.lane.b32.xlu0 %v513, %s566
        %v568 = vpop.permute.xlu0 %567
        %s570 = sor.u32 256, 112
        %571 = vbcast.lane.b32.xlu0 %v513, %s570
        %v572 = vpop.permute.xlu0 %571
        %s574 = sor.u32 256, 120
        %575 = vbcast.lane.b32.xlu0 %v513, %s574
        %v576 = vpop.permute.xlu0 %575
        %v577 = vlaneseq
        %v578 = vshrl.u32 %v577, 7
        %v579 = vsub.s32 1, %v578
        %v580 = vrot.slane %v508, %v579
        %582 = vbcast.lane.b32.xlu0 %v580, 256
        %v583 = vpop.permute.xlu0 %582
        %s585 = sor.u32 256, 8
        %586 = vbcast.lane.b32.xlu0 %v580, %s585
        %v587 = vpop.permute.xlu0 %586
        %s589 = sor.u32 256, 16
        %590 = vbcast.lane.b32.xlu0 %v580, %s589
        %v591 = vpop.permute.xlu0 %590
        %s593 = sor.u32 256, 24
        %594 = vbcast.lane.b32.xlu0 %v580, %s593
        %v595 = vpop.permute.xlu0 %594
        %s597 = sor.u32 256, 32
        %598 = vbcast.lane.b32.xlu0 %v580, %s597
        %v599 = vpop.permute.xlu0 %598
        %s601 = sor.u32 256, 40
        %602 = vbcast.lane.b32.xlu0 %v580, %s601
        %v603 = vpop.permute.xlu0 %602
        %s605 = sor.u32 256, 48
        %606 = vbcast.lane.b32.xlu0 %v580, %s605
        %v607 = vpop.permute.xlu0 %606
        %s609 = sor.u32 256, 56
        %610 = vbcast.lane.b32.xlu0 %v580, %s609
        %v611 = vpop.permute.xlu0 %610
        %s613 = sor.u32 256, 64
        %614 = vbcast.lane.b32.xlu0 %v580, %s613
        %v615 = vpop.permute.xlu0 %614
        %s617 = sor.u32 256, 72
        %618 = vbcast.lane.b32.xlu0 %v580, %s617
        %v619 = vpop.permute.xlu0 %618
        %s621 = sor.u32 256, 80
        %622 = vbcast.lane.b32.xlu0 %v580, %s621
        %v623 = vpop.permute.xlu0 %622
        %s625 = sor.u32 256, 88
        %626 = vbcast.lane.b32.xlu0 %v580, %s625
        %v627 = vpop.permute.xlu0 %626
        %s629 = sor.u32 256, 96
        %630 = vbcast.lane.b32.xlu0 %v580, %s629
        %v631 = vpop.permute.xlu0 %630
        %s633 = sor.u32 256, 104
        %634 = vbcast.lane.b32.xlu0 %v580, %s633
        %v635 = vpop.permute.xlu0 %634
        %s637 = sor.u32 256, 112
        %638 = vbcast.lane.b32.xlu0 %v580, %s637
        %v639 = vpop.permute.xlu0 %638
        %s641 = sor.u32 256, 120
        %642 = vbcast.lane.b32.xlu0 %v580, %s641
        %v643 = vpop.permute.xlu0 %642
        %v644 = vlaneseq
        %v645 = vshrl.u32 %v644, 7
        %v646 = vsub.s32 2, %v645
        %v647 = vrot.slane %v508, %v646
        %649 = vbcast.lane.b32.xlu0 %v647, 256
        %v650 = vpop.permute.xlu0 %649
        %s652 = sor.u32 256, 8
        %653 = vbcast.lane.b32.xlu0 %v647, %s652
        %v654 = vpop.permute.xlu0 %653
        %s656 = sor.u32 256, 16
        %657 = vbcast.lane.b32.xlu0 %v647, %s656
        %v658 = vpop.permute.xlu0 %657
        %s660 = sor.u32 256, 24
        %661 = vbcast.lane.b32.xlu0 %v647, %s660
        %v662 = vpop.permute.xlu0 %661
        %s664 = sor.u32 256, 32
        %665 = vbcast.lane.b32.xlu0 %v647, %s664
        %v666 = vpop.permute.xlu0 %665
        %s668 = sor.u32 256, 40
        %669 = vbcast.lane.b32.xlu0 %v647, %s668
        %v670 = vpop.permute.xlu0 %669
        %s672 = sor.u32 256, 48
        %673 = vbcast.lane.b32.xlu0 %v647, %s672
        %v674 = vpop.permute.xlu0 %673
        %s676 = sor.u32 256, 56
        %677 = vbcast.lane.b32.xlu0 %v647, %s676
        %v678 = vpop.permute.xlu0 %677
        %s680 = sor.u32 256, 64
        %681 = vbcast.lane.b32.xlu0 %v647, %s680
        %v682 = vpop.permute.xlu0 %681
        %s684 = sor.u32 256, 72
        %685 = vbcast.lane.b32.xlu0 %v647, %s684
        %v686 = vpop.permute.xlu0 %685
        %s688 = sor.u32 256, 80
        %689 = vbcast.lane.b32.xlu0 %v647, %s688
        %v690 = vpop.permute.xlu0 %689
        %s692 = sor.u32 256, 88
        %693 = vbcast.lane.b32.xlu0 %v647, %s692
        %v694 = vpop.permute.xlu0 %693
        %s696 = sor.u32 256, 96
        %697 = vbcast.lane.b32.xlu0 %v647, %s696
        %v698 = vpop.permute.xlu0 %697
        %s700 = sor.u32 256, 104
        %701 = vbcast.lane.b32.xlu0 %v647, %s700
        %v702 = vpop.permute.xlu0 %701
        %s704 = sor.u32 256, 112
        %705 = vbcast.lane.b32.xlu0 %v647, %s704
        %v706 = vpop.permute.xlu0 %705
        %s708 = sor.u32 256, 120
        %709 = vbcast.lane.b32.xlu0 %v647, %s708
        %v710 = vpop.permute.xlu0 %709
        %v711 = vlaneseq
        %v712 = vshrl.u32 %v711, 7
        %v713 = vsub.s32 3, %v712
        %v714 = vrot.slane %v508, %v713
        %716 = vbcast.lane.b32.xlu0 %v714, 256
        %v717 = vpop.permute.xlu0 %716
        %s719 = sor.u32 256, 8
        %720 = vbcast.lane.b32.xlu0 %v714, %s719
        %v721 = vpop.permute.xlu0 %720
        %s723 = sor.u32 256, 16
        %724 = vbcast.lane.b32.xlu0 %v714, %s723
        %v725 = vpop.permute.xlu0 %724
        %s727 = sor.u32 256, 24
        %728 = vbcast.lane.b32.xlu0 %v714, %s727
        %v729 = vpop.permute.xlu0 %728
        %s731 = sor.u32 256, 32
        %732 = vbcast.lane.b32.xlu0 %v714, %s731
        %v733 = vpop.permute.xlu0 %732
        %s735 = sor.u32 256, 40
        %736 = vbcast.lane.b32.xlu0 %v714, %s735
        %v737 = vpop.permute.xlu0 %736
        %s739 = sor.u32 256, 48
        %740 = vbcast.lane.b32.xlu0 %v714, %s739
        %v741 = vpop.permute.xlu0 %740
        %s743 = sor.u32 256, 56
        %744 = vbcast.lane.b32.xlu0 %v714, %s743
        %v745 = vpop.permute.xlu0 %744
        %s747 = sor.u32 256, 64
        %748 = vbcast.lane.b32.xlu0 %v714, %s747
        %v749 = vpop.permute.xlu0 %748
        %s751 = sor.u32 256, 72
        %752 = vbcast.lane.b32.xlu0 %v714, %s751
        %v753 = vpop.permute.xlu0 %752
        %s755 = sor.u32 256, 80
        %756 = vbcast.lane.b32.xlu0 %v714, %s755
        %v757 = vpop.permute.xlu0 %756
        %s759 = sor.u32 256, 88
        %760 = vbcast.lane.b32.xlu0 %v714, %s759
        %v761 = vpop.permute.xlu0 %760
        %s763 = sor.u32 256, 96
        %764 = vbcast.lane.b32.xlu0 %v714, %s763
        %v765 = vpop.permute.xlu0 %764
        %s767 = sor.u32 256, 104
        %768 = vbcast.lane.b32.xlu0 %v714, %s767
        %v769 = vpop.permute.xlu0 %768
        %s771 = sor.u32 256, 112
        %772 = vbcast.lane.b32.xlu0 %v714, %s771
        %v773 = vpop.permute.xlu0 %772
        %s775 = sor.u32 256, 120
        %776 = vbcast.lane.b32.xlu0 %v714, %s775
        %v777 = vpop.permute.xlu0 %776
        %v778 = vlaneseq
        %v779 = vshrl.u32 %v778, 7
        %v780 = vsub.s32 4, %v779
        %v781 = vrot.slane %v508, %v780
        %783 = vbcast.lane.b32.xlu0 %v781, 256
        %v784 = vpop.permute.xlu0 %783
        %s786 = sor.u32 256, 8
        %787 = vbcast.lane.b32.xlu0 %v781, %s786
        %v788 = vpop.permute.xlu0 %787
        %s790 = sor.u32 256, 16
        %791 = vbcast.lane.b32.xlu0 %v781, %s790
        %v792 = vpop.permute.xlu0 %791
        %s794 = sor.u32 256, 24
        %795 = vbcast.lane.b32.xlu0 %v781, %s794
        %v796 = vpop.permute.xlu0 %795
        %s798 = sor.u32 256, 32
        %799 = vbcast.lane.b32.xlu0 %v781, %s798
        %v800 = vpop.permute.xlu0 %799
        %s802 = sor.u32 256, 40
        %803 = vbcast.lane.b32.xlu0 %v781, %s802
        %v804 = vpop.permute.xlu0 %803
        %s806 = sor.u32 256, 48
        %807 = vbcast.lane.b32.xlu0 %v781, %s806
        %v808 = vpop.permute.xlu0 %807
        %s810 = sor.u32 256, 56
        %811 = vbcast.lane.b32.xlu0 %v781, %s810
        %v812 = vpop.permute.xlu0 %811
        %s814 = sor.u32 256, 64
        %815 = vbcast.lane.b32.xlu0 %v781, %s814
        %v816 = vpop.permute.xlu0 %815
        %s818 = sor.u32 256, 72
        %819 = vbcast.lane.b32.xlu0 %v781, %s818
        %v820 = vpop.permute.xlu0 %819
        %s822 = sor.u32 256, 80
        %823 = vbcast.lane.b32.xlu0 %v781, %s822
        %v824 = vpop.permute.xlu0 %823
        %s826 = sor.u32 256, 88
        %827 = vbcast.lane.b32.xlu0 %v781, %s826
        %v828 = vpop.permute.xlu0 %827
        %s830 = sor.u32 256, 96
        %831 = vbcast.lane.b32.xlu0 %v781, %s830
        %v832 = vpop.permute.xlu0 %831
        %s834 = sor.u32 256, 104
        %835 = vbcast.lane.b32.xlu0 %v781, %s834
        %v836 = vpop.permute.xlu0 %835
        %s838 = sor.u32 256, 112
        %839 = vbcast.lane.b32.xlu0 %v781, %s838
        %v840 = vpop.permute.xlu0 %839
        %s842 = sor.u32 256, 120
        %843 = vbcast.lane.b32.xlu0 %v781, %s842
        %v844 = vpop.permute.xlu0 %843
        %v845 = vlaneseq
        %v846 = vshrl.u32 %v845, 7
        %v847 = vsub.s32 5, %v846
        %v848 = vrot.slane %v508, %v847
        %850 = vbcast.lane.b32.xlu0 %v848, 256
        %v851 = vpop.permute.xlu0 %850
        %s853 = sor.u32 256, 8
        %854 = vbcast.lane.b32.xlu0 %v848, %s853
        %v855 = vpop.permute.xlu0 %854
        %s857 = sor.u32 256, 16
        %858 = vbcast.lane.b32.xlu0 %v848, %s857
        %v859 = vpop.permute.xlu0 %858
        %s861 = sor.u32 256, 24
        %862 = vbcast.lane.b32.xlu0 %v848, %s861
        %v863 = vpop.permute.xlu0 %862
        %s865 = sor.u32 256, 32
        %866 = vbcast.lane.b32.xlu0 %v848, %s865
        %v867 = vpop.permute.xlu0 %866
        %s869 = sor.u32 256, 40
        %870 = vbcast.lane.b32.xlu0 %v848, %s869
        %v871 = vpop.permute.xlu0 %870
        %s873 = sor.u32 256, 48
        %874 = vbcast.lane.b32.xlu0 %v848, %s873
        %v875 = vpop.permute.xlu0 %874
        %s877 = sor.u32 256, 56
        %878 = vbcast.lane.b32.xlu0 %v848, %s877
        %v879 = vpop.permute.xlu0 %878
        %s881 = sor.u32 256, 64
        %882 = vbcast.lane.b32.xlu0 %v848, %s881
        %v883 = vpop.permute.xlu0 %882
        %s885 = sor.u32 256, 72
        %886 = vbcast.lane.b32.xlu0 %v848, %s885
        %v887 = vpop.permute.xlu0 %886
        %s889 = sor.u32 256, 80
        %890 = vbcast.lane.b32.xlu0 %v848, %s889
        %v891 = vpop.permute.xlu0 %890
        %s893 = sor.u32 256, 88
        %894 = vbcast.lane.b32.xlu0 %v848, %s893
        %v895 = vpop.permute.xlu0 %894
        %s897 = sor.u32 256, 96
        %898 = vbcast.lane.b32.xlu0 %v848, %s897
        %v899 = vpop.permute.xlu0 %898
        %s901 = sor.u32 256, 104
        %902 = vbcast.lane.b32.xlu0 %v848, %s901
        %v903 = vpop.permute.xlu0 %902
        %s905 = sor.u32 256, 112
        %906 = vbcast.lane.b32.xlu0 %v848, %s905
        %v907 = vpop.permute.xlu0 %906
        %s909 = sor.u32 256, 120
        %910 = vbcast.lane.b32.xlu0 %v848, %s909
        %v911 = vpop.permute.xlu0 %910
        %v912 = vlaneseq
        %v913 = vshrl.u32 %v912, 7
        %v914 = vsub.s32 6, %v913
        %v915 = vrot.slane %v508, %v914
        %917 = vbcast.lane.b32.xlu0 %v915, 256
        %v918 = vpop.permute.xlu0 %917
        %s920 = sor.u32 256, 8
        %921 = vbcast.lane.b32.xlu0 %v915, %s920
        %v922 = vpop.permute.xlu0 %921
        %s924 = sor.u32 256, 16
        %925 = vbcast.lane.b32.xlu0 %v915, %s924
        %v926 = vpop.permute.xlu0 %925
        %s928 = sor.u32 256, 24
        %929 = vbcast.lane.b32.xlu0 %v915, %s928
        %v930 = vpop.permute.xlu0 %929
        %s932 = sor.u32 256, 32
        %933 = vbcast.lane.b32.xlu0 %v915, %s932
        %v934 = vpop.permute.xlu0 %933
        %s936 = sor.u32 256, 40
        %937 = vbcast.lane.b32.xlu0 %v915, %s936
        %v938 = vpop.permute.xlu0 %937
        %s940 = sor.u32 256, 48
        %941 = vbcast.lane.b32.xlu0 %v915, %s940
        %v942 = vpop.permute.xlu0 %941
        %s944 = sor.u32 256, 56
        %945 = vbcast.lane.b32.xlu0 %v915, %s944
        %v946 = vpop.permute.xlu0 %945
        %s948 = sor.u32 256, 64
        %949 = vbcast.lane.b32.xlu0 %v915, %s948
        %v950 = vpop.permute.xlu0 %949
        %s952 = sor.u32 256, 72
        %953 = vbcast.lane.b32.xlu0 %v915, %s952
        %v954 = vpop.permute.xlu0 %953
        %s956 = sor.u32 256, 80
        %957 = vbcast.lane.b32.xlu0 %v915, %s956
        %v958 = vpop.permute.xlu0 %957
        %s960 = sor.u32 256, 88
        %961 = vbcast.lane.b32.xlu0 %v915, %s960
        %v962 = vpop.permute.xlu0 %961
        %s964 = sor.u32 256, 96
        %965 = vbcast.lane.b32.xlu0 %v915, %s964
        %v966 = vpop.permute.xlu0 %965
        %s968 = sor.u32 256, 104
        %969 = vbcast.lane.b32.xlu0 %v915, %s968
        %v970 = vpop.permute.xlu0 %969
        %s972 = sor.u32 256, 112
        %973 = vbcast.lane.b32.xlu0 %v915, %s972
        %v974 = vpop.permute.xlu0 %973
        %s976 = sor.u32 256, 120
        %977 = vbcast.lane.b32.xlu0 %v915, %s976
        %v978 = vpop.permute.xlu0 %977
        %v979 = vlaneseq
        %v980 = vshrl.u32 %v979, 7
        %v981 = vsub.s32 7, %v980
        %v982 = vrot.slane %v508, %v981
        %984 = vbcast.lane.b32.xlu0 %v982, 256
        %v985 = vpop.permute.xlu0 %984
        %s987 = sor.u32 256, 8
        %988 = vbcast.lane.b32.xlu0 %v982, %s987
        %v989 = vpop.permute.xlu0 %988
        %s991 = sor.u32 256, 16
        %992 = vbcast.lane.b32.xlu0 %v982, %s991
        %v993 = vpop.permute.xlu0 %992
        %s995 = sor.u32 256, 24
        %996 = vbcast.lane.b32.xlu0 %v982, %s995
        %v997 = vpop.permute.xlu0 %996
        %s999 = sor.u32 256, 32
        %1000 = vbcast.lane.b32.xlu0 %v982, %s999
        %v1001 = vpop.permute.xlu0 %1000
        %s1003 = sor.u32 256, 40
        %1004 = vbcast.lane.b32.xlu0 %v982, %s1003
        %v1005 = vpop.permute.xlu0 %1004
        %s1007 = sor.u32 256, 48
        %1008 = vbcast.lane.b32.xlu0 %v982, %s1007
        %v1009 = vpop.permute.xlu0 %1008
        %s1011 = sor.u32 256, 56
        %1012 = vbcast.lane.b32.xlu0 %v982, %s1011
        %v1013 = vpop.permute.xlu0 %1012
        %s1015 = sor.u32 256, 64
        %1016 = vbcast.lane.b32.xlu0 %v982, %s1015
        %v1017 = vpop.permute.xlu0 %1016
        %s1019 = sor.u32 256, 72
        %1020 = vbcast.lane.b32.xlu0 %v982, %s1019
        %v1021 = vpop.permute.xlu0 %1020
        %s1023 = sor.u32 256, 80
        %1024 = vbcast.lane.b32.xlu0 %v982, %s1023
        %v1025 = vpop.permute.xlu0 %1024
        %s1027 = sor.u32 256, 88
        %1028 = vbcast.lane.b32.xlu0 %v982, %s1027
        %v1029 = vpop.permute.xlu0 %1028
        %s1031 = sor.u32 256, 96
        %1032 = vbcast.lane.b32.xlu0 %v982, %s1031
        %v1033 = vpop.permute.xlu0 %1032
        %s1035 = sor.u32 256, 104
        %1036 = vbcast.lane.b32.xlu0 %v982, %s1035
        %v1037 = vpop.permute.xlu0 %1036
        %s1039 = sor.u32 256, 112
        %1040 = vbcast.lane.b32.xlu0 %v982, %s1039
        %v1041 = vpop.permute.xlu0 %1040
        %s1043 = sor.u32 256, 120
        %1044 = vbcast.lane.b32.xlu0 %v982, %s1043
        %v1045 = vpop.permute.xlu0 %1044
        %v1046 = vlaneseq
        %v1047 = vshrl.u32 %v1046, 7
        %v1048 = vsub.s32 0, %v1047
        %v1049 = vrot.slane %v509, %v1048
        %1051 = vbcast.lane.b32.xlu0 %v1049, 256
        %v1052 = vpop.permute.xlu0 %1051
        %s1054 = sor.u32 256, 8
        %1055 = vbcast.lane.b32.xlu0 %v1049, %s1054
        %v1056 = vpop.permute.xlu0 %1055
        %s1058 = sor.u32 256, 16
        %1059 = vbcast.lane.b32.xlu0 %v1049, %s1058
        %v1060 = vpop.permute.xlu0 %1059
        %s1062 = sor.u32 256, 24
        %1063 = vbcast.lane.b32.xlu0 %v1049, %s1062
        %v1064 = vpop.permute.xlu0 %1063
        %s1066 = sor.u32 256, 32
        %1067 = vbcast.lane.b32.xlu0 %v1049, %s1066
        %v1068 = vpop.permute.xlu0 %1067
        %s1070 = sor.u32 256, 40
        %1071 = vbcast.lane.b32.xlu0 %v1049, %s1070
        %v1072 = vpop.permute.xlu0 %1071
        %s1074 = sor.u32 256, 48
        %1075 = vbcast.lane.b32.xlu0 %v1049, %s1074
        %v1076 = vpop.permute.xlu0 %1075
        %s1078 = sor.u32 256, 56
        %1079 = vbcast.lane.b32.xlu0 %v1049, %s1078
        %v1080 = vpop.permute.xlu0 %1079
        %s1082 = sor.u32 256, 64
        %1083 = vbcast.lane.b32.xlu0 %v1049, %s1082
        %v1084 = vpop.permute.xlu0 %1083
        %s1086 = sor.u32 256, 72
        %1087 = vbcast.lane.b32.xlu0 %v1049, %s1086
        %v1088 = vpop.permute.xlu0 %1087
        %s1090 = sor.u32 256, 80
        %1091 = vbcast.lane.b32.xlu0 %v1049, %s1090
        %v1092 = vpop.permute.xlu0 %1091
        %s1094 = sor.u32 256, 88
        %1095 = vbcast.lane.b32.xlu0 %v1049, %s1094
        %v1096 = vpop.permute.xlu0 %1095
        %s1098 = sor.u32 256, 96
        %1099 = vbcast.lane.b32.xlu0 %v1049, %s1098
        %v1100 = vpop.permute.xlu0 %1099
        %s1102 = sor.u32 256, 104
        %1103 = vbcast.lane.b32.xlu0 %v1049, %s1102
        %v1104 = vpop.permute.xlu0 %1103
        %s1106 = sor.u32 256, 112
        %1107 = vbcast.lane.b32.xlu0 %v1049, %s1106
        %v1108 = vpop.permute.xlu0 %1107
        %s1110 = sor.u32 256, 120
        %1111 = vbcast.lane.b32.xlu0 %v1049, %s1110
        %v1112 = vpop.permute.xlu0 %1111
        %v1113 = vlaneseq
        %v1114 = vshrl.u32 %v1113, 7
        %v1115 = vsub.s32 1, %v1114
        %v1116 = vrot.slane %v509, %v1115
        %1118 = vbcast.lane.b32.xlu0 %v1116, 256
        %v1119 = vpop.permute.xlu0 %1118
        %s1121 = sor.u32 256, 8
        %1122 = vbcast.lane.b32.xlu0 %v1116, %s1121
        %v1123 = vpop.permute.xlu0 %1122
        %s1125 = sor.u32 256, 16
        %1126 = vbcast.lane.b32.xlu0 %v1116, %s1125
        %v1127 = vpop.permute.xlu0 %1126
        %s1129 = sor.u32 256, 24
        %1130 = vbcast.lane.b32.xlu0 %v1116, %s1129
        %v1131 = vpop.permute.xlu0 %1130
        %s1133 = sor.u32 256, 32
        %1134 = vbcast.lane.b32.xlu0 %v1116, %s1133
        %v1135 = vpop.permute.xlu0 %1134
        %s1137 = sor.u32 256, 40
        %1138 = vbcast.lane.b32.xlu0 %v1116, %s1137
        %v1139 = vpop.permute.xlu0 %1138
        %s1141 = sor.u32 256, 48
        %1142 = vbcast.lane.b32.xlu0 %v1116, %s1141
        %v1143 = vpop.permute.xlu0 %1142
        %s1145 = sor.u32 256, 56
        %1146 = vbcast.lane.b32.xlu0 %v1116, %s1145
        %v1147 = vpop.permute.xlu0 %1146
        %s1149 = sor.u32 256, 64
        %1150 = vbcast.lane.b32.xlu0 %v1116, %s1149
        %v1151 = vpop.permute.xlu0 %1150
        %s1153 = sor.u32 256, 72
        %1154 = vbcast.lane.b32.xlu0 %v1116, %s1153
        %v1155 = vpop.permute.xlu0 %1154
        %s1157 = sor.u32 256, 80
        %1158 = vbcast.lane.b32.xlu0 %v1116, %s1157
        %v1159 = vpop.permute.xlu0 %1158
        %s1161 = sor.u32 256, 88
        %1162 = vbcast.lane.b32.xlu0 %v1116, %s1161
        %v1163 = vpop.permute.xlu0 %1162
        %s1165 = sor.u32 256, 96
        %1166 = vbcast.lane.b32.xlu0 %v1116, %s1165
        %v1167 = vpop.permute.xlu0 %1166
        %s1169 = sor.u32 256, 104
        %1170 = vbcast.lane.b32.xlu0 %v1116, %s1169
        %v1171 = vpop.permute.xlu0 %1170
        %s1173 = sor.u32 256, 112
        %1174 = vbcast.lane.b32.xlu0 %v1116, %s1173
        %v1175 = vpop.permute.xlu0 %1174
        %s1177 = sor.u32 256, 120
        %1178 = vbcast.lane.b32.xlu0 %v1116, %s1177
        %v1179 = vpop.permute.xlu0 %1178
        %v1180 = vlaneseq
        %v1181 = vshrl.u32 %v1180, 7
        %v1182 = vsub.s32 2, %v1181
        %v1183 = vrot.slane %v509, %v1182
        %1185 = vbcast.lane.b32.xlu0 %v1183, 256
        %v1186 = vpop.permute.xlu0 %1185
        %s1188 = sor.u32 256, 8
        %1189 = vbcast.lane.b32.xlu0 %v1183, %s1188
        %v1190 = vpop.permute.xlu0 %1189
        %s1192 = sor.u32 256, 16
        %1193 = vbcast.lane.b32.xlu0 %v1183, %s1192
        %v1194 = vpop.permute.xlu0 %1193
        %s1196 = sor.u32 256, 24
        %1197 = vbcast.lane.b32.xlu0 %v1183, %s1196
        %v1198 = vpop.permute.xlu0 %1197
        %s1200 = sor.u32 256, 32
        %1201 = vbcast.lane.b32.xlu0 %v1183, %s1200
        %v1202 = vpop.permute.xlu0 %1201
        %s1204 = sor.u32 256, 40
        %1205 = vbcast.lane.b32.xlu0 %v1183, %s1204
        %v1206 = vpop.permute.xlu0 %1205
        %s1208 = sor.u32 256, 48
        %1209 = vbcast.lane.b32.xlu0 %v1183, %s1208
        %v1210 = vpop.permute.xlu0 %1209
        %s1212 = sor.u32 256, 56
        %1213 = vbcast.lane.b32.xlu0 %v1183, %s1212
        %v1214 = vpop.permute.xlu0 %1213
        %s1216 = sor.u32 256, 64
        %1217 = vbcast.lane.b32.xlu0 %v1183, %s1216
        %v1218 = vpop.permute.xlu0 %1217
        %s1220 = sor.u32 256, 72
        %1221 = vbcast.lane.b32.xlu0 %v1183, %s1220
        %v1222 = vpop.permute.xlu0 %1221
        %s1224 = sor.u32 256, 80
        %1225 = vbcast.lane.b32.xlu0 %v1183, %s1224
        %v1226 = vpop.permute.xlu0 %1225
        %s1228 = sor.u32 256, 88
        %1229 = vbcast.lane.b32.xlu0 %v1183, %s1228
        %v1230 = vpop.permute.xlu0 %1229
        %s1232 = sor.u32 256, 96
        %1233 = vbcast.lane.b32.xlu0 %v1183, %s1232
        %v1234 = vpop.permute.xlu0 %1233
        %s1236 = sor.u32 256, 104
        %1237 = vbcast.lane.b32.xlu0 %v1183, %s1236
        %v1238 = vpop.permute.xlu0 %1237
        %s1240 = sor.u32 256, 112
        %1241 = vbcast.lane.b32.xlu0 %v1183, %s1240
        %v1242 = vpop.permute.xlu0 %1241
        %s1244 = sor.u32 256, 120
        %1245 = vbcast.lane.b32.xlu0 %v1183, %s1244
        %v1246 = vpop.permute.xlu0 %1245
        %v1247 = vlaneseq
        %v1248 = vshrl.u32 %v1247, 7
        %v1249 = vsub.s32 3, %v1248
        %v1250 = vrot.slane %v509, %v1249
        %1252 = vbcast.lane.b32.xlu0 %v1250, 256
        %v1253 = vpop.permute.xlu0 %1252
        %s1255 = sor.u32 256, 8
        %1256 = vbcast.lane.b32.xlu0 %v1250, %s1255
        %v1257 = vpop.permute.xlu0 %1256
        %s1259 = sor.u32 256, 16
        %1260 = vbcast.lane.b32.xlu0 %v1250, %s1259
        %v1261 = vpop.permute.xlu0 %1260
        %s1263 = sor.u32 256, 24
        %1264 = vbcast.lane.b32.xlu0 %v1250, %s1263
        %v1265 = vpop.permute.xlu0 %1264
        %s1267 = sor.u32 256, 32
        %1268 = vbcast.lane.b32.xlu0 %v1250, %s1267
        %v1269 = vpop.permute.xlu0 %1268
        %s1271 = sor.u32 256, 40
        %1272 = vbcast.lane.b32.xlu0 %v1250, %s1271
        %v1273 = vpop.permute.xlu0 %1272
        %s1275 = sor.u32 256, 48
        %1276 = vbcast.lane.b32.xlu0 %v1250, %s1275
        %v1277 = vpop.permute.xlu0 %1276
        %s1279 = sor.u32 256, 56
        %1280 = vbcast.lane.b32.xlu0 %v1250, %s1279
        %v1281 = vpop.permute.xlu0 %1280
        %s1283 = sor.u32 256, 64
        %1284 = vbcast.lane.b32.xlu0 %v1250, %s1283
        %v1285 = vpop.permute.xlu0 %1284
        %s1287 = sor.u32 256, 72
        %1288 = vbcast.lane.b32.xlu0 %v1250, %s1287
        %v1289 = vpop.permute.xlu0 %1288
        %s1291 = sor.u32 256, 80
        %1292 = vbcast.lane.b32.xlu0 %v1250, %s1291
        %v1293 = vpop.permute.xlu0 %1292
        %s1295 = sor.u32 256, 88
        %1296 = vbcast.lane.b32.xlu0 %v1250, %s1295
        %v1297 = vpop.permute.xlu0 %1296
        %s1299 = sor.u32 256, 96
        %1300 = vbcast.lane.b32.xlu0 %v1250, %s1299
        %v1301 = vpop.permute.xlu0 %1300
        %s1303 = sor.u32 256, 104
        %1304 = vbcast.lane.b32.xlu0 %v1250, %s1303
        %v1305 = vpop.permute.xlu0 %1304
        %s1307 = sor.u32 256, 112
        %1308 = vbcast.lane.b32.xlu0 %v1250, %s1307
        %v1309 = vpop.permute.xlu0 %1308
        %s1311 = sor.u32 256, 120
        %1312 = vbcast.lane.b32.xlu0 %v1250, %s1311
        %v1313 = vpop.permute.xlu0 %1312
        %v1314 = vlaneseq
        %v1315 = vshrl.u32 %v1314, 7
        %v1316 = vsub.s32 4, %v1315
        %v1317 = vrot.slane %v509, %v1316
        %1319 = vbcast.lane.b32.xlu0 %v1317, 256
        %v1320 = vpop.permute.xlu0 %1319
        %s1322 = sor.u32 256, 8
        %1323 = vbcast.lane.b32.xlu0 %v1317, %s1322
        %v1324 = vpop.permute.xlu0 %1323
        %s1326 = sor.u32 256, 16
        %1327 = vbcast.lane.b32.xlu0 %v1317, %s1326
        %v1328 = vpop.permute.xlu0 %1327
        %s1330 = sor.u32 256, 24
        %1331 = vbcast.lane.b32.xlu0 %v1317, %s1330
        %v1332 = vpop.permute.xlu0 %1331
        %s1334 = sor.u32 256, 32
        %1335 = vbcast.lane.b32.xlu0 %v1317, %s1334
        %v1336 = vpop.permute.xlu0 %1335
        %s1338 = sor.u32 256, 40
        %1339 = vbcast.lane.b32.xlu0 %v1317, %s1338
        %v1340 = vpop.permute.xlu0 %1339
        %s1342 = sor.u32 256, 48
        %1343 = vbcast.lane.b32.xlu0 %v1317, %s1342
        %v1344 = vpop.permute.xlu0 %1343
        %s1346 = sor.u32 256, 56
        %1347 = vbcast.lane.b32.xlu0 %v1317, %s1346
        %v1348 = vpop.permute.xlu0 %1347
        %s1350 = sor.u32 256, 64
        %1351 = vbcast.lane.b32.xlu0 %v1317, %s1350
        %v1352 = vpop.permute.xlu0 %1351
        %s1354 = sor.u32 256, 72
        %1355 = vbcast.lane.b32.xlu0 %v1317, %s1354
        %v1356 = vpop.permute.xlu0 %1355
        %s1358 = sor.u32 256, 80
        %1359 = vbcast.lane.b32.xlu0 %v1317, %s1358
        %v1360 = vpop.permute.xlu0 %1359
        %s1362 = sor.u32 256, 88
        %1363 = vbcast.lane.b32.xlu0 %v1317, %s1362
        %v1364 = vpop.permute.xlu0 %1363
        %s1366 = sor.u32 256, 96
        %1367 = vbcast.lane.b32.xlu0 %v1317, %s1366
        %v1368 = vpop.permute.xlu0 %1367
        %s1370 = sor.u32 256, 104
        %1371 = vbcast.lane.b32.xlu0 %v1317, %s1370
        %v1372 = vpop.permute.xlu0 %1371
        %s1374 = sor.u32 256, 112
        %1375 = vbcast.lane.b32.xlu0 %v1317, %s1374
        %v1376 = vpop.permute.xlu0 %1375
        %s1378 = sor.u32 256, 120
        %1379 = vbcast.lane.b32.xlu0 %v1317, %s1378
        %v1380 = vpop.permute.xlu0 %1379
        %v1381 = vlaneseq
        %v1382 = vshrl.u32 %v1381, 7
        %v1383 = vsub.s32 5, %v1382
        %v1384 = vrot.slane %v509, %v1383
        %1386 = vbcast.lane.b32.xlu0 %v1384, 256
        %v1387 = vpop.permute.xlu0 %1386
        %s1389 = sor.u32 256, 8
        %1390 = vbcast.lane.b32.xlu0 %v1384, %s1389
        %v1391 = vpop.permute.xlu0 %1390
        %s1393 = sor.u32 256, 16
        %1394 = vbcast.lane.b32.xlu0 %v1384, %s1393
        %v1395 = vpop.permute.xlu0 %1394
        %s1397 = sor.u32 256, 24
        %1398 = vbcast.lane.b32.xlu0 %v1384, %s1397
        %v1399 = vpop.permute.xlu0 %1398
        %s1401 = sor.u32 256, 32
        %1402 = vbcast.lane.b32.xlu0 %v1384, %s1401
        %v1403 = vpop.permute.xlu0 %1402
        %s1405 = sor.u32 256, 40
        %1406 = vbcast.lane.b32.xlu0 %v1384, %s1405
        %v1407 = vpop.permute.xlu0 %1406
        %s1409 = sor.u32 256, 48
        %1410 = vbcast.lane.b32.xlu0 %v1384, %s1409
        %v1411 = vpop.permute.xlu0 %1410
        %s1413 = sor.u32 256, 56
        %1414 = vbcast.lane.b32.xlu0 %v1384, %s1413
        %v1415 = vpop.permute.xlu0 %1414
        %s1417 = sor.u32 256, 64
        %1418 = vbcast.lane.b32.xlu0 %v1384, %s1417
        %v1419 = vpop.permute.xlu0 %1418
        %s1421 = sor.u32 256, 72
        %1422 = vbcast.lane.b32.xlu0 %v1384, %s1421
        %v1423 = vpop.permute.xlu0 %1422
        %s1425 = sor.u32 256, 80
        %1426 = vbcast.lane.b32.xlu0 %v1384, %s1425
        %v1427 = vpop.permute.xlu0 %1426
        %s1429 = sor.u32 256, 88
        %1430 = vbcast.lane.b32.xlu0 %v1384, %s1429
        %v1431 = vpop.permute.xlu0 %1430
        %s1433 = sor.u32 256, 96
        %1434 = vbcast.lane.b32.xlu0 %v1384, %s1433
        %v1435 = vpop.permute.xlu0 %1434
        %s1437 = sor.u32 256, 104
        %1438 = vbcast.lane.b32.xlu0 %v1384, %s1437
        %v1439 = vpop.permute.xlu0 %1438
        %s1441 = sor.u32 256, 112
        %1442 = vbcast.lane.b32.xlu0 %v1384, %s1441
        %v1443 = vpop.permute.xlu0 %1442
        %s1445 = sor.u32 256, 120
        %1446 = vbcast.lane.b32.xlu0 %v1384, %s1445
        %v1447 = vpop.permute.xlu0 %1446
        %v1448 = vlaneseq
        %v1449 = vshrl.u32 %v1448, 7
        %v1450 = vsub.s32 6, %v1449
        %v1451 = vrot.slane %v509, %v1450
        %1453 = vbcast.lane.b32.xlu0 %v1451, 256
        %v1454 = vpop.permute.xlu0 %1453
        %s1456 = sor.u32 256, 8
        %1457 = vbcast.lane.b32.xlu0 %v1451, %s1456
        %v1458 = vpop.permute.xlu0 %1457
        %s1460 = sor.u32 256, 16
        %1461 = vbcast.lane.b32.xlu0 %v1451, %s1460
        %v1462 = vpop.permute.xlu0 %1461
        %s1464 = sor.u32 256, 24
        %1465 = vbcast.lane.b32.xlu0 %v1451, %s1464
        %v1466 = vpop.permute.xlu0 %1465
        %s1468 = sor.u32 256, 32
        %1469 = vbcast.lane.b32.xlu0 %v1451, %s1468
        %v1470 = vpop.permute.xlu0 %1469
        %s1472 = sor.u32 256, 40
        %1473 = vbcast.lane.b32.xlu0 %v1451, %s1472
        %v1474 = vpop.permute.xlu0 %1473
        %s1476 = sor.u32 256, 48
        %1477 = vbcast.lane.b32.xlu0 %v1451, %s1476
        %v1478 = vpop.permute.xlu0 %1477
        %s1480 = sor.u32 256, 56
        %1481 = vbcast.lane.b32.xlu0 %v1451, %s1480
        %v1482 = vpop.permute.xlu0 %1481
        %s1484 = sor.u32 256, 64
        %1485 = vbcast.lane.b32.xlu0 %v1451, %s1484
        %v1486 = vpop.permute.xlu0 %1485
        %s1488 = sor.u32 256, 72
        %1489 = vbcast.lane.b32.xlu0 %v1451, %s1488
        %v1490 = vpop.permute.xlu0 %1489
        %s1492 = sor.u32 256, 80
        %1493 = vbcast.lane.b32.xlu0 %v1451, %s1492
        %v1494 = vpop.permute.xlu0 %1493
        %s1496 = sor.u32 256, 88
        %1497 = vbcast.lane.b32.xlu0 %v1451, %s1496
        %v1498 = vpop.permute.xlu0 %1497
        %s1500 = sor.u32 256, 96
        %1501 = vbcast.lane.b32.xlu0 %v1451, %s1500
        %v1502 = vpop.permute.xlu0 %1501
        %s1504 = sor.u32 256, 104
        %1505 = vbcast.lane.b32.xlu0 %v1451, %s1504
        %v1506 = vpop.permute.xlu0 %1505
        %s1508 = sor.u32 256, 112
        %1509 = vbcast.lane.b32.xlu0 %v1451, %s1508
        %v1510 = vpop.permute.xlu0 %1509
        %s1512 = sor.u32 256, 120
        %1513 = vbcast.lane.b32.xlu0 %v1451, %s1512
        %v1514 = vpop.permute.xlu0 %1513
        %v1515 = vlaneseq
        %v1516 = vshrl.u32 %v1515, 7
        %v1517 = vsub.s32 7, %v1516
        %v1518 = vrot.slane %v509, %v1517
        %1520 = vbcast.lane.b32.xlu0 %v1518, 256
        %v1521 = vpop.permute.xlu0 %1520
        %s1523 = sor.u32 256, 8
        %1524 = vbcast.lane.b32.xlu0 %v1518, %s1523
        %v1525 = vpop.permute.xlu0 %1524
        %s1527 = sor.u32 256, 16
        %1528 = vbcast.lane.b32.xlu0 %v1518, %s1527
        %v1529 = vpop.permute.xlu0 %1528
        %s1531 = sor.u32 256, 24
        %1532 = vbcast.lane.b32.xlu0 %v1518, %s1531
        %v1533 = vpop.permute.xlu0 %1532
        %s1535 = sor.u32 256, 32
        %1536 = vbcast.lane.b32.xlu0 %v1518, %s1535
        %v1537 = vpop.permute.xlu0 %1536
        %s1539 = sor.u32 256, 40
        %1540 = vbcast.lane.b32.xlu0 %v1518, %s1539
        %v1541 = vpop.permute.xlu0 %1540
        %s1543 = sor.u32 256, 48
        %1544 = vbcast.lane.b32.xlu0 %v1518, %s1543
        %v1545 = vpop.permute.xlu0 %1544
        %s1547 = sor.u32 256, 56
        %1548 = vbcast.lane.b32.xlu0 %v1518, %s1547
        %v1549 = vpop.permute.xlu0 %1548
        %s1551 = sor.u32 256, 64
        %1552 = vbcast.lane.b32.xlu0 %v1518, %s1551
        %v1553 = vpop.permute.xlu0 %1552
        %s1555 = sor.u32 256, 72
        %1556 = vbcast.lane.b32.xlu0 %v1518, %s1555
        %v1557 = vpop.permute.xlu0 %1556
        %s1559 = sor.u32 256, 80
        %1560 = vbcast.lane.b32.xlu0 %v1518, %s1559
        %v1561 = vpop.permute.xlu0 %1560
        %s1563 = sor.u32 256, 88
        %1564 = vbcast.lane.b32.xlu0 %v1518, %s1563
        %v1565 = vpop.permute.xlu0 %1564
        %s1567 = sor.u32 256, 96
        %1568 = vbcast.lane.b32.xlu0 %v1518, %s1567
        %v1569 = vpop.permute.xlu0 %1568
        %s1571 = sor.u32 256, 104
        %1572 = vbcast.lane.b32.xlu0 %v1518, %s1571
        %v1573 = vpop.permute.xlu0 %1572
        %s1575 = sor.u32 256, 112
        %1576 = vbcast.lane.b32.xlu0 %v1518, %s1575
        %v1577 = vpop.permute.xlu0 %1576
        %s1579 = sor.u32 256, 120
        %1580 = vbcast.lane.b32.xlu0 %v1518, %s1579
        %v1581 = vpop.permute.xlu0 %1580
        %v1582 = vlaneseq
        %v1583 = vshrl.u32 %v1582, 7
        %v1584 = vsub.s32 0, %v1583
        %v1585 = vrot.slane %v433, %v1584
        %v1586 = vlaneseq
        %v1587 = vshrl.u32 %v1586, 7
        %v1588 = vsub.s32 0, %v1587
        %v1589 = vrot.slane %v447, %v1588
        %v1590 = vlaneseq
        %v1591 = vshrl.u32 %v1590, 7
        %v1592 = vsub.s32 0, %v1591
        %v1593 = vrot.slane %v455, %v1592
        %v1594 = vlaneseq
        %v1595 = vshrl.u32 %v1594, 7
        %v1596 = vsub.s32 0, %v1595
        %v1597 = vrot.slane %v457, %v1596
        %v1598 = vlaneseq
        %v1599 = vshrl.u32 %v1598, 7
        %v1600 = vsub.s32 0, %v1599
        %v1601 = vrot.slane %v440, %v1600
        %v1602 = vlaneseq
        %v1603 = vshrl.u32 %v1602, 7
        %v1604 = vsub.s32 0, %v1603
        %v1605 = vrot.slane %v454, %v1604
        %v1606 = vlaneseq
        %v1607 = vshrl.u32 %v1606, 7
        %v1608 = vsub.s32 0, %v1607
        %v1609 = vrot.slane %v456, %v1608
        %v1610 = vlaneseq
        %v1611 = vshrl.u32 %v1610, 7
        %v1612 = vsub.s32 0, %v1611
        %v1613 = vrot.slane %v458, %v1612
        %v1614 = vlaneseq
        %v1615 = vshrl.u32 %v1614, 7
        %v1616 = vsub.s32 0, %v1615
        %v1617 = vrot.slane %v482, %v1616
        %v1618 = vlaneseq
        %v1619 = vshrl.u32 %v1618, 7
        %v1620 = vsub.s32 0, %v1619
        %v1621 = vrot.slane %v496, %v1620
        %v1622 = vlaneseq
        %v1623 = vshrl.u32 %v1622, 7
        %v1624 = vsub.s32 0, %v1623
        %v1625 = vrot.slane %v504, %v1624
        %v1626 = vlaneseq
        %v1627 = vshrl.u32 %v1626, 7
        %v1628 = vsub.s32 0, %v1627
        %v1629 = vrot.slane %v506, %v1628
        %v1630 = vlaneseq
        %v1631 = vshrl.u32 %v1630, 7
        %v1632 = vsub.s32 0, %v1631
        %v1633 = vrot.slane %v489, %v1632
        %v1634 = vlaneseq
        %v1635 = vshrl.u32 %v1634, 7
        %v1636 = vsub.s32 0, %v1635
        %v1637 = vrot.slane %v503, %v1636
        %v1638 = vlaneseq
        %v1639 = vshrl.u32 %v1638, 7
        %v1640 = vsub.s32 0, %v1639
        %v1641 = vrot.slane %v505, %v1640
        %v1642 = vlaneseq
        %v1643 = vshrl.u32 %v1642, 7
        %v1644 = vsub.s32 0, %v1643
        %v1645 = vrot.slane %v507, %v1644
        %vm1662 = vcmp.lt.f32.partialorder %v1585, %v516
        %vm1663 = vcmp.lt.f32.partialorder %v1585, %v520
        %vm1664 = vcmp.lt.f32.partialorder %v1585, %v524
        %vm1665 = vcmp.lt.f32.partialorder %v1585, %v528
        %vm1666 = vcmp.lt.f32.partialorder %v1585, %v532
        %vm1667 = vcmp.lt.f32.partialorder %v1585, %v536
        %vm1668 = vcmp.lt.f32.partialorder %v1585, %v540
        %vm1669 = vcmp.lt.f32.partialorder %v1585, %v544
        %vm1670 = vcmp.lt.f32.partialorder %v1585, %v548
        %vm1671 = vcmp.lt.f32.partialorder %v1585, %v552
        %vm1672 = vcmp.lt.f32.partialorder %v1585, %v556
        %vm1673 = vcmp.lt.f32.partialorder %v1585, %v560
        %vm1674 = vcmp.lt.f32.partialorder %v1585, %v564
        %vm1675 = vcmp.lt.f32.partialorder %v1585, %v568
        %vm1676 = vcmp.lt.f32.partialorder %v1585, %v572
        %vm1677 = vcmp.lt.f32.partialorder %v1585, %v576
        %vm1678 = vcmp.lt.f32.partialorder %v1589, %v583
        %vm1679 = vcmp.lt.f32.partialorder %v1589, %v587
        %vm1680 = vcmp.lt.f32.partialorder %v1589, %v591
        %vm1681 = vcmp.lt.f32.partialorder %v1589, %v595
        %vm1682 = vcmp.lt.f32.partialorder %v1589, %v599
        %vm1683 = vcmp.lt.f32.partialorder %v1589, %v603
        %vm1684 = vcmp.lt.f32.partialorder %v1589, %v607
        %vm1685 = vcmp.lt.f32.partialorder %v1589, %v611
        %vm1686 = vcmp.lt.f32.partialorder %v1589, %v615
        %vm1687 = vcmp.lt.f32.partialorder %v1589, %v619
        %vm1688 = vcmp.lt.f32.partialorder %v1589, %v623
        %vm1689 = vcmp.lt.f32.partialorder %v1589, %v627
        %vm1690 = vcmp.lt.f32.partialorder %v1589, %v631
        %vm1691 = vcmp.lt.f32.partialorder %v1589, %v635
        %vm1692 = vcmp.lt.f32.partialorder %v1589, %v639
        %vm1693 = vcmp.lt.f32.partialorder %v1589, %v643
        %vm1694 = vcmp.lt.f32.partialorder %v1593, %v650
        %vm1695 = vcmp.lt.f32.partialorder %v1593, %v654
        %vm1696 = vcmp.lt.f32.partialorder %v1593, %v658
        %vm1697 = vcmp.lt.f32.partialorder %v1593, %v662
        %vm1698 = vcmp.lt.f32.partialorder %v1593, %v666
        %vm1699 = vcmp.lt.f32.partialorder %v1593, %v670
        %vm1700 = vcmp.lt.f32.partialorder %v1593, %v674
        %vm1701 = vcmp.lt.f32.partialorder %v1593, %v678
        %vm1702 = vcmp.lt.f32.partialorder %v1593, %v682
        %vm1703 = vcmp.lt.f32.partialorder %v1593, %v686
        %vm1704 = vcmp.lt.f32.partialorder %v1593, %v690
        %vm1705 = vcmp.lt.f32.partialorder %v1593, %v694
        %vm1706 = vcmp.lt.f32.partialorder %v1593, %v698
        %vm1707 = vcmp.lt.f32.partialorder %v1593, %v702
        %vm1708 = vcmp.lt.f32.partialorder %v1593, %v706
        %vm1709 = vcmp.lt.f32.partialorder %v1593, %v710
        %vm1710 = vcmp.lt.f32.partialorder %v1597, %v717
        %vm1711 = vcmp.lt.f32.partialorder %v1597, %v721
        %vm1712 = vcmp.lt.f32.partialorder %v1597, %v725
        %vm1713 = vcmp.lt.f32.partialorder %v1597, %v729
        %vm1714 = vcmp.lt.f32.partialorder %v1597, %v733
        %vm1715 = vcmp.lt.f32.partialorder %v1597, %v737
        %vm1716 = vcmp.lt.f32.partialorder %v1597, %v741
        %vm1717 = vcmp.lt.f32.partialorder %v1597, %v745
        %vm1718 = vcmp.lt.f32.partialorder %v1597, %v749
        %vm1719 = vcmp.lt.f32.partialorder %v1597, %v753
        %vm1720 = vcmp.lt.f32.partialorder %v1597, %v757
        %vm1721 = vcmp.lt.f32.partialorder %v1597, %v761
        %vm1722 = vcmp.lt.f32.partialorder %v1597, %v765
        %vm1723 = vcmp.lt.f32.partialorder %v1597, %v769
        %vm1724 = vcmp.lt.f32.partialorder %v1597, %v773
        %vm1725 = vcmp.lt.f32.partialorder %v1597, %v777
        %vm1726 = vcmp.lt.f32.partialorder %v1601, %v784
        %vm1727 = vcmp.lt.f32.partialorder %v1601, %v788
        %vm1728 = vcmp.lt.f32.partialorder %v1601, %v792
        %vm1729 = vcmp.lt.f32.partialorder %v1601, %v796
        %vm1730 = vcmp.lt.f32.partialorder %v1601, %v800
        %vm1731 = vcmp.lt.f32.partialorder %v1601, %v804
        %vm1732 = vcmp.lt.f32.partialorder %v1601, %v808
        %vm1733 = vcmp.lt.f32.partialorder %v1601, %v812
        %vm1734 = vcmp.lt.f32.partialorder %v1601, %v816
        %vm1735 = vcmp.lt.f32.partialorder %v1601, %v820
        %vm1736 = vcmp.lt.f32.partialorder %v1601, %v824
        %vm1737 = vcmp.lt.f32.partialorder %v1601, %v828
        %vm1738 = vcmp.lt.f32.partialorder %v1601, %v832
        %vm1739 = vcmp.lt.f32.partialorder %v1601, %v836
        %vm1740 = vcmp.lt.f32.partialorder %v1601, %v840
        %vm1741 = vcmp.lt.f32.partialorder %v1601, %v844
        %vm1742 = vcmp.lt.f32.partialorder %v1605, %v851
        %vm1743 = vcmp.lt.f32.partialorder %v1605, %v855
        %vm1744 = vcmp.lt.f32.partialorder %v1605, %v859
        %vm1745 = vcmp.lt.f32.partialorder %v1605, %v863
        %vm1746 = vcmp.lt.f32.partialorder %v1605, %v867
        %vm1747 = vcmp.lt.f32.partialorder %v1605, %v871
        %vm1748 = vcmp.lt.f32.partialorder %v1605, %v875
        %vm1749 = vcmp.lt.f32.partialorder %v1605, %v879
        %vm1750 = vcmp.lt.f32.partialorder %v1605, %v883
        %vm1751 = vcmp.lt.f32.partialorder %v1605, %v887
        %vm1752 = vcmp.lt.f32.partialorder %v1605, %v891
        %vm1753 = vcmp.lt.f32.partialorder %v1605, %v895
        %vm1754 = vcmp.lt.f32.partialorder %v1605, %v899
        %vm1755 = vcmp.lt.f32.partialorder %v1605, %v903
        %vm1756 = vcmp.lt.f32.partialorder %v1605, %v907
        %vm1757 = vcmp.lt.f32.partialorder %v1605, %v911
        %vm1758 = vcmp.lt.f32.partialorder %v1609, %v918
        %vm1759 = vcmp.lt.f32.partialorder %v1609, %v922
        %vm1760 = vcmp.lt.f32.partialorder %v1609, %v926
        %vm1761 = vcmp.lt.f32.partialorder %v1609, %v930
        %vm1762 = vcmp.lt.f32.partialorder %v1609, %v934
        %vm1763 = vcmp.lt.f32.partialorder %v1609, %v938
        %vm1764 = vcmp.lt.f32.partialorder %v1609, %v942
        %vm1765 = vcmp.lt.f32.partialorder %v1609, %v946
        %vm1766 = vcmp.lt.f32.partialorder %v1609, %v950
        %vm1767 = vcmp.lt.f32.partialorder %v1609, %v954
        %vm1768 = vcmp.lt.f32.partialorder %v1609, %v958
        %vm1769 = vcmp.lt.f32.partialorder %v1609, %v962
        %vm1770 = vcmp.lt.f32.partialorder %v1609, %v966
        %vm1771 = vcmp.lt.f32.partialorder %v1609, %v970
        %vm1772 = vcmp.lt.f32.partialorder %v1609, %v974
        %vm1773 = vcmp.lt.f32.partialorder %v1609, %v978
        %vm1774 = vcmp.lt.f32.partialorder %v1613, %v985
        %vm1775 = vcmp.lt.f32.partialorder %v1613, %v989
        %vm1776 = vcmp.lt.f32.partialorder %v1613, %v993
        %vm1777 = vcmp.lt.f32.partialorder %v1613, %v997
        %vm1778 = vcmp.lt.f32.partialorder %v1613, %v1001
        %vm1779 = vcmp.lt.f32.partialorder %v1613, %v1005
        %vm1780 = vcmp.lt.f32.partialorder %v1613, %v1009
        %vm1781 = vcmp.lt.f32.partialorder %v1613, %v1013
        %vm1782 = vcmp.lt.f32.partialorder %v1613, %v1017
        %vm1783 = vcmp.lt.f32.partialorder %v1613, %v1021
        %vm1784 = vcmp.lt.f32.partialorder %v1613, %v1025
        %vm1785 = vcmp.lt.f32.partialorder %v1613, %v1029
        %vm1786 = vcmp.lt.f32.partialorder %v1613, %v1033
        %vm1787 = vcmp.lt.f32.partialorder %v1613, %v1037
        %vm1788 = vcmp.lt.f32.partialorder %v1613, %v1041
        %vm1789 = vcmp.lt.f32.partialorder %v1613, %v1045
        %vm1790 = vcmp.lt.f32.partialorder %v1617, %v1052
        %vm1791 = vcmp.lt.f32.partialorder %v1617, %v1056
        %vm1792 = vcmp.lt.f32.partialorder %v1617, %v1060
        %vm1793 = vcmp.lt.f32.partialorder %v1617, %v1064
        %vm1794 = vcmp.lt.f32.partialorder %v1617, %v1068
        %vm1795 = vcmp.lt.f32.partialorder %v1617, %v1072
        %vm1796 = vcmp.lt.f32.partialorder %v1617, %v1076
        %vm1797 = vcmp.lt.f32.partialorder %v1617, %v1080
        %vm1798 = vcmp.lt.f32.partialorder %v1617, %v1084
        %vm1799 = vcmp.lt.f32.partialorder %v1617, %v1088
        %vm1800 = vcmp.lt.f32.partialorder %v1617, %v1092
        %vm1801 = vcmp.lt.f32.partialorder %v1617, %v1096
        %vm1802 = vcmp.lt.f32.partialorder %v1617, %v1100
        %vm1803 = vcmp.lt.f32.partialorder %v1617, %v1104
        %vm1804 = vcmp.lt.f32.partialorder %v1617, %v1108
        %vm1805 = vcmp.lt.f32.partialorder %v1617, %v1112
        %vm1806 = vcmp.lt.f32.partialorder %v1621, %v1119
        %vm1807 = vcmp.lt.f32.partialorder %v1621, %v1123
        %vm1808 = vcmp.lt.f32.partialorder %v1621, %v1127
        %vm1809 = vcmp.lt.f32.partialorder %v1621, %v1131
        %vm1810 = vcmp.lt.f32.partialorder %v1621, %v1135
        %vm1811 = vcmp.lt.f32.partialorder %v1621, %v1139
        %vm1812 = vcmp.lt.f32.partialorder %v1621, %v1143
        %vm1813 = vcmp.lt.f32.partialorder %v1621, %v1147
        %vm1814 = vcmp.lt.f32.partialorder %v1621, %v1151
        %vm1815 = vcmp.lt.f32.partialorder %v1621, %v1155
        %vm1816 = vcmp.lt.f32.partialorder %v1621, %v1159
        %vm1817 = vcmp.lt.f32.partialorder %v1621, %v1163
        %vm1818 = vcmp.lt.f32.partialorder %v1621, %v1167
        %vm1819 = vcmp.lt.f32.partialorder %v1621, %v1171
        %vm1820 = vcmp.lt.f32.partialorder %v1621, %v1175
        %vm1821 = vcmp.lt.f32.partialorder %v1621, %v1179
        %vm1822 = vcmp.lt.f32.partialorder %v1625, %v1186
        %vm1823 = vcmp.lt.f32.partialorder %v1625, %v1190
        %vm1824 = vcmp.lt.f32.partialorder %v1625, %v1194
        %vm1825 = vcmp.lt.f32.partialorder %v1625, %v1198
        %vm1826 = vcmp.lt.f32.partialorder %v1625, %v1202
        %vm1827 = vcmp.lt.f32.partialorder %v1625, %v1206
        %vm1828 = vcmp.lt.f32.partialorder %v1625, %v1210
        %vm1829 = vcmp.lt.f32.partialorder %v1625, %v1214
        %vm1830 = vcmp.lt.f32.partialorder %v1625, %v1218
        %vm1831 = vcmp.lt.f32.partialorder %v1625, %v1222
        %vm1832 = vcmp.lt.f32.partialorder %v1625, %v1226
        %vm1833 = vcmp.lt.f32.partialorder %v1625, %v1230
        %vm1834 = vcmp.lt.f32.partialorder %v1625, %v1234
        %vm1835 = vcmp.lt.f32.partialorder %v1625, %v1238
        %vm1836 = vcmp.lt.f32.partialorder %v1625, %v1242
        %vm1837 = vcmp.lt.f32.partialorder %v1625, %v1246
        %vm1838 = vcmp.lt.f32.partialorder %v1629, %v1253
        %vm1839 = vcmp.lt.f32.partialorder %v1629, %v1257
        %vm1840 = vcmp.lt.f32.partialorder %v1629, %v1261
        %vm1841 = vcmp.lt.f32.partialorder %v1629, %v1265
        %vm1842 = vcmp.lt.f32.partialorder %v1629, %v1269
        %vm1843 = vcmp.lt.f32.partialorder %v1629, %v1273
        %vm1844 = vcmp.lt.f32.partialorder %v1629, %v1277
        %vm1845 = vcmp.lt.f32.partialorder %v1629, %v1281
        %vm1846 = vcmp.lt.f32.partialorder %v1629, %v1285
        %vm1847 = vcmp.lt.f32.partialorder %v1629, %v1289
        %vm1848 = vcmp.lt.f32.partialorder %v1629, %v1293
        %vm1849 = vcmp.lt.f32.partialorder %v1629, %v1297
        %vm1850 = vcmp.lt.f32.partialorder %v1629, %v1301
        %vm1851 = vcmp.lt.f32.partialorder %v1629, %v1305
        %vm1852 = vcmp.lt.f32.partialorder %v1629, %v1309
        %vm1853 = vcmp.lt.f32.partialorder %v1629, %v1313
        %vm1854 = vcmp.lt.f32.partialorder %v1633, %v1320
        %vm1855 = vcmp.lt.f32.partialorder %v1633, %v1324
        %vm1856 = vcmp.lt.f32.partialorder %v1633, %v1328
        %vm1857 = vcmp.lt.f32.partialorder %v1633, %v1332
        %vm1858 = vcmp.lt.f32.partialorder %v1633, %v1336
        %vm1859 = vcmp.lt.f32.partialorder %v1633, %v1340
        %vm1860 = vcmp.lt.f32.partialorder %v1633, %v1344
        %vm1861 = vcmp.lt.f32.partialorder %v1633, %v1348
        %vm1862 = vcmp.lt.f32.partialorder %v1633, %v1352
        %vm1863 = vcmp.lt.f32.partialorder %v1633, %v1356
        %vm1864 = vcmp.lt.f32.partialorder %v1633, %v1360
        %vm1865 = vcmp.lt.f32.partialorder %v1633, %v1364
        %vm1866 = vcmp.lt.f32.partialorder %v1633, %v1368
        %vm1867 = vcmp.lt.f32.partialorder %v1633, %v1372
        %vm1868 = vcmp.lt.f32.partialorder %v1633, %v1376
        %vm1869 = vcmp.lt.f32.partialorder %v1633, %v1380
        %vm1870 = vcmp.lt.f32.partialorder %v1637, %v1387
        %vm1871 = vcmp.lt.f32.partialorder %v1637, %v1391
        %vm1872 = vcmp.lt.f32.partialorder %v1637, %v1395
        %vm1873 = vcmp.lt.f32.partialorder %v1637, %v1399
        %vm1874 = vcmp.lt.f32.partialorder %v1637, %v1403
        %vm1875 = vcmp.lt.f32.partialorder %v1637, %v1407
        %vm1876 = vcmp.lt.f32.partialorder %v1637, %v1411
        %vm1877 = vcmp.lt.f32.partialorder %v1637, %v1415
        %vm1878 = vcmp.lt.f32.partialorder %v1637, %v1419
        %vm1879 = vcmp.lt.f32.partialorder %v1637, %v1423
        %vm1880 = vcmp.lt.f32.partialorder %v1637, %v1427
        %vm1881 = vcmp.lt.f32.partialorder %v1637, %v1431
        %vm1882 = vcmp.lt.f32.partialorder %v1637, %v1435
        %vm1883 = vcmp.lt.f32.partialorder %v1637, %v1439
        %vm1884 = vcmp.lt.f32.partialorder %v1637, %v1443
        %vm1885 = vcmp.lt.f32.partialorder %v1637, %v1447
        %vm1886 = vcmp.lt.f32.partialorder %v1641, %v1454
        %vm1887 = vcmp.lt.f32.partialorder %v1641, %v1458
        %vm1888 = vcmp.lt.f32.partialorder %v1641, %v1462
        %vm1889 = vcmp.lt.f32.partialorder %v1641, %v1466
        %vm1890 = vcmp.lt.f32.partialorder %v1641, %v1470
        %vm1891 = vcmp.lt.f32.partialorder %v1641, %v1474
        %vm1892 = vcmp.lt.f32.partialorder %v1641, %v1478
        %vm1893 = vcmp.lt.f32.partialorder %v1641, %v1482
        %vm1894 = vcmp.lt.f32.partialorder %v1641, %v1486
        %vm1895 = vcmp.lt.f32.partialorder %v1641, %v1490
        %vm1896 = vcmp.lt.f32.partialorder %v1641, %v1494
        %vm1897 = vcmp.lt.f32.partialorder %v1641, %v1498
        %vm1898 = vcmp.lt.f32.partialorder %v1641, %v1502
        %vm1899 = vcmp.lt.f32.partialorder %v1641, %v1506
        %vm1900 = vcmp.lt.f32.partialorder %v1641, %v1510
        %vm1901 = vcmp.lt.f32.partialorder %v1641, %v1514
        %vm1902 = vcmp.lt.f32.partialorder %v1645, %v1521
        %vm1903 = vcmp.lt.f32.partialorder %v1645, %v1525
        %vm1904 = vcmp.lt.f32.partialorder %v1645, %v1529
        %vm1905 = vcmp.lt.f32.partialorder %v1645, %v1533
        %vm1906 = vcmp.lt.f32.partialorder %v1645, %v1537
        %vm1907 = vcmp.lt.f32.partialorder %v1645, %v1541
        %vm1908 = vcmp.lt.f32.partialorder %v1645, %v1545
        %vm1909 = vcmp.lt.f32.partialorder %v1645, %v1549
        %vm1910 = vcmp.lt.f32.partialorder %v1645, %v1553
        %vm1911 = vcmp.lt.f32.partialorder %v1645, %v1557
        %vm1912 = vcmp.lt.f32.partialorder %v1645, %v1561
        %vm1913 = vcmp.lt.f32.partialorder %v1645, %v1565
        %vm1914 = vcmp.lt.f32.partialorder %v1645, %v1569
        %vm1915 = vcmp.lt.f32.partialorder %v1645, %v1573
        %vm1916 = vcmp.lt.f32.partialorder %v1645, %v1577
        %vm1917 = vcmp.lt.f32.partialorder %v1645, %v1581
        %v1918 = vsel %vm1662, 1.0, 0.0
        %v1919 = vsel %vm1663, 1.0, 0.0
        %v1920 = vsel %vm1664, 1.0, 0.0
        %v1921 = vsel %vm1665, 1.0, 0.0
        %v1922 = vsel %vm1666, 1.0, 0.0
        %v1923 = vsel %vm1667, 1.0, 0.0
        %v1924 = vsel %vm1668, 1.0, 0.0
        %v1925 = vsel %vm1669, 1.0, 0.0
        %v1926 = vsel %vm1670, 1.0, 0.0
        %v1927 = vsel %vm1671, 1.0, 0.0
        %v1928 = vsel %vm1672, 1.0, 0.0
        %v1929 = vsel %vm1673, 1.0, 0.0
        %v1930 = vsel %vm1674, 1.0, 0.0
        %v1931 = vsel %vm1675, 1.0, 0.0
        %v1932 = vsel %vm1676, 1.0, 0.0
        %v1933 = vsel %vm1677, 1.0, 0.0
        %v1934 = vsel %vm1678, 1.0, 0.0
        %v1935 = vsel %vm1679, 1.0, 0.0
        %v1936 = vsel %vm1680, 1.0, 0.0
        %v1937 = vsel %vm1681, 1.0, 0.0
        %v1938 = vsel %vm1682, 1.0, 0.0
        %v1939 = vsel %vm1683, 1.0, 0.0
        %v1940 = vsel %vm1684, 1.0, 0.0
        %v1941 = vsel %vm1685, 1.0, 0.0
        %v1942 = vsel %vm1686, 1.0, 0.0
        %v1943 = vsel %vm1687, 1.0, 0.0
        %v1944 = vsel %vm1688, 1.0, 0.0
        %v1945 = vsel %vm1689, 1.0, 0.0
        %v1946 = vsel %vm1690, 1.0, 0.0
        %v1947 = vsel %vm1691, 1.0, 0.0
        %v1948 = vsel %vm1692, 1.0, 0.0
        %v1949 = vsel %vm1693, 1.0, 0.0
        %v1950 = vsel %vm1694, 1.0, 0.0
        %v1951 = vsel %vm1695, 1.0, 0.0
        %v1952 = vsel %vm1696, 1.0, 0.0
        %v1953 = vsel %vm1697, 1.0, 0.0
        %v1954 = vsel %vm1698, 1.0, 0.0
        %v1955 = vsel %vm1699, 1.0, 0.0
        %v1956 = vsel %vm1700, 1.0, 0.0
        %v1957 = vsel %vm1701, 1.0, 0.0
        %v1958 = vsel %vm1702, 1.0, 0.0
        %v1959 = vsel %vm1703, 1.0, 0.0
        %v1960 = vsel %vm1704, 1.0, 0.0
        %v1961 = vsel %vm1705, 1.0, 0.0
        %v1962 = vsel %vm1706, 1.0, 0.0
        %v1963 = vsel %vm1707, 1.0, 0.0
        %v1964 = vsel %vm1708, 1.0, 0.0
        %v1965 = vsel %vm1709, 1.0, 0.0
        %v1966 = vsel %vm1710, 1.0, 0.0
        %v1967 = vsel %vm1711, 1.0, 0.0
        %v1968 = vsel %vm1712, 1.0, 0.0
        %v1969 = vsel %vm1713, 1.0, 0.0
        %v1970 = vsel %vm1714, 1.0, 0.0
        %v1971 = vsel %vm1715, 1.0, 0.0
        %v1972 = vsel %vm1716, 1.0, 0.0
        %v1973 = vsel %vm1717, 1.0, 0.0
        %v1974 = vsel %vm1718, 1.0, 0.0
        %v1975 = vsel %vm1719, 1.0, 0.0
        %v1976 = vsel %vm1720, 1.0, 0.0
        %v1977 = vsel %vm1721, 1.0, 0.0
        %v1978 = vsel %vm1722, 1.0, 0.0
        %v1979 = vsel %vm1723, 1.0, 0.0
        %v1980 = vsel %vm1724, 1.0, 0.0
        %v1981 = vsel %vm1725, 1.0, 0.0
        %v1982 = vsel %vm1726, 1.0, 0.0
        %v1983 = vsel %vm1727, 1.0, 0.0
        %v1984 = vsel %vm1728, 1.0, 0.0
        %v1985 = vsel %vm1729, 1.0, 0.0
        %v1986 = vsel %vm1730, 1.0, 0.0
        %v1987 = vsel %vm1731, 1.0, 0.0
        %v1988 = vsel %vm1732, 1.0, 0.0
        %v1989 = vsel %vm1733, 1.0, 0.0
        %v1990 = vsel %vm1734, 1.0, 0.0
        %v1991 = vsel %vm1735, 1.0, 0.0
        %v1992 = vsel %vm1736, 1.0, 0.0
        %v1993 = vsel %vm1737, 1.0, 0.0
        %v1994 = vsel %vm1738, 1.0, 0.0
        %v1995 = vsel %vm1739, 1.0, 0.0
        %v1996 = vsel %vm1740, 1.0, 0.0
        %v1997 = vsel %vm1741, 1.0, 0.0
        %v1998 = vsel %vm1742, 1.0, 0.0
        %v1999 = vsel %vm1743, 1.0, 0.0
        %v2000 = vsel %vm1744, 1.0, 0.0
        %v2001 = vsel %vm1745, 1.0, 0.0
        %v2002 = vsel %vm1746, 1.0, 0.0
        %v2003 = vsel %vm1747, 1.0, 0.0
        %v2004 = vsel %vm1748, 1.0, 0.0
        %v2005 = vsel %vm1749, 1.0, 0.0
        %v2006 = vsel %vm1750, 1.0, 0.0
        %v2007 = vsel %vm1751, 1.0, 0.0
        %v2008 = vsel %vm1752, 1.0, 0.0
        %v2009 = vsel %vm1753, 1.0, 0.0
        %v2010 = vsel %vm1754, 1.0, 0.0
        %v2011 = vsel %vm1755, 1.0, 0.0
        %v2012 = vsel %vm1756, 1.0, 0.0
        %v2013 = vsel %vm1757, 1.0, 0.0
        %v2014 = vsel %vm1758, 1.0, 0.0
        %v2015 = vsel %vm1759, 1.0, 0.0
        %v2016 = vsel %vm1760, 1.0, 0.0
        %v2017 = vsel %vm1761, 1.0, 0.0
        %v2018 = vsel %vm1762, 1.0, 0.0
        %v2019 = vsel %vm1763, 1.0, 0.0
        %v2020 = vsel %vm1764, 1.0, 0.0
        %v2021 = vsel %vm1765, 1.0, 0.0
        %v2022 = vsel %vm1766, 1.0, 0.0
        %v2023 = vsel %vm1767, 1.0, 0.0
        %v2024 = vsel %vm1768, 1.0, 0.0
        %v2025 = vsel %vm1769, 1.0, 0.0
        %v2026 = vsel %vm1770, 1.0, 0.0
        %v2027 = vsel %vm1771, 1.0, 0.0
        %v2028 = vsel %vm1772, 1.0, 0.0
        %v2029 = vsel %vm1773, 1.0, 0.0
        %v2030 = vsel %vm1774, 1.0, 0.0
        %v2031 = vsel %vm1775, 1.0, 0.0
        %v2032 = vsel %vm1776, 1.0, 0.0
        %v2033 = vsel %vm1777, 1.0, 0.0
        %v2034 = vsel %vm1778, 1.0, 0.0
        %v2035 = vsel %vm1779, 1.0, 0.0
        %v2036 = vsel %vm1780, 1.0, 0.0
        %v2037 = vsel %vm1781, 1.0, 0.0
        %v2038 = vsel %vm1782, 1.0, 0.0
        %v2039 = vsel %vm1783, 1.0, 0.0
        %v2040 = vsel %vm1784, 1.0, 0.0
        %v2041 = vsel %vm1785, 1.0, 0.0
        %v2042 = vsel %vm1786, 1.0, 0.0
        %v2043 = vsel %vm1787, 1.0, 0.0
        %v2044 = vsel %vm1788, 1.0, 0.0
        %v2045 = vsel %vm1789, 1.0, 0.0
        %v2046 = vsel %vm1790, 1.0, 0.0
        %v2047 = vsel %vm1791, 1.0, 0.0
        %v2048 = vsel %vm1792, 1.0, 0.0
        %v2049 = vsel %vm1793, 1.0, 0.0
        %v2050 = vsel %vm1794, 1.0, 0.0
        %v2051 = vsel %vm1795, 1.0, 0.0
        %v2052 = vsel %vm1796, 1.0, 0.0
        %v2053 = vsel %vm1797, 1.0, 0.0
        %v2054 = vsel %vm1798, 1.0, 0.0
        %v2055 = vsel %vm1799, 1.0, 0.0
        %v2056 = vsel %vm1800, 1.0, 0.0
        %v2057 = vsel %vm1801, 1.0, 0.0
        %v2058 = vsel %vm1802, 1.0, 0.0
        %v2059 = vsel %vm1803, 1.0, 0.0
        %v2060 = vsel %vm1804, 1.0, 0.0
        %v2061 = vsel %vm1805, 1.0, 0.0
        %v2062 = vsel %vm1806, 1.0, 0.0
        %v2063 = vsel %vm1807, 1.0, 0.0
        %v2064 = vsel %vm1808, 1.0, 0.0
        %v2065 = vsel %vm1809, 1.0, 0.0
        %v2066 = vsel %vm1810, 1.0, 0.0
        %v2067 = vsel %vm1811, 1.0, 0.0
        %v2068 = vsel %vm1812, 1.0, 0.0
        %v2069 = vsel %vm1813, 1.0, 0.0
        %v2070 = vsel %vm1814, 1.0, 0.0
        %v2071 = vsel %vm1815, 1.0, 0.0
        %v2072 = vsel %vm1816, 1.0, 0.0
        %v2073 = vsel %vm1817, 1.0, 0.0
        %v2074 = vsel %vm1818, 1.0, 0.0
        %v2075 = vsel %vm1819, 1.0, 0.0
        %v2076 = vsel %vm1820, 1.0, 0.0
        %v2077 = vsel %vm1821, 1.0, 0.0
        %v2078 = vsel %vm1822, 1.0, 0.0
        %v2079 = vsel %vm1823, 1.0, 0.0
        %v2080 = vsel %vm1824, 1.0, 0.0
        %v2081 = vsel %vm1825, 1.0, 0.0
        %v2082 = vsel %vm1826, 1.0, 0.0
        %v2083 = vsel %vm1827, 1.0, 0.0
        %v2084 = vsel %vm1828, 1.0, 0.0
        %v2085 = vsel %vm1829, 1.0, 0.0
        %v2086 = vsel %vm1830, 1.0, 0.0
        %v2087 = vsel %vm1831, 1.0, 0.0
        %v2088 = vsel %vm1832, 1.0, 0.0
        %v2089 = vsel %vm1833, 1.0, 0.0
        %v2090 = vsel %vm1834, 1.0, 0.0
        %v2091 = vsel %vm1835, 1.0, 0.0
        %v2092 = vsel %vm1836, 1.0, 0.0
        %v2093 = vsel %vm1837, 1.0, 0.0
        %v2094 = vsel %vm1838, 1.0, 0.0
        %v2095 = vsel %vm1839, 1.0, 0.0
        %v2096 = vsel %vm1840, 1.0, 0.0
        %v2097 = vsel %vm1841, 1.0, 0.0
        %v2098 = vsel %vm1842, 1.0, 0.0
        %v2099 = vsel %vm1843, 1.0, 0.0
        %v2100 = vsel %vm1844, 1.0, 0.0
        %v2101 = vsel %vm1845, 1.0, 0.0
        %v2102 = vsel %vm1846, 1.0, 0.0
        %v2103 = vsel %vm1847, 1.0, 0.0
        %v2104 = vsel %vm1848, 1.0, 0.0
        %v2105 = vsel %vm1849, 1.0, 0.0
        %v2106 = vsel %vm1850, 1.0, 0.0
        %v2107 = vsel %vm1851, 1.0, 0.0
        %v2108 = vsel %vm1852, 1.0, 0.0
        %v2109 = vsel %vm1853, 1.0, 0.0
        %v2110 = vsel %vm1854, 1.0, 0.0
        %v2111 = vsel %vm1855, 1.0, 0.0
        %v2112 = vsel %vm1856, 1.0, 0.0
        %v2113 = vsel %vm1857, 1.0, 0.0
        %v2114 = vsel %vm1858, 1.0, 0.0
        %v2115 = vsel %vm1859, 1.0, 0.0
        %v2116 = vsel %vm1860, 1.0, 0.0
        %v2117 = vsel %vm1861, 1.0, 0.0
        %v2118 = vsel %vm1862, 1.0, 0.0
        %v2119 = vsel %vm1863, 1.0, 0.0
        %v2120 = vsel %vm1864, 1.0, 0.0
        %v2121 = vsel %vm1865, 1.0, 0.0
        %v2122 = vsel %vm1866, 1.0, 0.0
        %v2123 = vsel %vm1867, 1.0, 0.0
        %v2124 = vsel %vm1868, 1.0, 0.0
        %v2125 = vsel %vm1869, 1.0, 0.0
        %v2126 = vsel %vm1870, 1.0, 0.0
        %v2127 = vsel %vm1871, 1.0, 0.0
        %v2128 = vsel %vm1872, 1.0, 0.0
        %v2129 = vsel %vm1873, 1.0, 0.0
        %v2130 = vsel %vm1874, 1.0, 0.0
        %v2131 = vsel %vm1875, 1.0, 0.0
        %v2132 = vsel %vm1876, 1.0, 0.0
        %v2133 = vsel %vm1877, 1.0, 0.0
        %v2134 = vsel %vm1878, 1.0, 0.0
        %v2135 = vsel %vm1879, 1.0, 0.0
        %v2136 = vsel %vm1880, 1.0, 0.0
        %v2137 = vsel %vm1881, 1.0, 0.0
        %v2138 = vsel %vm1882, 1.0, 0.0
        %v2139 = vsel %vm1883, 1.0, 0.0
        %v2140 = vsel %vm1884, 1.0, 0.0
        %v2141 = vsel %vm1885, 1.0, 0.0
        %v2142 = vsel %vm1886, 1.0, 0.0
        %v2143 = vsel %vm1887, 1.0, 0.0
        %v2144 = vsel %vm1888, 1.0, 0.0
        %v2145 = vsel %vm1889, 1.0, 0.0
        %v2146 = vsel %vm1890, 1.0, 0.0
        %v2147 = vsel %vm1891, 1.0, 0.0
        %v2148 = vsel %vm1892, 1.0, 0.0
        %v2149 = vsel %vm1893, 1.0, 0.0
        %v2150 = vsel %vm1894, 1.0, 0.0
        %v2151 = vsel %vm1895, 1.0, 0.0
        %v2152 = vsel %vm1896, 1.0, 0.0
        %v2153 = vsel %vm1897, 1.0, 0.0
        %v2154 = vsel %vm1898, 1.0, 0.0
        %v2155 = vsel %vm1899, 1.0, 0.0
        %v2156 = vsel %vm1900, 1.0, 0.0
        %v2157 = vsel %vm1901, 1.0, 0.0
        %v2158 = vsel %vm1902, 1.0, 0.0
        %v2159 = vsel %vm1903, 1.0, 0.0
        %v2160 = vsel %vm1904, 1.0, 0.0
        %v2161 = vsel %vm1905, 1.0, 0.0
        %v2162 = vsel %vm1906, 1.0, 0.0
        %v2163 = vsel %vm1907, 1.0, 0.0
        %v2164 = vsel %vm1908, 1.0, 0.0
        %v2165 = vsel %vm1909, 1.0, 0.0
        %v2166 = vsel %vm1910, 1.0, 0.0
        %v2167 = vsel %vm1911, 1.0, 0.0
        %v2168 = vsel %vm1912, 1.0, 0.0
        %v2169 = vsel %vm1913, 1.0, 0.0
        %v2170 = vsel %vm1914, 1.0, 0.0
        %v2171 = vsel %vm1915, 1.0, 0.0
        %v2172 = vsel %vm1916, 1.0, 0.0
        %v2173 = vsel %vm1917, 1.0, 0.0
        %2174 = vadd.xlane.f32.xlu0 %v1918
        %v2175 = vpop.xlane.xlu0 %2174
        %2176 = vadd.xlane.f32.xlu0 %v1919
        %v2177 = vpop.xlane.xlu0 %2176
        %2178 = vadd.xlane.f32.xlu0 %v1920
        %v2179 = vpop.xlane.xlu0 %2178
        %2180 = vadd.xlane.f32.xlu0 %v1921
        %v2181 = vpop.xlane.xlu0 %2180
        %2182 = vadd.xlane.f32.xlu0 %v1922
        %v2183 = vpop.xlane.xlu0 %2182
        %2184 = vadd.xlane.f32.xlu0 %v1923
        %v2185 = vpop.xlane.xlu0 %2184
        %2186 = vadd.xlane.f32.xlu0 %v1924
        %v2187 = vpop.xlane.xlu0 %2186
        %2188 = vadd.xlane.f32.xlu0 %v1925
        %v2189 = vpop.xlane.xlu0 %2188
        %2190 = vadd.xlane.f32.xlu0 %v1926
        %v2191 = vpop.xlane.xlu0 %2190
        %2192 = vadd.xlane.f32.xlu0 %v1927
        %v2193 = vpop.xlane.xlu0 %2192
        %2194 = vadd.xlane.f32.xlu0 %v1928
        %v2195 = vpop.xlane.xlu0 %2194
        %2196 = vadd.xlane.f32.xlu0 %v1929
        %v2197 = vpop.xlane.xlu0 %2196
        %2198 = vadd.xlane.f32.xlu0 %v1930
        %v2199 = vpop.xlane.xlu0 %2198
        %2200 = vadd.xlane.f32.xlu0 %v1931
        %v2201 = vpop.xlane.xlu0 %2200
        %2202 = vadd.xlane.f32.xlu0 %v1932
        %v2203 = vpop.xlane.xlu0 %2202
        %2204 = vadd.xlane.f32.xlu0 %v1933
        %v2205 = vpop.xlane.xlu0 %2204
        %2206 = vadd.xlane.f32.xlu0 %v1934
        %v2207 = vpop.xlane.xlu0 %2206
        %2208 = vadd.xlane.f32.xlu0 %v1935
        %v2209 = vpop.xlane.xlu0 %2208
        %2210 = vadd.xlane.f32.xlu0 %v1936
        %v2211 = vpop.xlane.xlu0 %2210
        %2212 = vadd.xlane.f32.xlu0 %v1937
        %v2213 = vpop.xlane.xlu0 %2212
        %2214 = vadd.xlane.f32.xlu0 %v1938
        %v2215 = vpop.xlane.xlu0 %2214
        %2216 = vadd.xlane.f32.xlu0 %v1939
        %v2217 = vpop.xlane.xlu0 %2216
        %2218 = vadd.xlane.f32.xlu0 %v1940
        %v2219 = vpop.xlane.xlu0 %2218
        %2220 = vadd.xlane.f32.xlu0 %v1941
        %v2221 = vpop.xlane.xlu0 %2220
        %2222 = vadd.xlane.f32.xlu0 %v1942
        %v2223 = vpop.xlane.xlu0 %2222
        %2224 = vadd.xlane.f32.xlu0 %v1943
        %v2225 = vpop.xlane.xlu0 %2224
        %2226 = vadd.xlane.f32.xlu0 %v1944
        %v2227 = vpop.xlane.xlu0 %2226
        %2228 = vadd.xlane.f32.xlu0 %v1945
        %v2229 = vpop.xlane.xlu0 %2228
        %2230 = vadd.xlane.f32.xlu0 %v1946
        %v2231 = vpop.xlane.xlu0 %2230
        %2232 = vadd.xlane.f32.xlu0 %v1947
        %v2233 = vpop.xlane.xlu0 %2232
        %2234 = vadd.xlane.f32.xlu0 %v1948
        %v2235 = vpop.xlane.xlu0 %2234
        %2236 = vadd.xlane.f32.xlu0 %v1949
        %v2237 = vpop.xlane.xlu0 %2236
        %2238 = vadd.xlane.f32.xlu0 %v1950
        %v2239 = vpop.xlane.xlu0 %2238
        %2240 = vadd.xlane.f32.xlu0 %v1951
        %v2241 = vpop.xlane.xlu0 %2240
        %2242 = vadd.xlane.f32.xlu0 %v1952
        %v2243 = vpop.xlane.xlu0 %2242
        %2244 = vadd.xlane.f32.xlu0 %v1953
        %v2245 = vpop.xlane.xlu0 %2244
        %2246 = vadd.xlane.f32.xlu0 %v1954
        %v2247 = vpop.xlane.xlu0 %2246
        %2248 = vadd.xlane.f32.xlu0 %v1955
        %v2249 = vpop.xlane.xlu0 %2248
        %2250 = vadd.xlane.f32.xlu0 %v1956
        %v2251 = vpop.xlane.xlu0 %2250
        %2252 = vadd.xlane.f32.xlu0 %v1957
        %v2253 = vpop.xlane.xlu0 %2252
        %2254 = vadd.xlane.f32.xlu0 %v1958
        %v2255 = vpop.xlane.xlu0 %2254
        %2256 = vadd.xlane.f32.xlu0 %v1959
        %v2257 = vpop.xlane.xlu0 %2256
        %2258 = vadd.xlane.f32.xlu0 %v1960
        %v2259 = vpop.xlane.xlu0 %2258
        %2260 = vadd.xlane.f32.xlu0 %v1961
        %v2261 = vpop.xlane.xlu0 %2260
        %2262 = vadd.xlane.f32.xlu0 %v1962
        %v2263 = vpop.xlane.xlu0 %2262
        %2264 = vadd.xlane.f32.xlu0 %v1963
        %v2265 = vpop.xlane.xlu0 %2264
        %2266 = vadd.xlane.f32.xlu0 %v1964
        %v2267 = vpop.xlane.xlu0 %2266
        %2268 = vadd.xlane.f32.xlu0 %v1965
        %v2269 = vpop.xlane.xlu0 %2268
        %2270 = vadd.xlane.f32.xlu0 %v1966
        %v2271 = vpop.xlane.xlu0 %2270
        %2272 = vadd.xlane.f32.xlu0 %v1967
        %v2273 = vpop.xlane.xlu0 %2272
        %2274 = vadd.xlane.f32.xlu0 %v1968
        %v2275 = vpop.xlane.xlu0 %2274
        %2276 = vadd.xlane.f32.xlu0 %v1969
        %v2277 = vpop.xlane.xlu0 %2276
        %2278 = vadd.xlane.f32.xlu0 %v1970
        %v2279 = vpop.xlane.xlu0 %2278
        %2280 = vadd.xlane.f32.xlu0 %v1971
        %v2281 = vpop.xlane.xlu0 %2280
        %2282 = vadd.xlane.f32.xlu0 %v1972
        %v2283 = vpop.xlane.xlu0 %2282
        %2284 = vadd.xlane.f32.xlu0 %v1973
        %v2285 = vpop.xlane.xlu0 %2284
        %2286 = vadd.xlane.f32.xlu0 %v1974
        %v2287 = vpop.xlane.xlu0 %2286
        %2288 = vadd.xlane.f32.xlu0 %v1975
        %v2289 = vpop.xlane.xlu0 %2288
        %2290 = vadd.xlane.f32.xlu0 %v1976
        %v2291 = vpop.xlane.xlu0 %2290
        %2292 = vadd.xlane.f32.xlu0 %v1977
        %v2293 = vpop.xlane.xlu0 %2292
        %2294 = vadd.xlane.f32.xlu0 %v1978
        %v2295 = vpop.xlane.xlu0 %2294
        %2296 = vadd.xlane.f32.xlu0 %v1979
        %v2297 = vpop.xlane.xlu0 %2296
        %2298 = vadd.xlane.f32.xlu0 %v1980
        %v2299 = vpop.xlane.xlu0 %2298
        %2300 = vadd.xlane.f32.xlu0 %v1981
        %v2301 = vpop.xlane.xlu0 %2300
        %2302 = vadd.xlane.f32.xlu0 %v1982
        %v2303 = vpop.xlane.xlu0 %2302
        %2304 = vadd.xlane.f32.xlu0 %v1983
        %v2305 = vpop.xlane.xlu0 %2304
        %2306 = vadd.xlane.f32.xlu0 %v1984
        %v2307 = vpop.xlane.xlu0 %2306
        %2308 = vadd.xlane.f32.xlu0 %v1985
        %v2309 = vpop.xlane.xlu0 %2308
        %2310 = vadd.xlane.f32.xlu0 %v1986
        %v2311 = vpop.xlane.xlu0 %2310
        %2312 = vadd.xlane.f32.xlu0 %v1987
        %v2313 = vpop.xlane.xlu0 %2312
        %2314 = vadd.xlane.f32.xlu0 %v1988
        %v2315 = vpop.xlane.xlu0 %2314
        %2316 = vadd.xlane.f32.xlu0 %v1989
        %v2317 = vpop.xlane.xlu0 %2316
        %2318 = vadd.xlane.f32.xlu0 %v1990
        %v2319 = vpop.xlane.xlu0 %2318
        %2320 = vadd.xlane.f32.xlu0 %v1991
        %v2321 = vpop.xlane.xlu0 %2320
        %2322 = vadd.xlane.f32.xlu0 %v1992
        %v2323 = vpop.xlane.xlu0 %2322
        %2324 = vadd.xlane.f32.xlu0 %v1993
        %v2325 = vpop.xlane.xlu0 %2324
        %2326 = vadd.xlane.f32.xlu0 %v1994
        %v2327 = vpop.xlane.xlu0 %2326
        %2328 = vadd.xlane.f32.xlu0 %v1995
        %v2329 = vpop.xlane.xlu0 %2328
        %2330 = vadd.xlane.f32.xlu0 %v1996
        %v2331 = vpop.xlane.xlu0 %2330
        %2332 = vadd.xlane.f32.xlu0 %v1997
        %v2333 = vpop.xlane.xlu0 %2332
        %2334 = vadd.xlane.f32.xlu0 %v1998
        %v2335 = vpop.xlane.xlu0 %2334
        %2336 = vadd.xlane.f32.xlu0 %v1999
        %v2337 = vpop.xlane.xlu0 %2336
        %2338 = vadd.xlane.f32.xlu0 %v2000
        %v2339 = vpop.xlane.xlu0 %2338
        %2340 = vadd.xlane.f32.xlu0 %v2001
        %v2341 = vpop.xlane.xlu0 %2340
        %2342 = vadd.xlane.f32.xlu0 %v2002
        %v2343 = vpop.xlane.xlu0 %2342
        %2344 = vadd.xlane.f32.xlu0 %v2003
        %v2345 = vpop.xlane.xlu0 %2344
        %2346 = vadd.xlane.f32.xlu0 %v2004
        %v2347 = vpop.xlane.xlu0 %2346
        %2348 = vadd.xlane.f32.xlu0 %v2005
        %v2349 = vpop.xlane.xlu0 %2348
        %2350 = vadd.xlane.f32.xlu0 %v2006
        %v2351 = vpop.xlane.xlu0 %2350
        %2352 = vadd.xlane.f32.xlu0 %v2007
        %v2353 = vpop.xlane.xlu0 %2352
        %2354 = vadd.xlane.f32.xlu0 %v2008
        %v2355 = vpop.xlane.xlu0 %2354
        %2356 = vadd.xlane.f32.xlu0 %v2009
        %v2357 = vpop.xlane.xlu0 %2356
        %2358 = vadd.xlane.f32.xlu0 %v2010
        %v2359 = vpop.xlane.xlu0 %2358
        %2360 = vadd.xlane.f32.xlu0 %v2011
        %v2361 = vpop.xlane.xlu0 %2360
        %2362 = vadd.xlane.f32.xlu0 %v2012
        %v2363 = vpop.xlane.xlu0 %2362
        %2364 = vadd.xlane.f32.xlu0 %v2013
        %v2365 = vpop.xlane.xlu0 %2364
        %2366 = vadd.xlane.f32.xlu0 %v2014
        %v2367 = vpop.xlane.xlu0 %2366
        %2368 = vadd.xlane.f32.xlu0 %v2015
        %v2369 = vpop.xlane.xlu0 %2368
        %2370 = vadd.xlane.f32.xlu0 %v2016
        %v2371 = vpop.xlane.xlu0 %2370
        %2372 = vadd.xlane.f32.xlu0 %v2017
        %v2373 = vpop.xlane.xlu0 %2372
        %2374 = vadd.xlane.f32.xlu0 %v2018
        %v2375 = vpop.xlane.xlu0 %2374
        %2376 = vadd.xlane.f32.xlu0 %v2019
        %v2377 = vpop.xlane.xlu0 %2376
        %2378 = vadd.xlane.f32.xlu0 %v2020
        %v2379 = vpop.xlane.xlu0 %2378
        %2380 = vadd.xlane.f32.xlu0 %v2021
        %v2381 = vpop.xlane.xlu0 %2380
        %2382 = vadd.xlane.f32.xlu0 %v2022
        %v2383 = vpop.xlane.xlu0 %2382
        %2384 = vadd.xlane.f32.xlu0 %v2023
        %v2385 = vpop.xlane.xlu0 %2384
        %2386 = vadd.xlane.f32.xlu0 %v2024
        %v2387 = vpop.xlane.xlu0 %2386
        %2388 = vadd.xlane.f32.xlu0 %v2025
        %v2389 = vpop.xlane.xlu0 %2388
        %2390 = vadd.xlane.f32.xlu0 %v2026
        %v2391 = vpop.xlane.xlu0 %2390
        %2392 = vadd.xlane.f32.xlu0 %v2027
        %v2393 = vpop.xlane.xlu0 %2392
        %2394 = vadd.xlane.f32.xlu0 %v2028
        %v2395 = vpop.xlane.xlu0 %2394
        %2396 = vadd.xlane.f32.xlu0 %v2029
        %v2397 = vpop.xlane.xlu0 %2396
        %2398 = vadd.xlane.f32.xlu0 %v2030
        %v2399 = vpop.xlane.xlu0 %2398
        %2400 = vadd.xlane.f32.xlu0 %v2031
        %v2401 = vpop.xlane.xlu0 %2400
        %2402 = vadd.xlane.f32.xlu0 %v2032
        %v2403 = vpop.xlane.xlu0 %2402
        %2404 = vadd.xlane.f32.xlu0 %v2033
        %v2405 = vpop.xlane.xlu0 %2404
        %2406 = vadd.xlane.f32.xlu0 %v2034
        %v2407 = vpop.xlane.xlu0 %2406
        %2408 = vadd.xlane.f32.xlu0 %v2035
        %v2409 = vpop.xlane.xlu0 %2408
        %2410 = vadd.xlane.f32.xlu0 %v2036
        %v2411 = vpop.xlane.xlu0 %2410
        %2412 = vadd.xlane.f32.xlu0 %v2037
        %v2413 = vpop.xlane.xlu0 %2412
        %2414 = vadd.xlane.f32.xlu0 %v2038
        %v2415 = vpop.xlane.xlu0 %2414
        %2416 = vadd.xlane.f32.xlu0 %v2039
        %v2417 = vpop.xlane.xlu0 %2416
        %2418 = vadd.xlane.f32.xlu0 %v2040
        %v2419 = vpop.xlane.xlu0 %2418
        %2420 = vadd.xlane.f32.xlu0 %v2041
        %v2421 = vpop.xlane.xlu0 %2420
        %2422 = vadd.xlane.f32.xlu0 %v2042
        %v2423 = vpop.xlane.xlu0 %2422
        %2424 = vadd.xlane.f32.xlu0 %v2043
        %v2425 = vpop.xlane.xlu0 %2424
        %2426 = vadd.xlane.f32.xlu0 %v2044
        %v2427 = vpop.xlane.xlu0 %2426
        %2428 = vadd.xlane.f32.xlu0 %v2045
        %v2429 = vpop.xlane.xlu0 %2428
        %2430 = vadd.xlane.f32.xlu0 %v2046
        %v2431 = vpop.xlane.xlu0 %2430
        %2432 = vadd.xlane.f32.xlu0 %v2047
        %v2433 = vpop.xlane.xlu0 %2432
        %2434 = vadd.xlane.f32.xlu0 %v2048
        %v2435 = vpop.xlane.xlu0 %2434
        %2436 = vadd.xlane.f32.xlu0 %v2049
        %v2437 = vpop.xlane.xlu0 %2436
        %2438 = vadd.xlane.f32.xlu0 %v2050
        %v2439 = vpop.xlane.xlu0 %2438
        %2440 = vadd.xlane.f32.xlu0 %v2051
        %v2441 = vpop.xlane.xlu0 %2440
        %2442 = vadd.xlane.f32.xlu0 %v2052
        %v2443 = vpop.xlane.xlu0 %2442
        %2444 = vadd.xlane.f32.xlu0 %v2053
        %v2445 = vpop.xlane.xlu0 %2444
        %2446 = vadd.xlane.f32.xlu0 %v2054
        %v2447 = vpop.xlane.xlu0 %2446
        %2448 = vadd.xlane.f32.xlu0 %v2055
        %v2449 = vpop.xlane.xlu0 %2448
        %2450 = vadd.xlane.f32.xlu0 %v2056
        %v2451 = vpop.xlane.xlu0 %2450
        %2452 = vadd.xlane.f32.xlu0 %v2057
        %v2453 = vpop.xlane.xlu0 %2452
        %2454 = vadd.xlane.f32.xlu0 %v2058
        %v2455 = vpop.xlane.xlu0 %2454
        %2456 = vadd.xlane.f32.xlu0 %v2059
        %v2457 = vpop.xlane.xlu0 %2456
        %2458 = vadd.xlane.f32.xlu0 %v2060
        %v2459 = vpop.xlane.xlu0 %2458
        %2460 = vadd.xlane.f32.xlu0 %v2061
        %v2461 = vpop.xlane.xlu0 %2460
        %2462 = vadd.xlane.f32.xlu0 %v2062
        %v2463 = vpop.xlane.xlu0 %2462
        %2464 = vadd.xlane.f32.xlu0 %v2063
        %v2465 = vpop.xlane.xlu0 %2464
        %2466 = vadd.xlane.f32.xlu0 %v2064
        %v2467 = vpop.xlane.xlu0 %2466
        %2468 = vadd.xlane.f32.xlu0 %v2065
        %v2469 = vpop.xlane.xlu0 %2468
        %2470 = vadd.xlane.f32.xlu0 %v2066
        %v2471 = vpop.xlane.xlu0 %2470
        %2472 = vadd.xlane.f32.xlu0 %v2067
        %v2473 = vpop.xlane.xlu0 %2472
        %2474 = vadd.xlane.f32.xlu0 %v2068
        %v2475 = vpop.xlane.xlu0 %2474
        %2476 = vadd.xlane.f32.xlu0 %v2069
        %v2477 = vpop.xlane.xlu0 %2476
        %2478 = vadd.xlane.f32.xlu0 %v2070
        %v2479 = vpop.xlane.xlu0 %2478
        %2480 = vadd.xlane.f32.xlu0 %v2071
        %v2481 = vpop.xlane.xlu0 %2480
        %2482 = vadd.xlane.f32.xlu0 %v2072
        %v2483 = vpop.xlane.xlu0 %2482
        %2484 = vadd.xlane.f32.xlu0 %v2073
        %v2485 = vpop.xlane.xlu0 %2484
        %2486 = vadd.xlane.f32.xlu0 %v2074
        %v2487 = vpop.xlane.xlu0 %2486
        %2488 = vadd.xlane.f32.xlu0 %v2075
        %v2489 = vpop.xlane.xlu0 %2488
        %2490 = vadd.xlane.f32.xlu0 %v2076
        %v2491 = vpop.xlane.xlu0 %2490
        %2492 = vadd.xlane.f32.xlu0 %v2077
        %v2493 = vpop.xlane.xlu0 %2492
        %2494 = vadd.xlane.f32.xlu0 %v2078
        %v2495 = vpop.xlane.xlu0 %2494
        %2496 = vadd.xlane.f32.xlu0 %v2079
        %v2497 = vpop.xlane.xlu0 %2496
        %2498 = vadd.xlane.f32.xlu0 %v2080
        %v2499 = vpop.xlane.xlu0 %2498
        %2500 = vadd.xlane.f32.xlu0 %v2081
        %v2501 = vpop.xlane.xlu0 %2500
        %2502 = vadd.xlane.f32.xlu0 %v2082
        %v2503 = vpop.xlane.xlu0 %2502
        %2504 = vadd.xlane.f32.xlu0 %v2083
        %v2505 = vpop.xlane.xlu0 %2504
        %2506 = vadd.xlane.f32.xlu0 %v2084
        %v2507 = vpop.xlane.xlu0 %2506
        %2508 = vadd.xlane.f32.xlu0 %v2085
        %v2509 = vpop.xlane.xlu0 %2508
        %2510 = vadd.xlane.f32.xlu0 %v2086
        %v2511 = vpop.xlane.xlu0 %2510
        %2512 = vadd.xlane.f32.xlu0 %v2087
        %v2513 = vpop.xlane.xlu0 %2512
        %2514 = vadd.xlane.f32.xlu0 %v2088
        %v2515 = vpop.xlane.xlu0 %2514
        %2516 = vadd.xlane.f32.xlu0 %v2089
        %v2517 = vpop.xlane.xlu0 %2516
        %2518 = vadd.xlane.f32.xlu0 %v2090
        %v2519 = vpop.xlane.xlu0 %2518
        %2520 = vadd.xlane.f32.xlu0 %v2091
        %v2521 = vpop.xlane.xlu0 %2520
        %2522 = vadd.xlane.f32.xlu0 %v2092
        %v2523 = vpop.xlane.xlu0 %2522
        %2524 = vadd.xlane.f32.xlu0 %v2093
        %v2525 = vpop.xlane.xlu0 %2524
        %2526 = vadd.xlane.f32.xlu0 %v2094
        %v2527 = vpop.xlane.xlu0 %2526
        %2528 = vadd.xlane.f32.xlu0 %v2095
        %v2529 = vpop.xlane.xlu0 %2528
        %2530 = vadd.xlane.f32.xlu0 %v2096
        %v2531 = vpop.xlane.xlu0 %2530
        %2532 = vadd.xlane.f32.xlu0 %v2097
        %v2533 = vpop.xlane.xlu0 %2532
        %2534 = vadd.xlane.f32.xlu0 %v2098
        %v2535 = vpop.xlane.xlu0 %2534
        %2536 = vadd.xlane.f32.xlu0 %v2099
        %v2537 = vpop.xlane.xlu0 %2536
        %2538 = vadd.xlane.f32.xlu0 %v2100
        %v2539 = vpop.xlane.xlu0 %2538
        %2540 = vadd.xlane.f32.xlu0 %v2101
        %v2541 = vpop.xlane.xlu0 %2540
        %2542 = vadd.xlane.f32.xlu0 %v2102
        %v2543 = vpop.xlane.xlu0 %2542
        %2544 = vadd.xlane.f32.xlu0 %v2103
        %v2545 = vpop.xlane.xlu0 %2544
        %2546 = vadd.xlane.f32.xlu0 %v2104
        %v2547 = vpop.xlane.xlu0 %2546
        %2548 = vadd.xlane.f32.xlu0 %v2105
        %v2549 = vpop.xlane.xlu0 %2548
        %2550 = vadd.xlane.f32.xlu0 %v2106
        %v2551 = vpop.xlane.xlu0 %2550
        %2552 = vadd.xlane.f32.xlu0 %v2107
        %v2553 = vpop.xlane.xlu0 %2552
        %2554 = vadd.xlane.f32.xlu0 %v2108
        %v2555 = vpop.xlane.xlu0 %2554
        %2556 = vadd.xlane.f32.xlu0 %v2109
        %v2557 = vpop.xlane.xlu0 %2556
        %2558 = vadd.xlane.f32.xlu0 %v2110
        %v2559 = vpop.xlane.xlu0 %2558
        %2560 = vadd.xlane.f32.xlu0 %v2111
        %v2561 = vpop.xlane.xlu0 %2560
        %2562 = vadd.xlane.f32.xlu0 %v2112
        %v2563 = vpop.xlane.xlu0 %2562
        %2564 = vadd.xlane.f32.xlu0 %v2113
        %v2565 = vpop.xlane.xlu0 %2564
        %2566 = vadd.xlane.f32.xlu0 %v2114
        %v2567 = vpop.xlane.xlu0 %2566
        %2568 = vadd.xlane.f32.xlu0 %v2115
        %v2569 = vpop.xlane.xlu0 %2568
        %2570 = vadd.xlane.f32.xlu0 %v2116
        %v2571 = vpop.xlane.xlu0 %2570
        %2572 = vadd.xlane.f32.xlu0 %v2117
        %v2573 = vpop.xlane.xlu0 %2572
        %2574 = vadd.xlane.f32.xlu0 %v2118
        %v2575 = vpop.xlane.xlu0 %2574
        %2576 = vadd.xlane.f32.xlu0 %v2119
        %v2577 = vpop.xlane.xlu0 %2576
        %2578 = vadd.xlane.f32.xlu0 %v2120
        %v2579 = vpop.xlane.xlu0 %2578
        %2580 = vadd.xlane.f32.xlu0 %v2121
        %v2581 = vpop.xlane.xlu0 %2580
        %2582 = vadd.xlane.f32.xlu0 %v2122
        %v2583 = vpop.xlane.xlu0 %2582
        %2584 = vadd.xlane.f32.xlu0 %v2123
        %v2585 = vpop.xlane.xlu0 %2584
        %2586 = vadd.xlane.f32.xlu0 %v2124
        %v2587 = vpop.xlane.xlu0 %2586
        %2588 = vadd.xlane.f32.xlu0 %v2125
        %v2589 = vpop.xlane.xlu0 %2588
        %2590 = vadd.xlane.f32.xlu0 %v2126
        %v2591 = vpop.xlane.xlu0 %2590
        %2592 = vadd.xlane.f32.xlu0 %v2127
        %v2593 = vpop.xlane.xlu0 %2592
        %2594 = vadd.xlane.f32.xlu0 %v2128
        %v2595 = vpop.xlane.xlu0 %2594
        %2596 = vadd.xlane.f32.xlu0 %v2129
        %v2597 = vpop.xlane.xlu0 %2596
        %2598 = vadd.xlane.f32.xlu0 %v2130
        %v2599 = vpop.xlane.xlu0 %2598
        %2600 = vadd.xlane.f32.xlu0 %v2131
        %v2601 = vpop.xlane.xlu0 %2600
        %2602 = vadd.xlane.f32.xlu0 %v2132
        %v2603 = vpop.xlane.xlu0 %2602
        %2604 = vadd.xlane.f32.xlu0 %v2133
        %v2605 = vpop.xlane.xlu0 %2604
        %2606 = vadd.xlane.f32.xlu0 %v2134
        %v2607 = vpop.xlane.xlu0 %2606
        %2608 = vadd.xlane.f32.xlu0 %v2135
        %v2609 = vpop.xlane.xlu0 %2608
        %2610 = vadd.xlane.f32.xlu0 %v2136
        %v2611 = vpop.xlane.xlu0 %2610
        %2612 = vadd.xlane.f32.xlu0 %v2137
        %v2613 = vpop.xlane.xlu0 %2612
        %2614 = vadd.xlane.f32.xlu0 %v2138
        %v2615 = vpop.xlane.xlu0 %2614
        %2616 = vadd.xlane.f32.xlu0 %v2139
        %v2617 = vpop.xlane.xlu0 %2616
        %2618 = vadd.xlane.f32.xlu0 %v2140
        %v2619 = vpop.xlane.xlu0 %2618
        %2620 = vadd.xlane.f32.xlu0 %v2141
        %v2621 = vpop.xlane.xlu0 %2620
        %2622 = vadd.xlane.f32.xlu0 %v2142
        %v2623 = vpop.xlane.xlu0 %2622
        %2624 = vadd.xlane.f32.xlu0 %v2143
        %v2625 = vpop.xlane.xlu0 %2624
        %2626 = vadd.xlane.f32.xlu0 %v2144
        %v2627 = vpop.xlane.xlu0 %2626
        %2628 = vadd.xlane.f32.xlu0 %v2145
        %v2629 = vpop.xlane.xlu0 %2628
        %2630 = vadd.xlane.f32.xlu0 %v2146
        %v2631 = vpop.xlane.xlu0 %2630
        %2632 = vadd.xlane.f32.xlu0 %v2147
        %v2633 = vpop.xlane.xlu0 %2632
        %2634 = vadd.xlane.f32.xlu0 %v2148
        %v2635 = vpop.xlane.xlu0 %2634
        %2636 = vadd.xlane.f32.xlu0 %v2149
        %v2637 = vpop.xlane.xlu0 %2636
        %2638 = vadd.xlane.f32.xlu0 %v2150
        %v2639 = vpop.xlane.xlu0 %2638
        %2640 = vadd.xlane.f32.xlu0 %v2151
        %v2641 = vpop.xlane.xlu0 %2640
        %2642 = vadd.xlane.f32.xlu0 %v2152
        %v2643 = vpop.xlane.xlu0 %2642
        %2644 = vadd.xlane.f32.xlu0 %v2153
        %v2645 = vpop.xlane.xlu0 %2644
        %2646 = vadd.xlane.f32.xlu0 %v2154
        %v2647 = vpop.xlane.xlu0 %2646
        %2648 = vadd.xlane.f32.xlu0 %v2155
        %v2649 = vpop.xlane.xlu0 %2648
        %2650 = vadd.xlane.f32.xlu0 %v2156
        %v2651 = vpop.xlane.xlu0 %2650
        %2652 = vadd.xlane.f32.xlu0 %v2157
        %v2653 = vpop.xlane.xlu0 %2652
        %2654 = vadd.xlane.f32.xlu0 %v2158
        %v2655 = vpop.xlane.xlu0 %2654
        %2656 = vadd.xlane.f32.xlu0 %v2159
        %v2657 = vpop.xlane.xlu0 %2656
        %2658 = vadd.xlane.f32.xlu0 %v2160
        %v2659 = vpop.xlane.xlu0 %2658
        %2660 = vadd.xlane.f32.xlu0 %v2161
        %v2661 = vpop.xlane.xlu0 %2660
        %2662 = vadd.xlane.f32.xlu0 %v2162
        %v2663 = vpop.xlane.xlu0 %2662
        %2664 = vadd.xlane.f32.xlu0 %v2163
        %v2665 = vpop.xlane.xlu0 %2664
        %2666 = vadd.xlane.f32.xlu0 %v2164
        %v2667 = vpop.xlane.xlu0 %2666
        %2668 = vadd.xlane.f32.xlu0 %v2165
        %v2669 = vpop.xlane.xlu0 %2668
        %2670 = vadd.xlane.f32.xlu0 %v2166
        %v2671 = vpop.xlane.xlu0 %2670
        %2672 = vadd.xlane.f32.xlu0 %v2167
        %v2673 = vpop.xlane.xlu0 %2672
        %2674 = vadd.xlane.f32.xlu0 %v2168
        %v2675 = vpop.xlane.xlu0 %2674
        %2676 = vadd.xlane.f32.xlu0 %v2169
        %v2677 = vpop.xlane.xlu0 %2676
        %2678 = vadd.xlane.f32.xlu0 %v2170
        %v2679 = vpop.xlane.xlu0 %2678
        %2680 = vadd.xlane.f32.xlu0 %v2171
        %v2681 = vpop.xlane.xlu0 %2680
        %2682 = vadd.xlane.f32.xlu0 %v2172
        %v2683 = vpop.xlane.xlu0 %2682
        %2684 = vadd.xlane.f32.xlu0 %v2173
        %v2685 = vpop.xlane.xlu0 %2684
        %vm2686 = vcmp.le.f32.partialorder %v2175, 63.0
        %vm2687 = vcmp.le.f32.partialorder %v2177, 63.0
        %vm2688 = vcmp.le.f32.partialorder %v2179, 63.0
        %vm2689 = vcmp.le.f32.partialorder %v2181, 63.0
        %vm2690 = vcmp.le.f32.partialorder %v2183, 63.0
        %vm2691 = vcmp.le.f32.partialorder %v2185, 63.0
        %vm2692 = vcmp.le.f32.partialorder %v2187, 63.0
        %vm2693 = vcmp.le.f32.partialorder %v2189, 63.0
        %vm2694 = vcmp.le.f32.partialorder %v2191, 63.0
        %vm2695 = vcmp.le.f32.partialorder %v2193, 63.0
        %vm2696 = vcmp.le.f32.partialorder %v2195, 63.0
        %vm2697 = vcmp.le.f32.partialorder %v2197, 63.0
        %vm2698 = vcmp.le.f32.partialorder %v2199, 63.0
        %vm2699 = vcmp.le.f32.partialorder %v2201, 63.0
        %vm2700 = vcmp.le.f32.partialorder %v2203, 63.0
        %vm2701 = vcmp.le.f32.partialorder %v2205, 63.0
        %vm2702 = vcmp.le.f32.partialorder %v2207, 63.0
        %vm2703 = vcmp.le.f32.partialorder %v2209, 63.0
        %vm2704 = vcmp.le.f32.partialorder %v2211, 63.0
        %vm2705 = vcmp.le.f32.partialorder %v2213, 63.0
        %vm2706 = vcmp.le.f32.partialorder %v2215, 63.0
        %vm2707 = vcmp.le.f32.partialorder %v2217, 63.0
        %vm2708 = vcmp.le.f32.partialorder %v2219, 63.0
        %vm2709 = vcmp.le.f32.partialorder %v2221, 63.0
        %vm2710 = vcmp.le.f32.partialorder %v2223, 63.0
        %vm2711 = vcmp.le.f32.partialorder %v2225, 63.0
        %vm2712 = vcmp.le.f32.partialorder %v2227, 63.0
        %vm2713 = vcmp.le.f32.partialorder %v2229, 63.0
        %vm2714 = vcmp.le.f32.partialorder %v2231, 63.0
        %vm2715 = vcmp.le.f32.partialorder %v2233, 63.0
        %vm2716 = vcmp.le.f32.partialorder %v2235, 63.0
        %vm2717 = vcmp.le.f32.partialorder %v2237, 63.0
        %vm2718 = vcmp.le.f32.partialorder %v2239, 63.0
        %vm2719 = vcmp.le.f32.partialorder %v2241, 63.0
        %vm2720 = vcmp.le.f32.partialorder %v2243, 63.0
        %vm2721 = vcmp.le.f32.partialorder %v2245, 63.0
        %vm2722 = vcmp.le.f32.partialorder %v2247, 63.0
        %vm2723 = vcmp.le.f32.partialorder %v2249, 63.0
        %vm2724 = vcmp.le.f32.partialorder %v2251, 63.0
        %vm2725 = vcmp.le.f32.partialorder %v2253, 63.0
        %vm2726 = vcmp.le.f32.partialorder %v2255, 63.0
        %vm2727 = vcmp.le.f32.partialorder %v2257, 63.0
        %vm2728 = vcmp.le.f32.partialorder %v2259, 63.0
        %vm2729 = vcmp.le.f32.partialorder %v2261, 63.0
        %vm2730 = vcmp.le.f32.partialorder %v2263, 63.0
        %vm2731 = vcmp.le.f32.partialorder %v2265, 63.0
        %vm2732 = vcmp.le.f32.partialorder %v2267, 63.0
        %vm2733 = vcmp.le.f32.partialorder %v2269, 63.0
        %vm2734 = vcmp.le.f32.partialorder %v2271, 63.0
        %vm2735 = vcmp.le.f32.partialorder %v2273, 63.0
        %vm2736 = vcmp.le.f32.partialorder %v2275, 63.0
        %vm2737 = vcmp.le.f32.partialorder %v2277, 63.0
        %vm2738 = vcmp.le.f32.partialorder %v2279, 63.0
        %vm2739 = vcmp.le.f32.partialorder %v2281, 63.0
        %vm2740 = vcmp.le.f32.partialorder %v2283, 63.0
        %vm2741 = vcmp.le.f32.partialorder %v2285, 63.0
        %vm2742 = vcmp.le.f32.partialorder %v2287, 63.0
        %vm2743 = vcmp.le.f32.partialorder %v2289, 63.0
        %vm2744 = vcmp.le.f32.partialorder %v2291, 63.0
        %vm2745 = vcmp.le.f32.partialorder %v2293, 63.0
        %vm2746 = vcmp.le.f32.partialorder %v2295, 63.0
        %vm2747 = vcmp.le.f32.partialorder %v2297, 63.0
        %vm2748 = vcmp.le.f32.partialorder %v2299, 63.0
        %vm2749 = vcmp.le.f32.partialorder %v2301, 63.0
        %vm2750 = vcmp.le.f32.partialorder %v2303, 63.0
        %vm2751 = vcmp.le.f32.partialorder %v2305, 63.0
        %vm2752 = vcmp.le.f32.partialorder %v2307, 63.0
        %vm2753 = vcmp.le.f32.partialorder %v2309, 63.0
        %vm2754 = vcmp.le.f32.partialorder %v2311, 63.0
        %vm2755 = vcmp.le.f32.partialorder %v2313, 63.0
        %vm2756 = vcmp.le.f32.partialorder %v2315, 63.0
        %vm2757 = vcmp.le.f32.partialorder %v2317, 63.0
        %vm2758 = vcmp.le.f32.partialorder %v2319, 63.0
        %vm2759 = vcmp.le.f32.partialorder %v2321, 63.0
        %vm2760 = vcmp.le.f32.partialorder %v2323, 63.0
        %vm2761 = vcmp.le.f32.partialorder %v2325, 63.0
        %vm2762 = vcmp.le.f32.partialorder %v2327, 63.0
        %vm2763 = vcmp.le.f32.partialorder %v2329, 63.0
        %vm2764 = vcmp.le.f32.partialorder %v2331, 63.0
        %vm2765 = vcmp.le.f32.partialorder %v2333, 63.0
        %vm2766 = vcmp.le.f32.partialorder %v2335, 63.0
        %vm2767 = vcmp.le.f32.partialorder %v2337, 63.0
        %vm2768 = vcmp.le.f32.partialorder %v2339, 63.0
        %vm2769 = vcmp.le.f32.partialorder %v2341, 63.0
        %vm2770 = vcmp.le.f32.partialorder %v2343, 63.0
        %vm2771 = vcmp.le.f32.partialorder %v2345, 63.0
        %vm2772 = vcmp.le.f32.partialorder %v2347, 63.0
        %vm2773 = vcmp.le.f32.partialorder %v2349, 63.0
        %vm2774 = vcmp.le.f32.partialorder %v2351, 63.0
        %vm2775 = vcmp.le.f32.partialorder %v2353, 63.0
        %vm2776 = vcmp.le.f32.partialorder %v2355, 63.0
        %vm2777 = vcmp.le.f32.partialorder %v2357, 63.0
        %vm2778 = vcmp.le.f32.partialorder %v2359, 63.0
        %vm2779 = vcmp.le.f32.partialorder %v2361, 63.0
        %vm2780 = vcmp.le.f32.partialorder %v2363, 63.0
        %vm2781 = vcmp.le.f32.partialorder %v2365, 63.0
        %vm2782 = vcmp.le.f32.partialorder %v2367, 63.0
        %vm2783 = vcmp.le.f32.partialorder %v2369, 63.0
        %vm2784 = vcmp.le.f32.partialorder %v2371, 63.0
        %vm2785 = vcmp.le.f32.partialorder %v2373, 63.0
        %vm2786 = vcmp.le.f32.partialorder %v2375, 63.0
        %vm2787 = vcmp.le.f32.partialorder %v2377, 63.0
        %vm2788 = vcmp.le.f32.partialorder %v2379, 63.0
        %vm2789 = vcmp.le.f32.partialorder %v2381, 63.0
        %vm2790 = vcmp.le.f32.partialorder %v2383, 63.0
        %vm2791 = vcmp.le.f32.partialorder %v2385, 63.0
        %vm2792 = vcmp.le.f32.partialorder %v2387, 63.0
        %vm2793 = vcmp.le.f32.partialorder %v2389, 63.0
        %vm2794 = vcmp.le.f32.partialorder %v2391, 63.0
        %vm2795 = vcmp.le.f32.partialorder %v2393, 63.0
        %vm2796 = vcmp.le.f32.partialorder %v2395, 63.0
        %vm2797 = vcmp.le.f32.partialorder %v2397, 63.0
        %vm2798 = vcmp.le.f32.partialorder %v2399, 63.0
        %vm2799 = vcmp.le.f32.partialorder %v2401, 63.0
        %vm2800 = vcmp.le.f32.partialorder %v2403, 63.0
        %vm2801 = vcmp.le.f32.partialorder %v2405, 63.0
        %vm2802 = vcmp.le.f32.partialorder %v2407, 63.0
        %vm2803 = vcmp.le.f32.partialorder %v2409, 63.0
        %vm2804 = vcmp.le.f32.partialorder %v2411, 63.0
        %vm2805 = vcmp.le.f32.partialorder %v2413, 63.0
        %vm2806 = vcmp.le.f32.partialorder %v2415, 63.0
        %vm2807 = vcmp.le.f32.partialorder %v2417, 63.0
        %vm2808 = vcmp.le.f32.partialorder %v2419, 63.0
        %vm2809 = vcmp.le.f32.partialorder %v2421, 63.0
        %vm2810 = vcmp.le.f32.partialorder %v2423, 63.0
        %vm2811 = vcmp.le.f32.partialorder %v2425, 63.0
        %vm2812 = vcmp.le.f32.partialorder %v2427, 63.0
        %vm2813 = vcmp.le.f32.partialorder %v2429, 63.0
        %vm2814 = vcmp.le.f32.partialorder %v2431, 63.0
        %vm2815 = vcmp.le.f32.partialorder %v2433, 63.0
        %vm2816 = vcmp.le.f32.partialorder %v2435, 63.0
        %vm2817 = vcmp.le.f32.partialorder %v2437, 63.0
        %vm2818 = vcmp.le.f32.partialorder %v2439, 63.0
        %vm2819 = vcmp.le.f32.partialorder %v2441, 63.0
        %vm2820 = vcmp.le.f32.partialorder %v2443, 63.0
        %vm2821 = vcmp.le.f32.partialorder %v2445, 63.0
        %vm2822 = vcmp.le.f32.partialorder %v2447, 63.0
        %vm2823 = vcmp.le.f32.partialorder %v2449, 63.0
        %vm2824 = vcmp.le.f32.partialorder %v2451, 63.0
        %vm2825 = vcmp.le.f32.partialorder %v2453, 63.0
        %vm2826 = vcmp.le.f32.partialorder %v2455, 63.0
        %vm2827 = vcmp.le.f32.partialorder %v2457, 63.0
        %vm2828 = vcmp.le.f32.partialorder %v2459, 63.0
        %vm2829 = vcmp.le.f32.partialorder %v2461, 63.0
        %vm2830 = vcmp.le.f32.partialorder %v2463, 63.0
        %vm2831 = vcmp.le.f32.partialorder %v2465, 63.0
        %vm2832 = vcmp.le.f32.partialorder %v2467, 63.0
        %vm2833 = vcmp.le.f32.partialorder %v2469, 63.0
        %vm2834 = vcmp.le.f32.partialorder %v2471, 63.0
        %vm2835 = vcmp.le.f32.partialorder %v2473, 63.0
        %vm2836 = vcmp.le.f32.partialorder %v2475, 63.0
        %vm2837 = vcmp.le.f32.partialorder %v2477, 63.0
        %vm2838 = vcmp.le.f32.partialorder %v2479, 63.0
        %vm2839 = vcmp.le.f32.partialorder %v2481, 63.0
        %vm2840 = vcmp.le.f32.partialorder %v2483, 63.0
        %vm2841 = vcmp.le.f32.partialorder %v2485, 63.0
        %vm2842 = vcmp.le.f32.partialorder %v2487, 63.0
        %vm2843 = vcmp.le.f32.partialorder %v2489, 63.0
        %vm2844 = vcmp.le.f32.partialorder %v2491, 63.0
        %vm2845 = vcmp.le.f32.partialorder %v2493, 63.0
        %vm2846 = vcmp.le.f32.partialorder %v2495, 63.0
        %vm2847 = vcmp.le.f32.partialorder %v2497, 63.0
        %vm2848 = vcmp.le.f32.partialorder %v2499, 63.0
        %vm2849 = vcmp.le.f32.partialorder %v2501, 63.0
        %vm2850 = vcmp.le.f32.partialorder %v2503, 63.0
        %vm2851 = vcmp.le.f32.partialorder %v2505, 63.0
        %vm2852 = vcmp.le.f32.partialorder %v2507, 63.0
        %vm2853 = vcmp.le.f32.partialorder %v2509, 63.0
        %vm2854 = vcmp.le.f32.partialorder %v2511, 63.0
        %vm2855 = vcmp.le.f32.partialorder %v2513, 63.0
        %vm2856 = vcmp.le.f32.partialorder %v2515, 63.0
        %vm2857 = vcmp.le.f32.partialorder %v2517, 63.0
        %vm2858 = vcmp.le.f32.partialorder %v2519, 63.0
        %vm2859 = vcmp.le.f32.partialorder %v2521, 63.0
        %vm2860 = vcmp.le.f32.partialorder %v2523, 63.0
        %vm2861 = vcmp.le.f32.partialorder %v2525, 63.0
        %vm2862 = vcmp.le.f32.partialorder %v2527, 63.0
        %vm2863 = vcmp.le.f32.partialorder %v2529, 63.0
        %vm2864 = vcmp.le.f32.partialorder %v2531, 63.0
        %vm2865 = vcmp.le.f32.partialorder %v2533, 63.0
        %vm2866 = vcmp.le.f32.partialorder %v2535, 63.0
        %vm2867 = vcmp.le.f32.partialorder %v2537, 63.0
        %vm2868 = vcmp.le.f32.partialorder %v2539, 63.0
        %vm2869 = vcmp.le.f32.partialorder %v2541, 63.0
        %vm2870 = vcmp.le.f32.partialorder %v2543, 63.0
        %vm2871 = vcmp.le.f32.partialorder %v2545, 63.0
        %vm2872 = vcmp.le.f32.partialorder %v2547, 63.0
        %vm2873 = vcmp.le.f32.partialorder %v2549, 63.0
        %vm2874 = vcmp.le.f32.partialorder %v2551, 63.0
        %vm2875 = vcmp.le.f32.partialorder %v2553, 63.0
        %vm2876 = vcmp.le.f32.partialorder %v2555, 63.0
        %vm2877 = vcmp.le.f32.partialorder %v2557, 63.0
        %vm2878 = vcmp.le.f32.partialorder %v2559, 63.0
        %vm2879 = vcmp.le.f32.partialorder %v2561, 63.0
        %vm2880 = vcmp.le.f32.partialorder %v2563, 63.0
        %vm2881 = vcmp.le.f32.partialorder %v2565, 63.0
        %vm2882 = vcmp.le.f32.partialorder %v2567, 63.0
        %vm2883 = vcmp.le.f32.partialorder %v2569, 63.0
        %vm2884 = vcmp.le.f32.partialorder %v2571, 63.0
        %vm2885 = vcmp.le.f32.partialorder %v2573, 63.0
        %vm2886 = vcmp.le.f32.partialorder %v2575, 63.0
        %vm2887 = vcmp.le.f32.partialorder %v2577, 63.0
        %vm2888 = vcmp.le.f32.partialorder %v2579, 63.0
        %vm2889 = vcmp.le.f32.partialorder %v2581, 63.0
        %vm2890 = vcmp.le.f32.partialorder %v2583, 63.0
        %vm2891 = vcmp.le.f32.partialorder %v2585, 63.0
        %vm2892 = vcmp.le.f32.partialorder %v2587, 63.0
        %vm2893 = vcmp.le.f32.partialorder %v2589, 63.0
        %vm2894 = vcmp.le.f32.partialorder %v2591, 63.0
        %vm2895 = vcmp.le.f32.partialorder %v2593, 63.0
        %vm2896 = vcmp.le.f32.partialorder %v2595, 63.0
        %vm2897 = vcmp.le.f32.partialorder %v2597, 63.0
        %vm2898 = vcmp.le.f32.partialorder %v2599, 63.0
        %vm2899 = vcmp.le.f32.partialorder %v2601, 63.0
        %vm2900 = vcmp.le.f32.partialorder %v2603, 63.0
        %vm2901 = vcmp.le.f32.partialorder %v2605, 63.0
        %vm2902 = vcmp.le.f32.partialorder %v2607, 63.0
        %vm2903 = vcmp.le.f32.partialorder %v2609, 63.0
        %vm2904 = vcmp.le.f32.partialorder %v2611, 63.0
        %vm2905 = vcmp.le.f32.partialorder %v2613, 63.0
        %vm2906 = vcmp.le.f32.partialorder %v2615, 63.0
        %vm2907 = vcmp.le.f32.partialorder %v2617, 63.0
        %vm2908 = vcmp.le.f32.partialorder %v2619, 63.0
        %vm2909 = vcmp.le.f32.partialorder %v2621, 63.0
        %vm2910 = vcmp.le.f32.partialorder %v2623, 63.0
        %vm2911 = vcmp.le.f32.partialorder %v2625, 63.0
        %vm2912 = vcmp.le.f32.partialorder %v2627, 63.0
        %vm2913 = vcmp.le.f32.partialorder %v2629, 63.0
        %vm2914 = vcmp.le.f32.partialorder %v2631, 63.0
        %vm2915 = vcmp.le.f32.partialorder %v2633, 63.0
        %vm2916 = vcmp.le.f32.partialorder %v2635, 63.0
        %vm2917 = vcmp.le.f32.partialorder %v2637, 63.0
        %vm2918 = vcmp.le.f32.partialorder %v2639, 63.0
        %vm2919 = vcmp.le.f32.partialorder %v2641, 63.0
        %vm2920 = vcmp.le.f32.partialorder %v2643, 63.0
        %vm2921 = vcmp.le.f32.partialorder %v2645, 63.0
        %vm2922 = vcmp.le.f32.partialorder %v2647, 63.0
        %vm2923 = vcmp.le.f32.partialorder %v2649, 63.0
        %vm2924 = vcmp.le.f32.partialorder %v2651, 63.0
        %vm2925 = vcmp.le.f32.partialorder %v2653, 63.0
        %vm2926 = vcmp.le.f32.partialorder %v2655, 63.0
        %vm2927 = vcmp.le.f32.partialorder %v2657, 63.0
        %vm2928 = vcmp.le.f32.partialorder %v2659, 63.0
        %vm2929 = vcmp.le.f32.partialorder %v2661, 63.0
        %vm2930 = vcmp.le.f32.partialorder %v2663, 63.0
        %vm2931 = vcmp.le.f32.partialorder %v2665, 63.0
        %vm2932 = vcmp.le.f32.partialorder %v2667, 63.0
        %vm2933 = vcmp.le.f32.partialorder %v2669, 63.0
        %vm2934 = vcmp.le.f32.partialorder %v2671, 63.0
        %vm2935 = vcmp.le.f32.partialorder %v2673, 63.0
        %vm2936 = vcmp.le.f32.partialorder %v2675, 63.0
        %vm2937 = vcmp.le.f32.partialorder %v2677, 63.0
        %vm2938 = vcmp.le.f32.partialorder %v2679, 63.0
        %vm2939 = vcmp.le.f32.partialorder %v2681, 63.0
        %vm2940 = vcmp.le.f32.partialorder %v2683, 63.0
        %vm2941 = vcmp.le.f32.partialorder %v2685, 63.0
        %v2944 = vlaneseq
        %v2945 = vshrl.u32 %v2944, 7
        %v2946 = vsub.s32 0, %v2945
        %v2947 = vrot.slane %v508, %v2946
        %2949 = vbcast.lane.b32.xlu0 %v2947, 256
        %v2950 = vpop.permute.xlu0 %2949
        %s2952 = sor.u32 256, 8
        %2953 = vbcast.lane.b32.xlu0 %v2947, %s2952
        %v2954 = vpop.permute.xlu0 %2953
        %s2956 = sor.u32 256, 16
        %2957 = vbcast.lane.b32.xlu0 %v2947, %s2956
        %v2958 = vpop.permute.xlu0 %2957
        %s2960 = sor.u32 256, 24
        %2961 = vbcast.lane.b32.xlu0 %v2947, %s2960
        %v2962 = vpop.permute.xlu0 %2961
        %s2964 = sor.u32 256, 32
        %2965 = vbcast.lane.b32.xlu0 %v2947, %s2964
        %v2966 = vpop.permute.xlu0 %2965
        %s2968 = sor.u32 256, 40
        %2969 = vbcast.lane.b32.xlu0 %v2947, %s2968
        %v2970 = vpop.permute.xlu0 %2969
        %s2972 = sor.u32 256, 48
        %2973 = vbcast.lane.b32.xlu0 %v2947, %s2972
        %v2974 = vpop.permute.xlu0 %2973
        %s2976 = sor.u32 256, 56
        %2977 = vbcast.lane.b32.xlu0 %v2947, %s2976
        %v2978 = vpop.permute.xlu0 %2977
        %s2980 = sor.u32 256, 64
        %2981 = vbcast.lane.b32.xlu0 %v2947, %s2980
        %v2982 = vpop.permute.xlu0 %2981
        %s2984 = sor.u32 256, 72
        %2985 = vbcast.lane.b32.xlu0 %v2947, %s2984
        %v2986 = vpop.permute.xlu0 %2985
        %s2988 = sor.u32 256, 80
        %2989 = vbcast.lane.b32.xlu0 %v2947, %s2988
        %v2990 = vpop.permute.xlu0 %2989
        %s2992 = sor.u32 256, 88
        %2993 = vbcast.lane.b32.xlu0 %v2947, %s2992
        %v2994 = vpop.permute.xlu0 %2993
        %s2996 = sor.u32 256, 96
        %2997 = vbcast.lane.b32.xlu0 %v2947, %s2996
        %v2998 = vpop.permute.xlu0 %2997
        %s3000 = sor.u32 256, 104
        %3001 = vbcast.lane.b32.xlu0 %v2947, %s3000
        %v3002 = vpop.permute.xlu0 %3001
        %s3004 = sor.u32 256, 112
        %3005 = vbcast.lane.b32.xlu0 %v2947, %s3004
        %v3006 = vpop.permute.xlu0 %3005
        %s3008 = sor.u32 256, 120
        %3009 = vbcast.lane.b32.xlu0 %v2947, %s3008
        %v3010 = vpop.permute.xlu0 %3009
        %v3011 = vlaneseq
        %v3012 = vshrl.u32 %v3011, 7
        %v3013 = vsub.s32 1, %v3012
        %v3014 = vrot.slane %v508, %v3013
        %3016 = vbcast.lane.b32.xlu0 %v3014, 256
        %v3017 = vpop.permute.xlu0 %3016
        %s3019 = sor.u32 256, 8
        %3020 = vbcast.lane.b32.xlu0 %v3014, %s3019
        %v3021 = vpop.permute.xlu0 %3020
        %s3023 = sor.u32 256, 16
        %3024 = vbcast.lane.b32.xlu0 %v3014, %s3023
        %v3025 = vpop.permute.xlu0 %3024
        %s3027 = sor.u32 256, 24
        %3028 = vbcast.lane.b32.xlu0 %v3014, %s3027
        %v3029 = vpop.permute.xlu0 %3028
        %s3031 = sor.u32 256, 32
        %3032 = vbcast.lane.b32.xlu0 %v3014, %s3031
        %v3033 = vpop.permute.xlu0 %3032
        %s3035 = sor.u32 256, 40
        %3036 = vbcast.lane.b32.xlu0 %v3014, %s3035
        %v3037 = vpop.permute.xlu0 %3036
        %s3039 = sor.u32 256, 48
        %3040 = vbcast.lane.b32.xlu0 %v3014, %s3039
        %v3041 = vpop.permute.xlu0 %3040
        %s3043 = sor.u32 256, 56
        %3044 = vbcast.lane.b32.xlu0 %v3014, %s3043
        %v3045 = vpop.permute.xlu0 %3044
        %s3047 = sor.u32 256, 64
        %3048 = vbcast.lane.b32.xlu0 %v3014, %s3047
        %v3049 = vpop.permute.xlu0 %3048
        %s3051 = sor.u32 256, 72
        %3052 = vbcast.lane.b32.xlu0 %v3014, %s3051
        %v3053 = vpop.permute.xlu0 %3052
        %s3055 = sor.u32 256, 80
        %3056 = vbcast.lane.b32.xlu0 %v3014, %s3055
        %v3057 = vpop.permute.xlu0 %3056
        %s3059 = sor.u32 256, 88
        %3060 = vbcast.lane.b32.xlu0 %v3014, %s3059
        %v3061 = vpop.permute.xlu0 %3060
        %s3063 = sor.u32 256, 96
        %3064 = vbcast.lane.b32.xlu0 %v3014, %s3063
        %v3065 = vpop.permute.xlu0 %3064
        %s3067 = sor.u32 256, 104
        %3068 = vbcast.lane.b32.xlu0 %v3014, %s3067
        %v3069 = vpop.permute.xlu0 %3068
        %s3071 = sor.u32 256, 112
        %3072 = vbcast.lane.b32.xlu0 %v3014, %s3071
        %v3073 = vpop.permute.xlu0 %3072
        %s3075 = sor.u32 256, 120
        %3076 = vbcast.lane.b32.xlu0 %v3014, %s3075
        %v3077 = vpop.permute.xlu0 %3076
        %v3078 = vlaneseq
        %v3079 = vshrl.u32 %v3078, 7
        %v3080 = vsub.s32 2, %v3079
        %v3081 = vrot.slane %v508, %v3080
        %3083 = vbcast.lane.b32.xlu0 %v3081, 256
        %v3084 = vpop.permute.xlu0 %3083
        %s3086 = sor.u32 256, 8
        %3087 = vbcast.lane.b32.xlu0 %v3081, %s3086
        %v3088 = vpop.permute.xlu0 %3087
        %s3090 = sor.u32 256, 16
        %3091 = vbcast.lane.b32.xlu0 %v3081, %s3090
        %v3092 = vpop.permute.xlu0 %3091
        %s3094 = sor.u32 256, 24
        %3095 = vbcast.lane.b32.xlu0 %v3081, %s3094
        %v3096 = vpop.permute.xlu0 %3095
        %s3098 = sor.u32 256, 32
        %3099 = vbcast.lane.b32.xlu0 %v3081, %s3098
        %v3100 = vpop.permute.xlu0 %3099
        %s3102 = sor.u32 256, 40
        %3103 = vbcast.lane.b32.xlu0 %v3081, %s3102
        %v3104 = vpop.permute.xlu0 %3103
        %s3106 = sor.u32 256, 48
        %3107 = vbcast.lane.b32.xlu0 %v3081, %s3106
        %v3108 = vpop.permute.xlu0 %3107
        %s3110 = sor.u32 256, 56
        %3111 = vbcast.lane.b32.xlu0 %v3081, %s3110
        %v3112 = vpop.permute.xlu0 %3111
        %s3114 = sor.u32 256, 64
        %3115 = vbcast.lane.b32.xlu0 %v3081, %s3114
        %v3116 = vpop.permute.xlu0 %3115
        %s3118 = sor.u32 256, 72
        %3119 = vbcast.lane.b32.xlu0 %v3081, %s3118
        %v3120 = vpop.permute.xlu0 %3119
        %s3122 = sor.u32 256, 80
        %3123 = vbcast.lane.b32.xlu0 %v3081, %s3122
        %v3124 = vpop.permute.xlu0 %3123
        %s3126 = sor.u32 256, 88
        %3127 = vbcast.lane.b32.xlu0 %v3081, %s3126
        %v3128 = vpop.permute.xlu0 %3127
        %s3130 = sor.u32 256, 96
        %3131 = vbcast.lane.b32.xlu0 %v3081, %s3130
        %v3132 = vpop.permute.xlu0 %3131
        %s3134 = sor.u32 256, 104
        %3135 = vbcast.lane.b32.xlu0 %v3081, %s3134
        %v3136 = vpop.permute.xlu0 %3135
        %s3138 = sor.u32 256, 112
        %3139 = vbcast.lane.b32.xlu0 %v3081, %s3138
        %v3140 = vpop.permute.xlu0 %3139
        %s3142 = sor.u32 256, 120
        %3143 = vbcast.lane.b32.xlu0 %v3081, %s3142
        %v3144 = vpop.permute.xlu0 %3143
        %v3145 = vlaneseq
        %v3146 = vshrl.u32 %v3145, 7
        %v3147 = vsub.s32 3, %v3146
        %v3148 = vrot.slane %v508, %v3147
        %3150 = vbcast.lane.b32.xlu0 %v3148, 256
        %v3151 = vpop.permute.xlu0 %3150
        %s3153 = sor.u32 256, 8
        %3154 = vbcast.lane.b32.xlu0 %v3148, %s3153
        %v3155 = vpop.permute.xlu0 %3154
        %s3157 = sor.u32 256, 16
        %3158 = vbcast.lane.b32.xlu0 %v3148, %s3157
        %v3159 = vpop.permute.xlu0 %3158
        %s3161 = sor.u32 256, 24
        %3162 = vbcast.lane.b32.xlu0 %v3148, %s3161
        %v3163 = vpop.permute.xlu0 %3162
        %s3165 = sor.u32 256, 32
        %3166 = vbcast.lane.b32.xlu0 %v3148, %s3165
        %v3167 = vpop.permute.xlu0 %3166
        %s3169 = sor.u32 256, 40
        %3170 = vbcast.lane.b32.xlu0 %v3148, %s3169
        %v3171 = vpop.permute.xlu0 %3170
        %s3173 = sor.u32 256, 48
        %3174 = vbcast.lane.b32.xlu0 %v3148, %s3173
        %v3175 = vpop.permute.xlu0 %3174
        %s3177 = sor.u32 256, 56
        %3178 = vbcast.lane.b32.xlu0 %v3148, %s3177
        %v3179 = vpop.permute.xlu0 %3178
        %s3181 = sor.u32 256, 64
        %3182 = vbcast.lane.b32.xlu0 %v3148, %s3181
        %v3183 = vpop.permute.xlu0 %3182
        %s3185 = sor.u32 256, 72
        %3186 = vbcast.lane.b32.xlu0 %v3148, %s3185
        %v3187 = vpop.permute.xlu0 %3186
        %s3189 = sor.u32 256, 80
        %3190 = vbcast.lane.b32.xlu0 %v3148, %s3189
        %v3191 = vpop.permute.xlu0 %3190
        %s3193 = sor.u32 256, 88
        %3194 = vbcast.lane.b32.xlu0 %v3148, %s3193
        %v3195 = vpop.permute.xlu0 %3194
        %s3197 = sor.u32 256, 96
        %3198 = vbcast.lane.b32.xlu0 %v3148, %s3197
        %v3199 = vpop.permute.xlu0 %3198
        %s3201 = sor.u32 256, 104
        %3202 = vbcast.lane.b32.xlu0 %v3148, %s3201
        %v3203 = vpop.permute.xlu0 %3202
        %s3205 = sor.u32 256, 112
        %3206 = vbcast.lane.b32.xlu0 %v3148, %s3205
        %v3207 = vpop.permute.xlu0 %3206
        %s3209 = sor.u32 256, 120
        %3210 = vbcast.lane.b32.xlu0 %v3148, %s3209
        %v3211 = vpop.permute.xlu0 %3210
        %v3212 = vlaneseq
        %v3213 = vshrl.u32 %v3212, 7
        %v3214 = vsub.s32 4, %v3213
        %v3215 = vrot.slane %v508, %v3214
        %3217 = vbcast.lane.b32.xlu0 %v3215, 256
        %v3218 = vpop.permute.xlu0 %3217
        %s3220 = sor.u32 256, 8
        %3221 = vbcast.lane.b32.xlu0 %v3215, %s3220
        %v3222 = vpop.permute.xlu0 %3221
        %s3224 = sor.u32 256, 16
        %3225 = vbcast.lane.b32.xlu0 %v3215, %s3224
        %v3226 = vpop.permute.xlu0 %3225
        %s3228 = sor.u32 256, 24
        %3229 = vbcast.lane.b32.xlu0 %v3215, %s3228
        %v3230 = vpop.permute.xlu0 %3229
        %s3232 = sor.u32 256, 32
        %3233 = vbcast.lane.b32.xlu0 %v3215, %s3232
        %v3234 = vpop.permute.xlu0 %3233
        %s3236 = sor.u32 256, 40
        %3237 = vbcast.lane.b32.xlu0 %v3215, %s3236
        %v3238 = vpop.permute.xlu0 %3237
        %s3240 = sor.u32 256, 48
        %3241 = vbcast.lane.b32.xlu0 %v3215, %s3240
        %v3242 = vpop.permute.xlu0 %3241
        %s3244 = sor.u32 256, 56
        %3245 = vbcast.lane.b32.xlu0 %v3215, %s3244
        %v3246 = vpop.permute.xlu0 %3245
        %s3248 = sor.u32 256, 64
        %3249 = vbcast.lane.b32.xlu0 %v3215, %s3248
        %v3250 = vpop.permute.xlu0 %3249
        %s3252 = sor.u32 256, 72
        %3253 = vbcast.lane.b32.xlu0 %v3215, %s3252
        %v3254 = vpop.permute.xlu0 %3253
        %s3256 = sor.u32 256, 80
        %3257 = vbcast.lane.b32.xlu0 %v3215, %s3256
        %v3258 = vpop.permute.xlu0 %3257
        %s3260 = sor.u32 256, 88
        %3261 = vbcast.lane.b32.xlu0 %v3215, %s3260
        %v3262 = vpop.permute.xlu0 %3261
        %s3264 = sor.u32 256, 96
        %3265 = vbcast.lane.b32.xlu0 %v3215, %s3264
        %v3266 = vpop.permute.xlu0 %3265
        %s3268 = sor.u32 256, 104
        %3269 = vbcast.lane.b32.xlu0 %v3215, %s3268
        %v3270 = vpop.permute.xlu0 %3269
        %s3272 = sor.u32 256, 112
        %3273 = vbcast.lane.b32.xlu0 %v3215, %s3272
        %v3274 = vpop.permute.xlu0 %3273
        %s3276 = sor.u32 256, 120
        %3277 = vbcast.lane.b32.xlu0 %v3215, %s3276
        %v3278 = vpop.permute.xlu0 %3277
        %v3279 = vlaneseq
        %v3280 = vshrl.u32 %v3279, 7
        %v3281 = vsub.s32 5, %v3280
        %v3282 = vrot.slane %v508, %v3281
        %3284 = vbcast.lane.b32.xlu0 %v3282, 256
        %v3285 = vpop.permute.xlu0 %3284
        %s3287 = sor.u32 256, 8
        %3288 = vbcast.lane.b32.xlu0 %v3282, %s3287
        %v3289 = vpop.permute.xlu0 %3288
        %s3291 = sor.u32 256, 16
        %3292 = vbcast.lane.b32.xlu0 %v3282, %s3291
        %v3293 = vpop.permute.xlu0 %3292
        %s3295 = sor.u32 256, 24
        %3296 = vbcast.lane.b32.xlu0 %v3282, %s3295
        %v3297 = vpop.permute.xlu0 %3296
        %s3299 = sor.u32 256, 32
        %3300 = vbcast.lane.b32.xlu0 %v3282, %s3299
        %v3301 = vpop.permute.xlu0 %3300
        %s3303 = sor.u32 256, 40
        %3304 = vbcast.lane.b32.xlu0 %v3282, %s3303
        %v3305 = vpop.permute.xlu0 %3304
        %s3307 = sor.u32 256, 48
        %3308 = vbcast.lane.b32.xlu0 %v3282, %s3307
        %v3309 = vpop.permute.xlu0 %3308
        %s3311 = sor.u32 256, 56
        %3312 = vbcast.lane.b32.xlu0 %v3282, %s3311
        %v3313 = vpop.permute.xlu0 %3312
        %s3315 = sor.u32 256, 64
        %3316 = vbcast.lane.b32.xlu0 %v3282, %s3315
        %v3317 = vpop.permute.xlu0 %3316
        %s3319 = sor.u32 256, 72
        %3320 = vbcast.lane.b32.xlu0 %v3282, %s3319
        %v3321 = vpop.permute.xlu0 %3320
        %s3323 = sor.u32 256, 80
        %3324 = vbcast.lane.b32.xlu0 %v3282, %s3323
        %v3325 = vpop.permute.xlu0 %3324
        %s3327 = sor.u32 256, 88
        %3328 = vbcast.lane.b32.xlu0 %v3282, %s3327
        %v3329 = vpop.permute.xlu0 %3328
        %s3331 = sor.u32 256, 96
        %3332 = vbcast.lane.b32.xlu0 %v3282, %s3331
        %v3333 = vpop.permute.xlu0 %3332
        %s3335 = sor.u32 256, 104
        %3336 = vbcast.lane.b32.xlu0 %v3282, %s3335
        %v3337 = vpop.permute.xlu0 %3336
        %s3339 = sor.u32 256, 112
        %3340 = vbcast.lane.b32.xlu0 %v3282, %s3339
        %v3341 = vpop.permute.xlu0 %3340
        %s3343 = sor.u32 256, 120
        %3344 = vbcast.lane.b32.xlu0 %v3282, %s3343
        %v3345 = vpop.permute.xlu0 %3344
        %v3346 = vlaneseq
        %v3347 = vshrl.u32 %v3346, 7
        %v3348 = vsub.s32 6, %v3347
        %v3349 = vrot.slane %v508, %v3348
        %3351 = vbcast.lane.b32.xlu0 %v3349, 256
        %v3352 = vpop.permute.xlu0 %3351
        %s3354 = sor.u32 256, 8
        %3355 = vbcast.lane.b32.xlu0 %v3349, %s3354
        %v3356 = vpop.permute.xlu0 %3355
        %s3358 = sor.u32 256, 16
        %3359 = vbcast.lane.b32.xlu0 %v3349, %s3358
        %v3360 = vpop.permute.xlu0 %3359
        %s3362 = sor.u32 256, 24
        %3363 = vbcast.lane.b32.xlu0 %v3349, %s3362
        %v3364 = vpop.permute.xlu0 %3363
        %s3366 = sor.u32 256, 32
        %3367 = vbcast.lane.b32.xlu0 %v3349, %s3366
        %v3368 = vpop.permute.xlu0 %3367
        %s3370 = sor.u32 256, 40
        %3371 = vbcast.lane.b32.xlu0 %v3349, %s3370
        %v3372 = vpop.permute.xlu0 %3371
        %s3374 = sor.u32 256, 48
        %3375 = vbcast.lane.b32.xlu0 %v3349, %s3374
        %v3376 = vpop.permute.xlu0 %3375
        %s3378 = sor.u32 256, 56
        %3379 = vbcast.lane.b32.xlu0 %v3349, %s3378
        %v3380 = vpop.permute.xlu0 %3379
        %s3382 = sor.u32 256, 64
        %3383 = vbcast.lane.b32.xlu0 %v3349, %s3382
        %v3384 = vpop.permute.xlu0 %3383
        %s3386 = sor.u32 256, 72
        %3387 = vbcast.lane.b32.xlu0 %v3349, %s3386
        %v3388 = vpop.permute.xlu0 %3387
        %s3390 = sor.u32 256, 80
        %3391 = vbcast.lane.b32.xlu0 %v3349, %s3390
        %v3392 = vpop.permute.xlu0 %3391
        %s3394 = sor.u32 256, 88
        %3395 = vbcast.lane.b32.xlu0 %v3349, %s3394
        %v3396 = vpop.permute.xlu0 %3395
        %s3398 = sor.u32 256, 96
        %3399 = vbcast.lane.b32.xlu0 %v3349, %s3398
        %v3400 = vpop.permute.xlu0 %3399
        %s3402 = sor.u32 256, 104
        %3403 = vbcast.lane.b32.xlu0 %v3349, %s3402
        %v3404 = vpop.permute.xlu0 %3403
        %s3406 = sor.u32 256, 112
        %3407 = vbcast.lane.b32.xlu0 %v3349, %s3406
        %v3408 = vpop.permute.xlu0 %3407
        %s3410 = sor.u32 256, 120
        %3411 = vbcast.lane.b32.xlu0 %v3349, %s3410
        %v3412 = vpop.permute.xlu0 %3411
        %v3413 = vlaneseq
        %v3414 = vshrl.u32 %v3413, 7
        %v3415 = vsub.s32 7, %v3414
        %v3416 = vrot.slane %v508, %v3415
        %3418 = vbcast.lane.b32.xlu0 %v3416, 256
        %v3419 = vpop.permute.xlu0 %3418
        %s3421 = sor.u32 256, 8
        %3422 = vbcast.lane.b32.xlu0 %v3416, %s3421
        %v3423 = vpop.permute.xlu0 %3422
        %s3425 = sor.u32 256, 16
        %3426 = vbcast.lane.b32.xlu0 %v3416, %s3425
        %v3427 = vpop.permute.xlu0 %3426
        %s3429 = sor.u32 256, 24
        %3430 = vbcast.lane.b32.xlu0 %v3416, %s3429
        %v3431 = vpop.permute.xlu0 %3430
        %s3433 = sor.u32 256, 32
        %3434 = vbcast.lane.b32.xlu0 %v3416, %s3433
        %v3435 = vpop.permute.xlu0 %3434
        %s3437 = sor.u32 256, 40
        %3438 = vbcast.lane.b32.xlu0 %v3416, %s3437
        %v3439 = vpop.permute.xlu0 %3438
        %s3441 = sor.u32 256, 48
        %3442 = vbcast.lane.b32.xlu0 %v3416, %s3441
        %v3443 = vpop.permute.xlu0 %3442
        %s3445 = sor.u32 256, 56
        %3446 = vbcast.lane.b32.xlu0 %v3416, %s3445
        %v3447 = vpop.permute.xlu0 %3446
        %s3449 = sor.u32 256, 64
        %3450 = vbcast.lane.b32.xlu0 %v3416, %s3449
        %v3451 = vpop.permute.xlu0 %3450
        %s3453 = sor.u32 256, 72
        %3454 = vbcast.lane.b32.xlu0 %v3416, %s3453
        %v3455 = vpop.permute.xlu0 %3454
        %s3457 = sor.u32 256, 80
        %3458 = vbcast.lane.b32.xlu0 %v3416, %s3457
        %v3459 = vpop.permute.xlu0 %3458
        %s3461 = sor.u32 256, 88
        %3462 = vbcast.lane.b32.xlu0 %v3416, %s3461
        %v3463 = vpop.permute.xlu0 %3462
        %s3465 = sor.u32 256, 96
        %3466 = vbcast.lane.b32.xlu0 %v3416, %s3465
        %v3467 = vpop.permute.xlu0 %3466
        %s3469 = sor.u32 256, 104
        %3470 = vbcast.lane.b32.xlu0 %v3416, %s3469
        %v3471 = vpop.permute.xlu0 %3470
        %s3473 = sor.u32 256, 112
        %3474 = vbcast.lane.b32.xlu0 %v3416, %s3473
        %v3475 = vpop.permute.xlu0 %3474
        %s3477 = sor.u32 256, 120
        %3478 = vbcast.lane.b32.xlu0 %v3416, %s3477
        %v3479 = vpop.permute.xlu0 %3478
        %v3480 = vlaneseq
        %v3481 = vshrl.u32 %v3480, 7
        %v3482 = vsub.s32 0, %v3481
        %v3483 = vrot.slane %v509, %v3482
        %3485 = vbcast.lane.b32.xlu0 %v3483, 256
        %v3486 = vpop.permute.xlu0 %3485
        %s3488 = sor.u32 256, 8
        %3489 = vbcast.lane.b32.xlu0 %v3483, %s3488
        %v3490 = vpop.permute.xlu0 %3489
        %s3492 = sor.u32 256, 16
        %3493 = vbcast.lane.b32.xlu0 %v3483, %s3492
        %v3494 = vpop.permute.xlu0 %3493
        %s3496 = sor.u32 256, 24
        %3497 = vbcast.lane.b32.xlu0 %v3483, %s3496
        %v3498 = vpop.permute.xlu0 %3497
        %s3500 = sor.u32 256, 32
        %3501 = vbcast.lane.b32.xlu0 %v3483, %s3500
        %v3502 = vpop.permute.xlu0 %3501
        %s3504 = sor.u32 256, 40
        %3505 = vbcast.lane.b32.xlu0 %v3483, %s3504
        %v3506 = vpop.permute.xlu0 %3505
        %s3508 = sor.u32 256, 48
        %3509 = vbcast.lane.b32.xlu0 %v3483, %s3508
        %v3510 = vpop.permute.xlu0 %3509
        %s3512 = sor.u32 256, 56
        %3513 = vbcast.lane.b32.xlu0 %v3483, %s3512
        %v3514 = vpop.permute.xlu0 %3513
        %s3516 = sor.u32 256, 64
        %3517 = vbcast.lane.b32.xlu0 %v3483, %s3516
        %v3518 = vpop.permute.xlu0 %3517
        %s3520 = sor.u32 256, 72
        %3521 = vbcast.lane.b32.xlu0 %v3483, %s3520
        %v3522 = vpop.permute.xlu0 %3521
        %s3524 = sor.u32 256, 80
        %3525 = vbcast.lane.b32.xlu0 %v3483, %s3524
        %v3526 = vpop.permute.xlu0 %3525
        %s3528 = sor.u32 256, 88
        %3529 = vbcast.lane.b32.xlu0 %v3483, %s3528
        %v3530 = vpop.permute.xlu0 %3529
        %s3532 = sor.u32 256, 96
        %3533 = vbcast.lane.b32.xlu0 %v3483, %s3532
        %v3534 = vpop.permute.xlu0 %3533
        %s3536 = sor.u32 256, 104
        %3537 = vbcast.lane.b32.xlu0 %v3483, %s3536
        %v3538 = vpop.permute.xlu0 %3537
        %s3540 = sor.u32 256, 112
        %3541 = vbcast.lane.b32.xlu0 %v3483, %s3540
        %v3542 = vpop.permute.xlu0 %3541
        %s3544 = sor.u32 256, 120
        %3545 = vbcast.lane.b32.xlu0 %v3483, %s3544
        %v3546 = vpop.permute.xlu0 %3545
        %v3547 = vlaneseq
        %v3548 = vshrl.u32 %v3547, 7
        %v3549 = vsub.s32 1, %v3548
        %v3550 = vrot.slane %v509, %v3549
        %3552 = vbcast.lane.b32.xlu0 %v3550, 256
        %v3553 = vpop.permute.xlu0 %3552
        %s3555 = sor.u32 256, 8
        %3556 = vbcast.lane.b32.xlu0 %v3550, %s3555
        %v3557 = vpop.permute.xlu0 %3556
        %s3559 = sor.u32 256, 16
        %3560 = vbcast.lane.b32.xlu0 %v3550, %s3559
        %v3561 = vpop.permute.xlu0 %3560
        %s3563 = sor.u32 256, 24
        %3564 = vbcast.lane.b32.xlu0 %v3550, %s3563
        %v3565 = vpop.permute.xlu0 %3564
        %s3567 = sor.u32 256, 32
        %3568 = vbcast.lane.b32.xlu0 %v3550, %s3567
        %v3569 = vpop.permute.xlu0 %3568
        %s3571 = sor.u32 256, 40
        %3572 = vbcast.lane.b32.xlu0 %v3550, %s3571
        %v3573 = vpop.permute.xlu0 %3572
        %s3575 = sor.u32 256, 48
        %3576 = vbcast.lane.b32.xlu0 %v3550, %s3575
        %v3577 = vpop.permute.xlu0 %3576
        %s3579 = sor.u32 256, 56
        %3580 = vbcast.lane.b32.xlu0 %v3550, %s3579
        %v3581 = vpop.permute.xlu0 %3580
        %s3583 = sor.u32 256, 64
        %3584 = vbcast.lane.b32.xlu0 %v3550, %s3583
        %v3585 = vpop.permute.xlu0 %3584
        %s3587 = sor.u32 256, 72
        %3588 = vbcast.lane.b32.xlu0 %v3550, %s3587
        %v3589 = vpop.permute.xlu0 %3588
        %s3591 = sor.u32 256, 80
        %3592 = vbcast.lane.b32.xlu0 %v3550, %s3591
        %v3593 = vpop.permute.xlu0 %3592
        %s3595 = sor.u32 256, 88
        %3596 = vbcast.lane.b32.xlu0 %v3550, %s3595
        %v3597 = vpop.permute.xlu0 %3596
        %s3599 = sor.u32 256, 96
        %3600 = vbcast.lane.b32.xlu0 %v3550, %s3599
        %v3601 = vpop.permute.xlu0 %3600
        %s3603 = sor.u32 256, 104
        %3604 = vbcast.lane.b32.xlu0 %v3550, %s3603
        %v3605 = vpop.permute.xlu0 %3604
        %s3607 = sor.u32 256, 112
        %3608 = vbcast.lane.b32.xlu0 %v3550, %s3607
        %v3609 = vpop.permute.xlu0 %3608
        %s3611 = sor.u32 256, 120
        %3612 = vbcast.lane.b32.xlu0 %v3550, %s3611
        %v3613 = vpop.permute.xlu0 %3612
        %v3614 = vlaneseq
        %v3615 = vshrl.u32 %v3614, 7
        %v3616 = vsub.s32 2, %v3615
        %v3617 = vrot.slane %v509, %v3616
        %3619 = vbcast.lane.b32.xlu0 %v3617, 256
        %v3620 = vpop.permute.xlu0 %3619
        %s3622 = sor.u32 256, 8
        %3623 = vbcast.lane.b32.xlu0 %v3617, %s3622
        %v3624 = vpop.permute.xlu0 %3623
        %s3626 = sor.u32 256, 16
        %3627 = vbcast.lane.b32.xlu0 %v3617, %s3626
        %v3628 = vpop.permute.xlu0 %3627
        %s3630 = sor.u32 256, 24
        %3631 = vbcast.lane.b32.xlu0 %v3617, %s3630
        %v3632 = vpop.permute.xlu0 %3631
        %s3634 = sor.u32 256, 32
        %3635 = vbcast.lane.b32.xlu0 %v3617, %s3634
        %v3636 = vpop.permute.xlu0 %3635
        %s3638 = sor.u32 256, 40
        %3639 = vbcast.lane.b32.xlu0 %v3617, %s3638
        %v3640 = vpop.permute.xlu0 %3639
        %s3642 = sor.u32 256, 48
        %3643 = vbcast.lane.b32.xlu0 %v3617, %s3642
        %v3644 = vpop.permute.xlu0 %3643
        %s3646 = sor.u32 256, 56
        %3647 = vbcast.lane.b32.xlu0 %v3617, %s3646
        %v3648 = vpop.permute.xlu0 %3647
        %s3650 = sor.u32 256, 64
        %3651 = vbcast.lane.b32.xlu0 %v3617, %s3650
        %v3652 = vpop.permute.xlu0 %3651
        %s3654 = sor.u32 256, 72
        %3655 = vbcast.lane.b32.xlu0 %v3617, %s3654
        %v3656 = vpop.permute.xlu0 %3655
        %s3658 = sor.u32 256, 80
        %3659 = vbcast.lane.b32.xlu0 %v3617, %s3658
        %v3660 = vpop.permute.xlu0 %3659
        %s3662 = sor.u32 256, 88
        %3663 = vbcast.lane.b32.xlu0 %v3617, %s3662
        %v3664 = vpop.permute.xlu0 %3663
        %s3666 = sor.u32 256, 96
        %3667 = vbcast.lane.b32.xlu0 %v3617, %s3666
        %v3668 = vpop.permute.xlu0 %3667
        %s3670 = sor.u32 256, 104
        %3671 = vbcast.lane.b32.xlu0 %v3617, %s3670
        %v3672 = vpop.permute.xlu0 %3671
        %s3674 = sor.u32 256, 112
        %3675 = vbcast.lane.b32.xlu0 %v3617, %s3674
        %v3676 = vpop.permute.xlu0 %3675
        %s3678 = sor.u32 256, 120
        %3679 = vbcast.lane.b32.xlu0 %v3617, %s3678
        %v3680 = vpop.permute.xlu0 %3679
        %v3681 = vlaneseq
        %v3682 = vshrl.u32 %v3681, 7
        %v3683 = vsub.s32 3, %v3682
        %v3684 = vrot.slane %v509, %v3683
        %3686 = vbcast.lane.b32.xlu0 %v3684, 256
        %v3687 = vpop.permute.xlu0 %3686
        %s3689 = sor.u32 256, 8
        %3690 = vbcast.lane.b32.xlu0 %v3684, %s3689
        %v3691 = vpop.permute.xlu0 %3690
        %s3693 = sor.u32 256, 16
        %3694 = vbcast.lane.b32.xlu0 %v3684, %s3693
        %v3695 = vpop.permute.xlu0 %3694
        %s3697 = sor.u32 256, 24
        %3698 = vbcast.lane.b32.xlu0 %v3684, %s3697
        %v3699 = vpop.permute.xlu0 %3698
        %s3701 = sor.u32 256, 32
        %3702 = vbcast.lane.b32.xlu0 %v3684, %s3701
        %v3703 = vpop.permute.xlu0 %3702
        %s3705 = sor.u32 256, 40
        %3706 = vbcast.lane.b32.xlu0 %v3684, %s3705
        %v3707 = vpop.permute.xlu0 %3706
        %s3709 = sor.u32 256, 48
        %3710 = vbcast.lane.b32.xlu0 %v3684, %s3709
        %v3711 = vpop.permute.xlu0 %3710
        %s3713 = sor.u32 256, 56
        %3714 = vbcast.lane.b32.xlu0 %v3684, %s3713
        %v3715 = vpop.permute.xlu0 %3714
        %s3717 = sor.u32 256, 64
        %3718 = vbcast.lane.b32.xlu0 %v3684, %s3717
        %v3719 = vpop.permute.xlu0 %3718
        %s3721 = sor.u32 256, 72
        %3722 = vbcast.lane.b32.xlu0 %v3684, %s3721
        %v3723 = vpop.permute.xlu0 %3722
        %s3725 = sor.u32 256, 80
        %3726 = vbcast.lane.b32.xlu0 %v3684, %s3725
        %v3727 = vpop.permute.xlu0 %3726
        %s3729 = sor.u32 256, 88
        %3730 = vbcast.lane.b32.xlu0 %v3684, %s3729
        %v3731 = vpop.permute.xlu0 %3730
        %s3733 = sor.u32 256, 96
        %3734 = vbcast.lane.b32.xlu0 %v3684, %s3733
        %v3735 = vpop.permute.xlu0 %3734
        %s3737 = sor.u32 256, 104
        %3738 = vbcast.lane.b32.xlu0 %v3684, %s3737
        %v3739 = vpop.permute.xlu0 %3738
        %s3741 = sor.u32 256, 112
        %3742 = vbcast.lane.b32.xlu0 %v3684, %s3741
        %v3743 = vpop.permute.xlu0 %3742
        %s3745 = sor.u32 256, 120
        %3746 = vbcast.lane.b32.xlu0 %v3684, %s3745
        %v3747 = vpop.permute.xlu0 %3746
        %v3748 = vlaneseq
        %v3749 = vshrl.u32 %v3748, 7
        %v3750 = vsub.s32 4, %v3749
        %v3751 = vrot.slane %v509, %v3750
        %3753 = vbcast.lane.b32.xlu0 %v3751, 256
        %v3754 = vpop.permute.xlu0 %3753
        %s3756 = sor.u32 256, 8
        %3757 = vbcast.lane.b32.xlu0 %v3751, %s3756
        %v3758 = vpop.permute.xlu0 %3757
        %s3760 = sor.u32 256, 16
        %3761 = vbcast.lane.b32.xlu0 %v3751, %s3760
        %v3762 = vpop.permute.xlu0 %3761
        %s3764 = sor.u32 256, 24
        %3765 = vbcast.lane.b32.xlu0 %v3751, %s3764
        %v3766 = vpop.permute.xlu0 %3765
        %s3768 = sor.u32 256, 32
        %3769 = vbcast.lane.b32.xlu0 %v3751, %s3768
        %v3770 = vpop.permute.xlu0 %3769
        %s3772 = sor.u32 256, 40
        %3773 = vbcast.lane.b32.xlu0 %v3751, %s3772
        %v3774 = vpop.permute.xlu0 %3773
        %s3776 = sor.u32 256, 48
        %3777 = vbcast.lane.b32.xlu0 %v3751, %s3776
        %v3778 = vpop.permute.xlu0 %3777
        %s3780 = sor.u32 256, 56
        %3781 = vbcast.lane.b32.xlu0 %v3751, %s3780
        %v3782 = vpop.permute.xlu0 %3781
        %s3784 = sor.u32 256, 64
        %3785 = vbcast.lane.b32.xlu0 %v3751, %s3784
        %v3786 = vpop.permute.xlu0 %3785
        %s3788 = sor.u32 256, 72
        %3789 = vbcast.lane.b32.xlu0 %v3751, %s3788
        %v3790 = vpop.permute.xlu0 %3789
        %s3792 = sor.u32 256, 80
        %3793 = vbcast.lane.b32.xlu0 %v3751, %s3792
        %v3794 = vpop.permute.xlu0 %3793
        %s3796 = sor.u32 256, 88
        %3797 = vbcast.lane.b32.xlu0 %v3751, %s3796
        %v3798 = vpop.permute.xlu0 %3797
        %s3800 = sor.u32 256, 96
        %3801 = vbcast.lane.b32.xlu0 %v3751, %s3800
        %v3802 = vpop.permute.xlu0 %3801
        %s3804 = sor.u32 256, 104
        %3805 = vbcast.lane.b32.xlu0 %v3751, %s3804
        %v3806 = vpop.permute.xlu0 %3805
        %s3808 = sor.u32 256, 112
        %3809 = vbcast.lane.b32.xlu0 %v3751, %s3808
        %v3810 = vpop.permute.xlu0 %3809
        %s3812 = sor.u32 256, 120
        %3813 = vbcast.lane.b32.xlu0 %v3751, %s3812
        %v3814 = vpop.permute.xlu0 %3813
        %v3815 = vlaneseq
        %v3816 = vshrl.u32 %v3815, 7
        %v3817 = vsub.s32 5, %v3816
        %v3818 = vrot.slane %v509, %v3817
        %3820 = vbcast.lane.b32.xlu0 %v3818, 256
        %v3821 = vpop.permute.xlu0 %3820
        %s3823 = sor.u32 256, 8
        %3824 = vbcast.lane.b32.xlu0 %v3818, %s3823
        %v3825 = vpop.permute.xlu0 %3824
        %s3827 = sor.u32 256, 16
        %3828 = vbcast.lane.b32.xlu0 %v3818, %s3827
        %v3829 = vpop.permute.xlu0 %3828
        %s3831 = sor.u32 256, 24
        %3832 = vbcast.lane.b32.xlu0 %v3818, %s3831
        %v3833 = vpop.permute.xlu0 %3832
        %s3835 = sor.u32 256, 32
        %3836 = vbcast.lane.b32.xlu0 %v3818, %s3835
        %v3837 = vpop.permute.xlu0 %3836
        %s3839 = sor.u32 256, 40
        %3840 = vbcast.lane.b32.xlu0 %v3818, %s3839
        %v3841 = vpop.permute.xlu0 %3840
        %s3843 = sor.u32 256, 48
        %3844 = vbcast.lane.b32.xlu0 %v3818, %s3843
        %v3845 = vpop.permute.xlu0 %3844
        %s3847 = sor.u32 256, 56
        %3848 = vbcast.lane.b32.xlu0 %v3818, %s3847
        %v3849 = vpop.permute.xlu0 %3848
        %s3851 = sor.u32 256, 64
        %3852 = vbcast.lane.b32.xlu0 %v3818, %s3851
        %v3853 = vpop.permute.xlu0 %3852
        %s3855 = sor.u32 256, 72
        %3856 = vbcast.lane.b32.xlu0 %v3818, %s3855
        %v3857 = vpop.permute.xlu0 %3856
        %s3859 = sor.u32 256, 80
        %3860 = vbcast.lane.b32.xlu0 %v3818, %s3859
        %v3861 = vpop.permute.xlu0 %3860
        %s3863 = sor.u32 256, 88
        %3864 = vbcast.lane.b32.xlu0 %v3818, %s3863
        %v3865 = vpop.permute.xlu0 %3864
        %s3867 = sor.u32 256, 96
        %3868 = vbcast.lane.b32.xlu0 %v3818, %s3867
        %v3869 = vpop.permute.xlu0 %3868
        %s3871 = sor.u32 256, 104
        %3872 = vbcast.lane.b32.xlu0 %v3818, %s3871
        %v3873 = vpop.permute.xlu0 %3872
        %s3875 = sor.u32 256, 112
        %3876 = vbcast.lane.b32.xlu0 %v3818, %s3875
        %v3877 = vpop.permute.xlu0 %3876
        %s3879 = sor.u32 256, 120
        %3880 = vbcast.lane.b32.xlu0 %v3818, %s3879
        %v3881 = vpop.permute.xlu0 %3880
        %v3882 = vlaneseq
        %v3883 = vshrl.u32 %v3882, 7
        %v3884 = vsub.s32 6, %v3883
        %v3885 = vrot.slane %v509, %v3884
        %3887 = vbcast.lane.b32.xlu0 %v3885, 256
        %v3888 = vpop.permute.xlu0 %3887
        %s3890 = sor.u32 256, 8
        %3891 = vbcast.lane.b32.xlu0 %v3885, %s3890
        %v3892 = vpop.permute.xlu0 %3891
        %s3894 = sor.u32 256, 16
        %3895 = vbcast.lane.b32.xlu0 %v3885, %s3894
        %v3896 = vpop.permute.xlu0 %3895
        %s3898 = sor.u32 256, 24
        %3899 = vbcast.lane.b32.xlu0 %v3885, %s3898
        %v3900 = vpop.permute.xlu0 %3899
        %s3902 = sor.u32 256, 32
        %3903 = vbcast.lane.b32.xlu0 %v3885, %s3902
        %v3904 = vpop.permute.xlu0 %3903
        %s3906 = sor.u32 256, 40
        %3907 = vbcast.lane.b32.xlu0 %v3885, %s3906
        %v3908 = vpop.permute.xlu0 %3907
        %s3910 = sor.u32 256, 48
        %3911 = vbcast.lane.b32.xlu0 %v3885, %s3910
        %v3912 = vpop.permute.xlu0 %3911
        %s3914 = sor.u32 256, 56
        %3915 = vbcast.lane.b32.xlu0 %v3885, %s3914
        %v3916 = vpop.permute.xlu0 %3915
        %s3918 = sor.u32 256, 64
        %3919 = vbcast.lane.b32.xlu0 %v3885, %s3918
        %v3920 = vpop.permute.xlu0 %3919
        %s3922 = sor.u32 256, 72
        %3923 = vbcast.lane.b32.xlu0 %v3885, %s3922
        %v3924 = vpop.permute.xlu0 %3923
        %s3926 = sor.u32 256, 80
        %3927 = vbcast.lane.b32.xlu0 %v3885, %s3926
        %v3928 = vpop.permute.xlu0 %3927
        %s3930 = sor.u32 256, 88
        %3931 = vbcast.lane.b32.xlu0 %v3885, %s3930
        %v3932 = vpop.permute.xlu0 %3931
        %s3934 = sor.u32 256, 96
        %3935 = vbcast.lane.b32.xlu0 %v3885, %s3934
        %v3936 = vpop.permute.xlu0 %3935
        %s3938 = sor.u32 256, 104
        %3939 = vbcast.lane.b32.xlu0 %v3885, %s3938
        %v3940 = vpop.permute.xlu0 %3939
        %s3942 = sor.u32 256, 112
        %3943 = vbcast.lane.b32.xlu0 %v3885, %s3942
        %v3944 = vpop.permute.xlu0 %3943
        %s3946 = sor.u32 256, 120
        %3947 = vbcast.lane.b32.xlu0 %v3885, %s3946
        %v3948 = vpop.permute.xlu0 %3947
        %v3949 = vlaneseq
        %v3950 = vshrl.u32 %v3949, 7
        %v3951 = vsub.s32 7, %v3950
        %v3952 = vrot.slane %v509, %v3951
        %3954 = vbcast.lane.b32.xlu0 %v3952, 256
        %v3955 = vpop.permute.xlu0 %3954
        %s3957 = sor.u32 256, 8
        %3958 = vbcast.lane.b32.xlu0 %v3952, %s3957
        %v3959 = vpop.permute.xlu0 %3958
        %s3961 = sor.u32 256, 16
        %3962 = vbcast.lane.b32.xlu0 %v3952, %s3961
        %v3963 = vpop.permute.xlu0 %3962
        %s3965 = sor.u32 256, 24
        %3966 = vbcast.lane.b32.xlu0 %v3952, %s3965
        %v3967 = vpop.permute.xlu0 %3966
        %s3969 = sor.u32 256, 32
        %3970 = vbcast.lane.b32.xlu0 %v3952, %s3969
        %v3971 = vpop.permute.xlu0 %3970
        %s3973 = sor.u32 256, 40
        %3974 = vbcast.lane.b32.xlu0 %v3952, %s3973
        %v3975 = vpop.permute.xlu0 %3974
        %s3977 = sor.u32 256, 48
        %3978 = vbcast.lane.b32.xlu0 %v3952, %s3977
        %v3979 = vpop.permute.xlu0 %3978
        %s3981 = sor.u32 256, 56
        %3982 = vbcast.lane.b32.xlu0 %v3952, %s3981
        %v3983 = vpop.permute.xlu0 %3982
        %s3985 = sor.u32 256, 64
        %3986 = vbcast.lane.b32.xlu0 %v3952, %s3985
        %v3987 = vpop.permute.xlu0 %3986
        %s3989 = sor.u32 256, 72
        %3990 = vbcast.lane.b32.xlu0 %v3952, %s3989
        %v3991 = vpop.permute.xlu0 %3990
        %s3993 = sor.u32 256, 80
        %3994 = vbcast.lane.b32.xlu0 %v3952, %s3993
        %v3995 = vpop.permute.xlu0 %3994
        %s3997 = sor.u32 256, 88
        %3998 = vbcast.lane.b32.xlu0 %v3952, %s3997
        %v3999 = vpop.permute.xlu0 %3998
        %s4001 = sor.u32 256, 96
        %4002 = vbcast.lane.b32.xlu0 %v3952, %s4001
        %v4003 = vpop.permute.xlu0 %4002
        %s4005 = sor.u32 256, 104
        %4006 = vbcast.lane.b32.xlu0 %v3952, %s4005
        %v4007 = vpop.permute.xlu0 %4006
        %s4009 = sor.u32 256, 112
        %4010 = vbcast.lane.b32.xlu0 %v3952, %s4009
        %v4011 = vpop.permute.xlu0 %4010
        %s4013 = sor.u32 256, 120
        %4014 = vbcast.lane.b32.xlu0 %v3952, %s4013
        %v4015 = vpop.permute.xlu0 %4014
        %v4272 = vsel %vm2686, %v2950, -inf
        %v4273 = vsel %vm2687, %v2954, -inf
        %v4274 = vsel %vm2688, %v2958, -inf
        %v4275 = vsel %vm2689, %v2962, -inf
        %v4276 = vsel %vm2690, %v2966, -inf
        %v4277 = vsel %vm2691, %v2970, -inf
        %v4278 = vsel %vm2692, %v2974, -inf
        %v4279 = vsel %vm2693, %v2978, -inf
        %v4280 = vsel %vm2694, %v2982, -inf
        %v4281 = vsel %vm2695, %v2986, -inf
        %v4282 = vsel %vm2696, %v2990, -inf
        %v4283 = vsel %vm2697, %v2994, -inf
        %v4284 = vsel %vm2698, %v2998, -inf
        %v4285 = vsel %vm2699, %v3002, -inf
        %v4286 = vsel %vm2700, %v3006, -inf
        %v4287 = vsel %vm2701, %v3010, -inf
        %v4288 = vsel %vm2702, %v3017, -inf
        %v4289 = vsel %vm2703, %v3021, -inf
        %v4290 = vsel %vm2704, %v3025, -inf
        %v4291 = vsel %vm2705, %v3029, -inf
        %v4292 = vsel %vm2706, %v3033, -inf
        %v4293 = vsel %vm2707, %v3037, -inf
        %v4294 = vsel %vm2708, %v3041, -inf
        %v4295 = vsel %vm2709, %v3045, -inf
        %v4296 = vsel %vm2710, %v3049, -inf
        %v4297 = vsel %vm2711, %v3053, -inf
        %v4298 = vsel %vm2712, %v3057, -inf
        %v4299 = vsel %vm2713, %v3061, -inf
        %v4300 = vsel %vm2714, %v3065, -inf
        %v4301 = vsel %vm2715, %v3069, -inf
        %v4302 = vsel %vm2716, %v3073, -inf
        %v4303 = vsel %vm2717, %v3077, -inf
        %v4304 = vsel %vm2718, %v3084, -inf
        %v4305 = vsel %vm2719, %v3088, -inf
        %v4306 = vsel %vm2720, %v3092, -inf
        %v4307 = vsel %vm2721, %v3096, -inf
        %v4308 = vsel %vm2722, %v3100, -inf
        %v4309 = vsel %vm2723, %v3104, -inf
        %v4310 = vsel %vm2724, %v3108, -inf
        %v4311 = vsel %vm2725, %v3112, -inf
        %v4312 = vsel %vm2726, %v3116, -inf
        %v4313 = vsel %vm2727, %v3120, -inf
        %v4314 = vsel %vm2728, %v3124, -inf
        %v4315 = vsel %vm2729, %v3128, -inf
        %v4316 = vsel %vm2730, %v3132, -inf
        %v4317 = vsel %vm2731, %v3136, -inf
        %v4318 = vsel %vm2732, %v3140, -inf
        %v4319 = vsel %vm2733, %v3144, -inf
        %v4320 = vsel %vm2734, %v3151, -inf
        %v4321 = vsel %vm2735, %v3155, -inf
        %v4322 = vsel %vm2736, %v3159, -inf
        %v4323 = vsel %vm2737, %v3163, -inf
        %v4324 = vsel %vm2738, %v3167, -inf
        %v4325 = vsel %vm2739, %v3171, -inf
        %v4326 = vsel %vm2740, %v3175, -inf
        %v4327 = vsel %vm2741, %v3179, -inf
        %v4328 = vsel %vm2742, %v3183, -inf
        %v4329 = vsel %vm2743, %v3187, -inf
        %v4330 = vsel %vm2744, %v3191, -inf
        %v4331 = vsel %vm2745, %v3195, -inf
        %v4332 = vsel %vm2746, %v3199, -inf
        %v4333 = vsel %vm2747, %v3203, -inf
        %v4334 = vsel %vm2748, %v3207, -inf
        %v4335 = vsel %vm2749, %v3211, -inf
        %v4336 = vsel %vm2750, %v3218, -inf
        %v4337 = vsel %vm2751, %v3222, -inf
        %v4338 = vsel %vm2752, %v3226, -inf
        %v4339 = vsel %vm2753, %v3230, -inf
        %v4340 = vsel %vm2754, %v3234, -inf
        %v4341 = vsel %vm2755, %v3238, -inf
        %v4342 = vsel %vm2756, %v3242, -inf
        %v4343 = vsel %vm2757, %v3246, -inf
        %v4344 = vsel %vm2758, %v3250, -inf
        %v4345 = vsel %vm2759, %v3254, -inf
        %v4346 = vsel %vm2760, %v3258, -inf
        %v4347 = vsel %vm2761, %v3262, -inf
        %v4348 = vsel %vm2762, %v3266, -inf
        %v4349 = vsel %vm2763, %v3270, -inf
        %v4350 = vsel %vm2764, %v3274, -inf
        %v4351 = vsel %vm2765, %v3278, -inf
        %v4352 = vsel %vm2766, %v3285, -inf
        %v4353 = vsel %vm2767, %v3289, -inf
        %v4354 = vsel %vm2768, %v3293, -inf
        %v4355 = vsel %vm2769, %v3297, -inf
        %v4356 = vsel %vm2770, %v3301, -inf
        %v4357 = vsel %vm2771, %v3305, -inf
        %v4358 = vsel %vm2772, %v3309, -inf
        %v4359 = vsel %vm2773, %v3313, -inf
        %v4360 = vsel %vm2774, %v3317, -inf
        %v4361 = vsel %vm2775, %v3321, -inf
        %v4362 = vsel %vm2776, %v3325, -inf
        %v4363 = vsel %vm2777, %v3329, -inf
        %v4364 = vsel %vm2778, %v3333, -inf
        %v4365 = vsel %vm2779, %v3337, -inf
        %v4366 = vsel %vm2780, %v3341, -inf
        %v4367 = vsel %vm2781, %v3345, -inf
        %v4368 = vsel %vm2782, %v3352, -inf
        %v4369 = vsel %vm2783, %v3356, -inf
        %v4370 = vsel %vm2784, %v3360, -inf
        %v4371 = vsel %vm2785, %v3364, -inf
        %v4372 = vsel %vm2786, %v3368, -inf
        %v4373 = vsel %vm2787, %v3372, -inf
        %v4374 = vsel %vm2788, %v3376, -inf
        %v4375 = vsel %vm2789, %v3380, -inf
        %v4376 = vsel %vm2790, %v3384, -inf
        %v4377 = vsel %vm2791, %v3388, -inf
        %v4378 = vsel %vm2792, %v3392, -inf
        %v4379 = vsel %vm2793, %v3396, -inf
        %v4380 = vsel %vm2794, %v3400, -inf
        %v4381 = vsel %vm2795, %v3404, -inf
        %v4382 = vsel %vm2796, %v3408, -inf
        %v4383 = vsel %vm2797, %v3412, -inf
        %v4384 = vsel %vm2798, %v3419, -inf
        %v4385 = vsel %vm2799, %v3423, -inf
        %v4386 = vsel %vm2800, %v3427, -inf
        %v4387 = vsel %vm2801, %v3431, -inf
        %v4388 = vsel %vm2802, %v3435, -inf
        %v4389 = vsel %vm2803, %v3439, -inf
        %v4390 = vsel %vm2804, %v3443, -inf
        %v4391 = vsel %vm2805, %v3447, -inf
        %v4392 = vsel %vm2806, %v3451, -inf
        %v4393 = vsel %vm2807, %v3455, -inf
        %v4394 = vsel %vm2808, %v3459, -inf
        %v4395 = vsel %vm2809, %v3463, -inf
        %v4396 = vsel %vm2810, %v3467, -inf
        %v4397 = vsel %vm2811, %v3471, -inf
        %v4398 = vsel %vm2812, %v3475, -inf
        %v4399 = vsel %vm2813, %v3479, -inf
        %v4400 = vsel %vm2814, %v3486, -inf
        %v4401 = vsel %vm2815, %v3490, -inf
        %v4402 = vsel %vm2816, %v3494, -inf
        %v4403 = vsel %vm2817, %v3498, -inf
        %v4404 = vsel %vm2818, %v3502, -inf
        %v4405 = vsel %vm2819, %v3506, -inf
        %v4406 = vsel %vm2820, %v3510, -inf
        %v4407 = vsel %vm2821, %v3514, -inf
        %v4408 = vsel %vm2822, %v3518, -inf
        %v4409 = vsel %vm2823, %v3522, -inf
        %v4410 = vsel %vm2824, %v3526, -inf
        %v4411 = vsel %vm2825, %v3530, -inf
        %v4412 = vsel %vm2826, %v3534, -inf
        %v4413 = vsel %vm2827, %v3538, -inf
        %v4414 = vsel %vm2828, %v3542, -inf
        %v4415 = vsel %vm2829, %v3546, -inf
        %v4416 = vsel %vm2830, %v3553, -inf
        %v4417 = vsel %vm2831, %v3557, -inf
        %v4418 = vsel %vm2832, %v3561, -inf
        %v4419 = vsel %vm2833, %v3565, -inf
        %v4420 = vsel %vm2834, %v3569, -inf
        %v4421 = vsel %vm2835, %v3573, -inf
        %v4422 = vsel %vm2836, %v3577, -inf
        %v4423 = vsel %vm2837, %v3581, -inf
        %v4424 = vsel %vm2838, %v3585, -inf
        %v4425 = vsel %vm2839, %v3589, -inf
        %v4426 = vsel %vm2840, %v3593, -inf
        %v4427 = vsel %vm2841, %v3597, -inf
        %v4428 = vsel %vm2842, %v3601, -inf
        %v4429 = vsel %vm2843, %v3605, -inf
        %v4430 = vsel %vm2844, %v3609, -inf
        %v4431 = vsel %vm2845, %v3613, -inf
        %v4432 = vsel %vm2846, %v3620, -inf
        %v4433 = vsel %vm2847, %v3624, -inf
        %v4434 = vsel %vm2848, %v3628, -inf
        %v4435 = vsel %vm2849, %v3632, -inf
        %v4436 = vsel %vm2850, %v3636, -inf
        %v4437 = vsel %vm2851, %v3640, -inf
        %v4438 = vsel %vm2852, %v3644, -inf
        %v4439 = vsel %vm2853, %v3648, -inf
        %v4440 = vsel %vm2854, %v3652, -inf
        %v4441 = vsel %vm2855, %v3656, -inf
        %v4442 = vsel %vm2856, %v3660, -inf
        %v4443 = vsel %vm2857, %v3664, -inf
        %v4444 = vsel %vm2858, %v3668, -inf
        %v4445 = vsel %vm2859, %v3672, -inf
        %v4446 = vsel %vm2860, %v3676, -inf
        %v4447 = vsel %vm2861, %v3680, -inf
        %v4448 = vsel %vm2862, %v3687, -inf
        %v4449 = vsel %vm2863, %v3691, -inf
        %v4450 = vsel %vm2864, %v3695, -inf
        %v4451 = vsel %vm2865, %v3699, -inf
        %v4452 = vsel %vm2866, %v3703, -inf
        %v4453 = vsel %vm2867, %v3707, -inf
        %v4454 = vsel %vm2868, %v3711, -inf
        %v4455 = vsel %vm2869, %v3715, -inf
        %v4456 = vsel %vm2870, %v3719, -inf
        %v4457 = vsel %vm2871, %v3723, -inf
        %v4458 = vsel %vm2872, %v3727, -inf
        %v4459 = vsel %vm2873, %v3731, -inf
        %v4460 = vsel %vm2874, %v3735, -inf
        %v4461 = vsel %vm2875, %v3739, -inf
        %v4462 = vsel %vm2876, %v3743, -inf
        %v4463 = vsel %vm2877, %v3747, -inf
        %v4464 = vsel %vm2878, %v3754, -inf
        %v4465 = vsel %vm2879, %v3758, -inf
        %v4466 = vsel %vm2880, %v3762, -inf
        %v4467 = vsel %vm2881, %v3766, -inf
        %v4468 = vsel %vm2882, %v3770, -inf
        %v4469 = vsel %vm2883, %v3774, -inf
        %v4470 = vsel %vm2884, %v3778, -inf
        %v4471 = vsel %vm2885, %v3782, -inf
        %v4472 = vsel %vm2886, %v3786, -inf
        %v4473 = vsel %vm2887, %v3790, -inf
        %v4474 = vsel %vm2888, %v3794, -inf
        %v4475 = vsel %vm2889, %v3798, -inf
        %v4476 = vsel %vm2890, %v3802, -inf
        %v4477 = vsel %vm2891, %v3806, -inf
        %v4478 = vsel %vm2892, %v3810, -inf
        %v4479 = vsel %vm2893, %v3814, -inf
        %v4480 = vsel %vm2894, %v3821, -inf
        %v4481 = vsel %vm2895, %v3825, -inf
        %v4482 = vsel %vm2896, %v3829, -inf
        %v4483 = vsel %vm2897, %v3833, -inf
        %v4484 = vsel %vm2898, %v3837, -inf
        %v4485 = vsel %vm2899, %v3841, -inf
        %v4486 = vsel %vm2900, %v3845, -inf
        %v4487 = vsel %vm2901, %v3849, -inf
        %v4488 = vsel %vm2902, %v3853, -inf
        %v4489 = vsel %vm2903, %v3857, -inf
        %v4490 = vsel %vm2904, %v3861, -inf
        %v4491 = vsel %vm2905, %v3865, -inf
        %v4492 = vsel %vm2906, %v3869, -inf
        %v4493 = vsel %vm2907, %v3873, -inf
        %v4494 = vsel %vm2908, %v3877, -inf
        %v4495 = vsel %vm2909, %v3881, -inf
        %v4496 = vsel %vm2910, %v3888, -inf
        %v4497 = vsel %vm2911, %v3892, -inf
        %v4498 = vsel %vm2912, %v3896, -inf
        %v4499 = vsel %vm2913, %v3900, -inf
        %v4500 = vsel %vm2914, %v3904, -inf
        %v4501 = vsel %vm2915, %v3908, -inf
        %v4502 = vsel %vm2916, %v3912, -inf
        %v4503 = vsel %vm2917, %v3916, -inf
        %v4504 = vsel %vm2918, %v3920, -inf
        %v4505 = vsel %vm2919, %v3924, -inf
        %v4506 = vsel %vm2920, %v3928, -inf
        %v4507 = vsel %vm2921, %v3932, -inf
        %v4508 = vsel %vm2922, %v3936, -inf
        %v4509 = vsel %vm2923, %v3940, -inf
        %v4510 = vsel %vm2924, %v3944, -inf
        %v4511 = vsel %vm2925, %v3948, -inf
        %v4512 = vsel %vm2926, %v3955, -inf
        %v4513 = vsel %vm2927, %v3959, -inf
        %v4514 = vsel %vm2928, %v3963, -inf
        %v4515 = vsel %vm2929, %v3967, -inf
        %v4516 = vsel %vm2930, %v3971, -inf
        %v4517 = vsel %vm2931, %v3975, -inf
        %v4518 = vsel %vm2932, %v3979, -inf
        %v4519 = vsel %vm2933, %v3983, -inf
        %v4520 = vsel %vm2934, %v3987, -inf
        %v4521 = vsel %vm2935, %v3991, -inf
        %v4522 = vsel %vm2936, %v3995, -inf
        %v4523 = vsel %vm2937, %v3999, -inf
        %v4524 = vsel %vm2938, %v4003, -inf
        %v4525 = vsel %vm2939, %v4007, -inf
        %v4526 = vsel %vm2940, %v4011, -inf
        %v4527 = vsel %vm2941, %v4015, -inf
        %4784 = vset.pattern.permute.xlu0 0
        %4785 = vperm.xlu0 %4784, %v4272
        %v4786 = vpop.permute.xlu0 %4785
        %4787 = vset.pattern.permute.xlu0 0
        %4788 = vperm.xlu0 %4787, %v4273
        %v4789 = vpop.permute.xlu0 %4788
        %4790 = vset.pattern.permute.xlu0 0
        %4791 = vperm.xlu0 %4790, %v4274
        %v4792 = vpop.permute.xlu0 %4791
        %4793 = vset.pattern.permute.xlu0 0
        %4794 = vperm.xlu0 %4793, %v4275
        %v4795 = vpop.permute.xlu0 %4794
        %4796 = vset.pattern.permute.xlu0 0
        %4797 = vperm.xlu0 %4796, %v4276
        %v4798 = vpop.permute.xlu0 %4797
        %4799 = vset.pattern.permute.xlu0 0
        %4800 = vperm.xlu0 %4799, %v4277
        %v4801 = vpop.permute.xlu0 %4800
        %4802 = vset.pattern.permute.xlu0 0
        %4803 = vperm.xlu0 %4802, %v4278
        %v4804 = vpop.permute.xlu0 %4803
        %4805 = vset.pattern.permute.xlu0 0
        %4806 = vperm.xlu0 %4805, %v4279
        %v4807 = vpop.permute.xlu0 %4806
        %4808 = vset.pattern.permute.xlu0 0
        %4809 = vperm.xlu0 %4808, %v4280
        %v4810 = vpop.permute.xlu0 %4809
        %4811 = vset.pattern.permute.xlu0 0
        %4812 = vperm.xlu0 %4811, %v4281
        %v4813 = vpop.permute.xlu0 %4812
        %4814 = vset.pattern.permute.xlu0 0
        %4815 = vperm.xlu0 %4814, %v4282
        %v4816 = vpop.permute.xlu0 %4815
        %4817 = vset.pattern.permute.xlu0 0
        %4818 = vperm.xlu0 %4817, %v4283
        %v4819 = vpop.permute.xlu0 %4818
        %4820 = vset.pattern.permute.xlu0 0
        %4821 = vperm.xlu0 %4820, %v4284
        %v4822 = vpop.permute.xlu0 %4821
        %4823 = vset.pattern.permute.xlu0 0
        %4824 = vperm.xlu0 %4823, %v4285
        %v4825 = vpop.permute.xlu0 %4824
        %4826 = vset.pattern.permute.xlu0 0
        %4827 = vperm.xlu0 %4826, %v4286
        %v4828 = vpop.permute.xlu0 %4827
        %4829 = vset.pattern.permute.xlu0 0
        %4830 = vperm.xlu0 %4829, %v4287
        %v4831 = vpop.permute.xlu0 %4830
        %4832 = vset.pattern.permute.xlu0 0
        %4833 = vperm.xlu0 %4832, %v4288
        %v4834 = vpop.permute.xlu0 %4833
        %4835 = vset.pattern.permute.xlu0 0
        %4836 = vperm.xlu0 %4835, %v4289
        %v4837 = vpop.permute.xlu0 %4836
        %4838 = vset.pattern.permute.xlu0 0
        %4839 = vperm.xlu0 %4838, %v4290
        %v4840 = vpop.permute.xlu0 %4839
        %4841 = vset.pattern.permute.xlu0 0
        %4842 = vperm.xlu0 %4841, %v4291
        %v4843 = vpop.permute.xlu0 %4842
        %4844 = vset.pattern.permute.xlu0 0
        %4845 = vperm.xlu0 %4844, %v4292
        %v4846 = vpop.permute.xlu0 %4845
        %4847 = vset.pattern.permute.xlu0 0
        %4848 = vperm.xlu0 %4847, %v4293
        %v4849 = vpop.permute.xlu0 %4848
        %4850 = vset.pattern.permute.xlu0 0
        %4851 = vperm.xlu0 %4850, %v4294
        %v4852 = vpop.permute.xlu0 %4851
        %4853 = vset.pattern.permute.xlu0 0
        %4854 = vperm.xlu0 %4853, %v4295
        %v4855 = vpop.permute.xlu0 %4854
        %4856 = vset.pattern.permute.xlu0 0
        %4857 = vperm.xlu0 %4856, %v4296
        %v4858 = vpop.permute.xlu0 %4857
        %4859 = vset.pattern.permute.xlu0 0
        %4860 = vperm.xlu0 %4859, %v4297
        %v4861 = vpop.permute.xlu0 %4860
        %4862 = vset.pattern.permute.xlu0 0
        %4863 = vperm.xlu0 %4862, %v4298
        %v4864 = vpop.permute.xlu0 %4863
        %4865 = vset.pattern.permute.xlu0 0
        %4866 = vperm.xlu0 %4865, %v4299
        %v4867 = vpop.permute.xlu0 %4866
        %4868 = vset.pattern.permute.xlu0 0
        %4869 = vperm.xlu0 %4868, %v4300
        %v4870 = vpop.permute.xlu0 %4869
        %4871 = vset.pattern.permute.xlu0 0
        %4872 = vperm.xlu0 %4871, %v4301
        %v4873 = vpop.permute.xlu0 %4872
        %4874 = vset.pattern.permute.xlu0 0
        %4875 = vperm.xlu0 %4874, %v4302
        %v4876 = vpop.permute.xlu0 %4875
        %4877 = vset.pattern.permute.xlu0 0
        %4878 = vperm.xlu0 %4877, %v4303
        %v4879 = vpop.permute.xlu0 %4878
        %4880 = vset.pattern.permute.xlu0 0
        %4881 = vperm.xlu0 %4880, %v4304
        %v4882 = vpop.permute.xlu0 %4881
        %4883 = vset.pattern.permute.xlu0 0
        %4884 = vperm.xlu0 %4883, %v4305
        %v4885 = vpop.permute.xlu0 %4884
        %4886 = vset.pattern.permute.xlu0 0
        %4887 = vperm.xlu0 %4886, %v4306
        %v4888 = vpop.permute.xlu0 %4887
        %4889 = vset.pattern.permute.xlu0 0
        %4890 = vperm.xlu0 %4889, %v4307
        %v4891 = vpop.permute.xlu0 %4890
        %4892 = vset.pattern.permute.xlu0 0
        %4893 = vperm.xlu0 %4892, %v4308
        %v4894 = vpop.permute.xlu0 %4893
        %4895 = vset.pattern.permute.xlu0 0
        %4896 = vperm.xlu0 %4895, %v4309
        %v4897 = vpop.permute.xlu0 %4896
        %4898 = vset.pattern.permute.xlu0 0
        %4899 = vperm.xlu0 %4898, %v4310
        %v4900 = vpop.permute.xlu0 %4899
        %4901 = vset.pattern.permute.xlu0 0
        %4902 = vperm.xlu0 %4901, %v4311
        %v4903 = vpop.permute.xlu0 %4902
        %4904 = vset.pattern.permute.xlu0 0
        %4905 = vperm.xlu0 %4904, %v4312
        %v4906 = vpop.permute.xlu0 %4905
        %4907 = vset.pattern.permute.xlu0 0
        %4908 = vperm.xlu0 %4907, %v4313
        %v4909 = vpop.permute.xlu0 %4908
        %4910 = vset.pattern.permute.xlu0 0
        %4911 = vperm.xlu0 %4910, %v4314
        %v4912 = vpop.permute.xlu0 %4911
        %4913 = vset.pattern.permute.xlu0 0
        %4914 = vperm.xlu0 %4913, %v4315
        %v4915 = vpop.permute.xlu0 %4914
        %4916 = vset.pattern.permute.xlu0 0
        %4917 = vperm.xlu0 %4916, %v4316
        %v4918 = vpop.permute.xlu0 %4917
        %4919 = vset.pattern.permute.xlu0 0
        %4920 = vperm.xlu0 %4919, %v4317
        %v4921 = vpop.permute.xlu0 %4920
        %4922 = vset.pattern.permute.xlu0 0
        %4923 = vperm.xlu0 %4922, %v4318
        %v4924 = vpop.permute.xlu0 %4923
        %4925 = vset.pattern.permute.xlu0 0
        %4926 = vperm.xlu0 %4925, %v4319
        %v4927 = vpop.permute.xlu0 %4926
        %4928 = vset.pattern.permute.xlu0 0
        %4929 = vperm.xlu0 %4928, %v4320
        %v4930 = vpop.permute.xlu0 %4929
        %4931 = vset.pattern.permute.xlu0 0
        %4932 = vperm.xlu0 %4931, %v4321
        %v4933 = vpop.permute.xlu0 %4932
        %4934 = vset.pattern.permute.xlu0 0
        %4935 = vperm.xlu0 %4934, %v4322
        %v4936 = vpop.permute.xlu0 %4935
        %4937 = vset.pattern.permute.xlu0 0
        %4938 = vperm.xlu0 %4937, %v4323
        %v4939 = vpop.permute.xlu0 %4938
        %4940 = vset.pattern.permute.xlu0 0
        %4941 = vperm.xlu0 %4940, %v4324
        %v4942 = vpop.permute.xlu0 %4941
        %4943 = vset.pattern.permute.xlu0 0
        %4944 = vperm.xlu0 %4943, %v4325
        %v4945 = vpop.permute.xlu0 %4944
        %4946 = vset.pattern.permute.xlu0 0
        %4947 = vperm.xlu0 %4946, %v4326
        %v4948 = vpop.permute.xlu0 %4947
        %4949 = vset.pattern.permute.xlu0 0
        %4950 = vperm.xlu0 %4949, %v4327
        %v4951 = vpop.permute.xlu0 %4950
        %4952 = vset.pattern.permute.xlu0 0
        %4953 = vperm.xlu0 %4952, %v4328
        %v4954 = vpop.permute.xlu0 %4953
        %4955 = vset.pattern.permute.xlu0 0
        %4956 = vperm.xlu0 %4955, %v4329
        %v4957 = vpop.permute.xlu0 %4956
        %4958 = vset.pattern.permute.xlu0 0
        %4959 = vperm.xlu0 %4958, %v4330
        %v4960 = vpop.permute.xlu0 %4959
        %4961 = vset.pattern.permute.xlu0 0
        %4962 = vperm.xlu0 %4961, %v4331
        %v4963 = vpop.permute.xlu0 %4962
        %4964 = vset.pattern.permute.xlu0 0
        %4965 = vperm.xlu0 %4964, %v4332
        %v4966 = vpop.permute.xlu0 %4965
        %4967 = vset.pattern.permute.xlu0 0
        %4968 = vperm.xlu0 %4967, %v4333
        %v4969 = vpop.permute.xlu0 %4968
        %4970 = vset.pattern.permute.xlu0 0
        %4971 = vperm.xlu0 %4970, %v4334
        %v4972 = vpop.permute.xlu0 %4971
        %4973 = vset.pattern.permute.xlu0 0
        %4974 = vperm.xlu0 %4973, %v4335
        %v4975 = vpop.permute.xlu0 %4974
        %4976 = vset.pattern.permute.xlu0 0
        %4977 = vperm.xlu0 %4976, %v4336
        %v4978 = vpop.permute.xlu0 %4977
        %4979 = vset.pattern.permute.xlu0 0
        %4980 = vperm.xlu0 %4979, %v4337
        %v4981 = vpop.permute.xlu0 %4980
        %4982 = vset.pattern.permute.xlu0 0
        %4983 = vperm.xlu0 %4982, %v4338
        %v4984 = vpop.permute.xlu0 %4983
        %4985 = vset.pattern.permute.xlu0 0
        %4986 = vperm.xlu0 %4985, %v4339
        %v4987 = vpop.permute.xlu0 %4986
        %4988 = vset.pattern.permute.xlu0 0
        %4989 = vperm.xlu0 %4988, %v4340
        %v4990 = vpop.permute.xlu0 %4989
        %4991 = vset.pattern.permute.xlu0 0
        %4992 = vperm.xlu0 %4991, %v4341
        %v4993 = vpop.permute.xlu0 %4992
        %4994 = vset.pattern.permute.xlu0 0
        %4995 = vperm.xlu0 %4994, %v4342
        %v4996 = vpop.permute.xlu0 %4995
        %4997 = vset.pattern.permute.xlu0 0
        %4998 = vperm.xlu0 %4997, %v4343
        %v4999 = vpop.permute.xlu0 %4998
        %5000 = vset.pattern.permute.xlu0 0
        %5001 = vperm.xlu0 %5000, %v4344
        %v5002 = vpop.permute.xlu0 %5001
        %5003 = vset.pattern.permute.xlu0 0
        %5004 = vperm.xlu0 %5003, %v4345
        %v5005 = vpop.permute.xlu0 %5004
        %5006 = vset.pattern.permute.xlu0 0
        %5007 = vperm.xlu0 %5006, %v4346
        %v5008 = vpop.permute.xlu0 %5007
        %5009 = vset.pattern.permute.xlu0 0
        %5010 = vperm.xlu0 %5009, %v4347
        %v5011 = vpop.permute.xlu0 %5010
        %5012 = vset.pattern.permute.xlu0 0
        %5013 = vperm.xlu0 %5012, %v4348
        %v5014 = vpop.permute.xlu0 %5013
        %5015 = vset.pattern.permute.xlu0 0
        %5016 = vperm.xlu0 %5015, %v4349
        %v5017 = vpop.permute.xlu0 %5016
        %5018 = vset.pattern.permute.xlu0 0
        %5019 = vperm.xlu0 %5018, %v4350
        %v5020 = vpop.permute.xlu0 %5019
        %5021 = vset.pattern.permute.xlu0 0
        %5022 = vperm.xlu0 %5021, %v4351
        %v5023 = vpop.permute.xlu0 %5022
        %5024 = vset.pattern.permute.xlu0 0
        %5025 = vperm.xlu0 %5024, %v4352
        %v5026 = vpop.permute.xlu0 %5025
        %5027 = vset.pattern.permute.xlu0 0
        %5028 = vperm.xlu0 %5027, %v4353
        %v5029 = vpop.permute.xlu0 %5028
        %5030 = vset.pattern.permute.xlu0 0
        %5031 = vperm.xlu0 %5030, %v4354
        %v5032 = vpop.permute.xlu0 %5031
        %5033 = vset.pattern.permute.xlu0 0
        %5034 = vperm.xlu0 %5033, %v4355
        %v5035 = vpop.permute.xlu0 %5034
        %5036 = vset.pattern.permute.xlu0 0
        %5037 = vperm.xlu0 %5036, %v4356
        %v5038 = vpop.permute.xlu0 %5037
        %5039 = vset.pattern.permute.xlu0 0
        %5040 = vperm.xlu0 %5039, %v4357
        %v5041 = vpop.permute.xlu0 %5040
        %5042 = vset.pattern.permute.xlu0 0
        %5043 = vperm.xlu0 %5042, %v4358
        %v5044 = vpop.permute.xlu0 %5043
        %5045 = vset.pattern.permute.xlu0 0
        %5046 = vperm.xlu0 %5045, %v4359
        %v5047 = vpop.permute.xlu0 %5046
        %5048 = vset.pattern.permute.xlu0 0
        %5049 = vperm.xlu0 %5048, %v4360
        %v5050 = vpop.permute.xlu0 %5049
        %5051 = vset.pattern.permute.xlu0 0
        %5052 = vperm.xlu0 %5051, %v4361
        %v5053 = vpop.permute.xlu0 %5052
        %5054 = vset.pattern.permute.xlu0 0
        %5055 = vperm.xlu0 %5054, %v4362
        %v5056 = vpop.permute.xlu0 %5055
        %5057 = vset.pattern.permute.xlu0 0
        %5058 = vperm.xlu0 %5057, %v4363
        %v5059 = vpop.permute.xlu0 %5058
        %5060 = vset.pattern.permute.xlu0 0
        %5061 = vperm.xlu0 %5060, %v4364
        %v5062 = vpop.permute.xlu0 %5061
        %5063 = vset.pattern.permute.xlu0 0
        %5064 = vperm.xlu0 %5063, %v4365
        %v5065 = vpop.permute.xlu0 %5064
        %5066 = vset.pattern.permute.xlu0 0
        %5067 = vperm.xlu0 %5066, %v4366
        %v5068 = vpop.permute.xlu0 %5067
        %5069 = vset.pattern.permute.xlu0 0
        %5070 = vperm.xlu0 %5069, %v4367
        %v5071 = vpop.permute.xlu0 %5070
        %5072 = vset.pattern.permute.xlu0 0
        %5073 = vperm.xlu0 %5072, %v4368
        %v5074 = vpop.permute.xlu0 %5073
        %5075 = vset.pattern.permute.xlu0 0
        %5076 = vperm.xlu0 %5075, %v4369
        %v5077 = vpop.permute.xlu0 %5076
        %5078 = vset.pattern.permute.xlu0 0
        %5079 = vperm.xlu0 %5078, %v4370
        %v5080 = vpop.permute.xlu0 %5079
        %5081 = vset.pattern.permute.xlu0 0
        %5082 = vperm.xlu0 %5081, %v4371
        %v5083 = vpop.permute.xlu0 %5082
        %5084 = vset.pattern.permute.xlu0 0
        %5085 = vperm.xlu0 %5084, %v4372
        %v5086 = vpop.permute.xlu0 %5085
        %5087 = vset.pattern.permute.xlu0 0
        %5088 = vperm.xlu0 %5087, %v4373
        %v5089 = vpop.permute.xlu0 %5088
        %5090 = vset.pattern.permute.xlu0 0
        %5091 = vperm.xlu0 %5090, %v4374
        %v5092 = vpop.permute.xlu0 %5091
        %5093 = vset.pattern.permute.xlu0 0
        %5094 = vperm.xlu0 %5093, %v4375
        %v5095 = vpop.permute.xlu0 %5094
        %5096 = vset.pattern.permute.xlu0 0
        %5097 = vperm.xlu0 %5096, %v4376
        %v5098 = vpop.permute.xlu0 %5097
        %5099 = vset.pattern.permute.xlu0 0
        %5100 = vperm.xlu0 %5099, %v4377
        %v5101 = vpop.permute.xlu0 %5100
        %5102 = vset.pattern.permute.xlu0 0
        %5103 = vperm.xlu0 %5102, %v4378
        %v5104 = vpop.permute.xlu0 %5103
        %5105 = vset.pattern.permute.xlu0 0
        %5106 = vperm.xlu0 %5105, %v4379
        %v5107 = vpop.permute.xlu0 %5106
        %5108 = vset.pattern.permute.xlu0 0
        %5109 = vperm.xlu0 %5108, %v4380
        %v5110 = vpop.permute.xlu0 %5109
        %5111 = vset.pattern.permute.xlu0 0
        %5112 = vperm.xlu0 %5111, %v4381
        %v5113 = vpop.permute.xlu0 %5112
        %5114 = vset.pattern.permute.xlu0 0
        %5115 = vperm.xlu0 %5114, %v4382
        %v5116 = vpop.permute.xlu0 %5115
        %5117 = vset.pattern.permute.xlu0 0
        %5118 = vperm.xlu0 %5117, %v4383
        %v5119 = vpop.permute.xlu0 %5118
        %5120 = vset.pattern.permute.xlu0 0
        %5121 = vperm.xlu0 %5120, %v4384
        %v5122 = vpop.permute.xlu0 %5121
        %5123 = vset.pattern.permute.xlu0 0
        %5124 = vperm.xlu0 %5123, %v4385
        %v5125 = vpop.permute.xlu0 %5124
        %5126 = vset.pattern.permute.xlu0 0
        %5127 = vperm.xlu0 %5126, %v4386
        %v5128 = vpop.permute.xlu0 %5127
        %5129 = vset.pattern.permute.xlu0 0
        %5130 = vperm.xlu0 %5129, %v4387
        %v5131 = vpop.permute.xlu0 %5130
        %5132 = vset.pattern.permute.xlu0 0
        %5133 = vperm.xlu0 %5132, %v4388
        %v5134 = vpop.permute.xlu0 %5133
        %5135 = vset.pattern.permute.xlu0 0
        %5136 = vperm.xlu0 %5135, %v4389
        %v5137 = vpop.permute.xlu0 %5136
        %5138 = vset.pattern.permute.xlu0 0
        %5139 = vperm.xlu0 %5138, %v4390
        %v5140 = vpop.permute.xlu0 %5139
        %5141 = vset.pattern.permute.xlu0 0
        %5142 = vperm.xlu0 %5141, %v4391
        %v5143 = vpop.permute.xlu0 %5142
        %5144 = vset.pattern.permute.xlu0 0
        %5145 = vperm.xlu0 %5144, %v4392
        %v5146 = vpop.permute.xlu0 %5145
        %5147 = vset.pattern.permute.xlu0 0
        %5148 = vperm.xlu0 %5147, %v4393
        %v5149 = vpop.permute.xlu0 %5148
        %5150 = vset.pattern.permute.xlu0 0
        %5151 = vperm.xlu0 %5150, %v4394
        %v5152 = vpop.permute.xlu0 %5151
        %5153 = vset.pattern.permute.xlu0 0
        %5154 = vperm.xlu0 %5153, %v4395
        %v5155 = vpop.permute.xlu0 %5154
        %5156 = vset.pattern.permute.xlu0 0
        %5157 = vperm.xlu0 %5156, %v4396
        %v5158 = vpop.permute.xlu0 %5157
        %5159 = vset.pattern.permute.xlu0 0
        %5160 = vperm.xlu0 %5159, %v4397
        %v5161 = vpop.permute.xlu0 %5160
        %5162 = vset.pattern.permute.xlu0 0
        %5163 = vperm.xlu0 %5162, %v4398
        %v5164 = vpop.permute.xlu0 %5163
        %5165 = vset.pattern.permute.xlu0 0
        %5166 = vperm.xlu0 %5165, %v4399
        %v5167 = vpop.permute.xlu0 %5166
        %5168 = vset.pattern.permute.xlu0 0
        %5169 = vperm.xlu0 %5168, %v4400
        %v5170 = vpop.permute.xlu0 %5169
        %5171 = vset.pattern.permute.xlu0 0
        %5172 = vperm.xlu0 %5171, %v4401
        %v5173 = vpop.permute.xlu0 %5172
        %5174 = vset.pattern.permute.xlu0 0
        %5175 = vperm.xlu0 %5174, %v4402
        %v5176 = vpop.permute.xlu0 %5175
        %5177 = vset.pattern.permute.xlu0 0
        %5178 = vperm.xlu0 %5177, %v4403
        %v5179 = vpop.permute.xlu0 %5178
        %5180 = vset.pattern.permute.xlu0 0
        %5181 = vperm.xlu0 %5180, %v4404
        %v5182 = vpop.permute.xlu0 %5181
        %5183 = vset.pattern.permute.xlu0 0
        %5184 = vperm.xlu0 %5183, %v4405
        %v5185 = vpop.permute.xlu0 %5184
        %5186 = vset.pattern.permute.xlu0 0
        %5187 = vperm.xlu0 %5186, %v4406
        %v5188 = vpop.permute.xlu0 %5187
        %5189 = vset.pattern.permute.xlu0 0
        %5190 = vperm.xlu0 %5189, %v4407
        %v5191 = vpop.permute.xlu0 %5190
        %5192 = vset.pattern.permute.xlu0 0
        %5193 = vperm.xlu0 %5192, %v4408
        %v5194 = vpop.permute.xlu0 %5193
        %5195 = vset.pattern.permute.xlu0 0
        %5196 = vperm.xlu0 %5195, %v4409
        %v5197 = vpop.permute.xlu0 %5196
        %5198 = vset.pattern.permute.xlu0 0
        %5199 = vperm.xlu0 %5198, %v4410
        %v5200 = vpop.permute.xlu0 %5199
        %5201 = vset.pattern.permute.xlu0 0
        %5202 = vperm.xlu0 %5201, %v4411
        %v5203 = vpop.permute.xlu0 %5202
        %5204 = vset.pattern.permute.xlu0 0
        %5205 = vperm.xlu0 %5204, %v4412
        %v5206 = vpop.permute.xlu0 %5205
        %5207 = vset.pattern.permute.xlu0 0
        %5208 = vperm.xlu0 %5207, %v4413
        %v5209 = vpop.permute.xlu0 %5208
        %5210 = vset.pattern.permute.xlu0 0
        %5211 = vperm.xlu0 %5210, %v4414
        %v5212 = vpop.permute.xlu0 %5211
        %5213 = vset.pattern.permute.xlu0 0
        %5214 = vperm.xlu0 %5213, %v4415
        %v5215 = vpop.permute.xlu0 %5214
        %5216 = vset.pattern.permute.xlu0 0
        %5217 = vperm.xlu0 %5216, %v4416
        %v5218 = vpop.permute.xlu0 %5217
        %5219 = vset.pattern.permute.xlu0 0
        %5220 = vperm.xlu0 %5219, %v4417
        %v5221 = vpop.permute.xlu0 %5220
        %5222 = vset.pattern.permute.xlu0 0
        %5223 = vperm.xlu0 %5222, %v4418
        %v5224 = vpop.permute.xlu0 %5223
        %5225 = vset.pattern.permute.xlu0 0
        %5226 = vperm.xlu0 %5225, %v4419
        %v5227 = vpop.permute.xlu0 %5226
        %5228 = vset.pattern.permute.xlu0 0
        %5229 = vperm.xlu0 %5228, %v4420
        %v5230 = vpop.permute.xlu0 %5229
        %5231 = vset.pattern.permute.xlu0 0
        %5232 = vperm.xlu0 %5231, %v4421
        %v5233 = vpop.permute.xlu0 %5232
        %5234 = vset.pattern.permute.xlu0 0
        %5235 = vperm.xlu0 %5234, %v4422
        %v5236 = vpop.permute.xlu0 %5235
        %5237 = vset.pattern.permute.xlu0 0
        %5238 = vperm.xlu0 %5237, %v4423
        %v5239 = vpop.permute.xlu0 %5238
        %5240 = vset.pattern.permute.xlu0 0
        %5241 = vperm.xlu0 %5240, %v4424
        %v5242 = vpop.permute.xlu0 %5241
        %5243 = vset.pattern.permute.xlu0 0
        %5244 = vperm.xlu0 %5243, %v4425
        %v5245 = vpop.permute.xlu0 %5244
        %5246 = vset.pattern.permute.xlu0 0
        %5247 = vperm.xlu0 %5246, %v4426
        %v5248 = vpop.permute.xlu0 %5247
        %5249 = vset.pattern.permute.xlu0 0
        %5250 = vperm.xlu0 %5249, %v4427
        %v5251 = vpop.permute.xlu0 %5250
        %5252 = vset.pattern.permute.xlu0 0
        %5253 = vperm.xlu0 %5252, %v4428
        %v5254 = vpop.permute.xlu0 %5253
        %5255 = vset.pattern.permute.xlu0 0
        %5256 = vperm.xlu0 %5255, %v4429
        %v5257 = vpop.permute.xlu0 %5256
        %5258 = vset.pattern.permute.xlu0 0
        %5259 = vperm.xlu0 %5258, %v4430
        %v5260 = vpop.permute.xlu0 %5259
        %5261 = vset.pattern.permute.xlu0 0
        %5262 = vperm.xlu0 %5261, %v4431
        %v5263 = vpop.permute.xlu0 %5262
        %5264 = vset.pattern.permute.xlu0 0
        %5265 = vperm.xlu0 %5264, %v4432
        %v5266 = vpop.permute.xlu0 %5265
        %5267 = vset.pattern.permute.xlu0 0
        %5268 = vperm.xlu0 %5267, %v4433
        %v5269 = vpop.permute.xlu0 %5268
        %5270 = vset.pattern.permute.xlu0 0
        %5271 = vperm.xlu0 %5270, %v4434
        %v5272 = vpop.permute.xlu0 %5271
        %5273 = vset.pattern.permute.xlu0 0
        %5274 = vperm.xlu0 %5273, %v4435
        %v5275 = vpop.permute.xlu0 %5274
        %5276 = vset.pattern.permute.xlu0 0
        %5277 = vperm.xlu0 %5276, %v4436
        %v5278 = vpop.permute.xlu0 %5277
        %5279 = vset.pattern.permute.xlu0 0
        %5280 = vperm.xlu0 %5279, %v4437
        %v5281 = vpop.permute.xlu0 %5280
        %5282 = vset.pattern.permute.xlu0 0
        %5283 = vperm.xlu0 %5282, %v4438
        %v5284 = vpop.permute.xlu0 %5283
        %5285 = vset.pattern.permute.xlu0 0
        %5286 = vperm.xlu0 %5285, %v4439
        %v5287 = vpop.permute.xlu0 %5286
        %5288 = vset.pattern.permute.xlu0 0
        %5289 = vperm.xlu0 %5288, %v4440
        %v5290 = vpop.permute.xlu0 %5289
        %5291 = vset.pattern.permute.xlu0 0
        %5292 = vperm.xlu0 %5291, %v4441
        %v5293 = vpop.permute.xlu0 %5292
        %5294 = vset.pattern.permute.xlu0 0
        %5295 = vperm.xlu0 %5294, %v4442
        %v5296 = vpop.permute.xlu0 %5295
        %5297 = vset.pattern.permute.xlu0 0
        %5298 = vperm.xlu0 %5297, %v4443
        %v5299 = vpop.permute.xlu0 %5298
        %5300 = vset.pattern.permute.xlu0 0
        %5301 = vperm.xlu0 %5300, %v4444
        %v5302 = vpop.permute.xlu0 %5301
        %5303 = vset.pattern.permute.xlu0 0
        %5304 = vperm.xlu0 %5303, %v4445
        %v5305 = vpop.permute.xlu0 %5304
        %5306 = vset.pattern.permute.xlu0 0
        %5307 = vperm.xlu0 %5306, %v4446
        %v5308 = vpop.permute.xlu0 %5307
        %5309 = vset.pattern.permute.xlu0 0
        %5310 = vperm.xlu0 %5309, %v4447
        %v5311 = vpop.permute.xlu0 %5310
        %5312 = vset.pattern.permute.xlu0 0
        %5313 = vperm.xlu0 %5312, %v4448
        %v5314 = vpop.permute.xlu0 %5313
        %5315 = vset.pattern.permute.xlu0 0
        %5316 = vperm.xlu0 %5315, %v4449
        %v5317 = vpop.permute.xlu0 %5316
        %5318 = vset.pattern.permute.xlu0 0
        %5319 = vperm.xlu0 %5318, %v4450
        %v5320 = vpop.permute.xlu0 %5319
        %5321 = vset.pattern.permute.xlu0 0
        %5322 = vperm.xlu0 %5321, %v4451
        %v5323 = vpop.permute.xlu0 %5322
        %5324 = vset.pattern.permute.xlu0 0
        %5325 = vperm.xlu0 %5324, %v4452
        %v5326 = vpop.permute.xlu0 %5325
        %5327 = vset.pattern.permute.xlu0 0
        %5328 = vperm.xlu0 %5327, %v4453
        %v5329 = vpop.permute.xlu0 %5328
        %5330 = vset.pattern.permute.xlu0 0
        %5331 = vperm.xlu0 %5330, %v4454
        %v5332 = vpop.permute.xlu0 %5331
        %5333 = vset.pattern.permute.xlu0 0
        %5334 = vperm.xlu0 %5333, %v4455
        %v5335 = vpop.permute.xlu0 %5334
        %5336 = vset.pattern.permute.xlu0 0
        %5337 = vperm.xlu0 %5336, %v4456
        %v5338 = vpop.permute.xlu0 %5337
        %5339 = vset.pattern.permute.xlu0 0
        %5340 = vperm.xlu0 %5339, %v4457
        %v5341 = vpop.permute.xlu0 %5340
        %5342 = vset.pattern.permute.xlu0 0
        %5343 = vperm.xlu0 %5342, %v4458
        %v5344 = vpop.permute.xlu0 %5343
        %5345 = vset.pattern.permute.xlu0 0
        %5346 = vperm.xlu0 %5345, %v4459
        %v5347 = vpop.permute.xlu0 %5346
        %5348 = vset.pattern.permute.xlu0 0
        %5349 = vperm.xlu0 %5348, %v4460
        %v5350 = vpop.permute.xlu0 %5349
        %5351 = vset.pattern.permute.xlu0 0
        %5352 = vperm.xlu0 %5351, %v4461
        %v5353 = vpop.permute.xlu0 %5352
        %5354 = vset.pattern.permute.xlu0 0
        %5355 = vperm.xlu0 %5354, %v4462
        %v5356 = vpop.permute.xlu0 %5355
        %5357 = vset.pattern.permute.xlu0 0
        %5358 = vperm.xlu0 %5357, %v4463
        %v5359 = vpop.permute.xlu0 %5358
        %5360 = vset.pattern.permute.xlu0 0
        %5361 = vperm.xlu0 %5360, %v4464
        %v5362 = vpop.permute.xlu0 %5361
        %5363 = vset.pattern.permute.xlu0 0
        %5364 = vperm.xlu0 %5363, %v4465
        %v5365 = vpop.permute.xlu0 %5364
        %5366 = vset.pattern.permute.xlu0 0
        %5367 = vperm.xlu0 %5366, %v4466
        %v5368 = vpop.permute.xlu0 %5367
        %5369 = vset.pattern.permute.xlu0 0
        %5370 = vperm.xlu0 %5369, %v4467
        %v5371 = vpop.permute.xlu0 %5370
        %5372 = vset.pattern.permute.xlu0 0
        %5373 = vperm.xlu0 %5372, %v4468
        %v5374 = vpop.permute.xlu0 %5373
        %5375 = vset.pattern.permute.xlu0 0
        %5376 = vperm.xlu0 %5375, %v4469
        %v5377 = vpop.permute.xlu0 %5376
        %5378 = vset.pattern.permute.xlu0 0
        %5379 = vperm.xlu0 %5378, %v4470
        %v5380 = vpop.permute.xlu0 %5379
        %5381 = vset.pattern.permute.xlu0 0
        %5382 = vperm.xlu0 %5381, %v4471
        %v5383 = vpop.permute.xlu0 %5382
        %5384 = vset.pattern.permute.xlu0 0
        %5385 = vperm.xlu0 %5384, %v4472
        %v5386 = vpop.permute.xlu0 %5385
        %5387 = vset.pattern.permute.xlu0 0
        %5388 = vperm.xlu0 %5387, %v4473
        %v5389 = vpop.permute.xlu0 %5388
        %5390 = vset.pattern.permute.xlu0 0
        %5391 = vperm.xlu0 %5390, %v4474
        %v5392 = vpop.permute.xlu0 %5391
        %5393 = vset.pattern.permute.xlu0 0
        %5394 = vperm.xlu0 %5393, %v4475
        %v5395 = vpop.permute.xlu0 %5394
        %5396 = vset.pattern.permute.xlu0 0
        %5397 = vperm.xlu0 %5396, %v4476
        %v5398 = vpop.permute.xlu0 %5397
        %5399 = vset.pattern.permute.xlu0 0
        %5400 = vperm.xlu0 %5399, %v4477
        %v5401 = vpop.permute.xlu0 %5400
        %5402 = vset.pattern.permute.xlu0 0
        %5403 = vperm.xlu0 %5402, %v4478
        %v5404 = vpop.permute.xlu0 %5403
        %5405 = vset.pattern.permute.xlu0 0
        %5406 = vperm.xlu0 %5405, %v4479
        %v5407 = vpop.permute.xlu0 %5406
        %5408 = vset.pattern.permute.xlu0 0
        %5409 = vperm.xlu0 %5408, %v4480
        %v5410 = vpop.permute.xlu0 %5409
        %5411 = vset.pattern.permute.xlu0 0
        %5412 = vperm.xlu0 %5411, %v4481
        %v5413 = vpop.permute.xlu0 %5412
        %5414 = vset.pattern.permute.xlu0 0
        %5415 = vperm.xlu0 %5414, %v4482
        %v5416 = vpop.permute.xlu0 %5415
        %5417 = vset.pattern.permute.xlu0 0
        %5418 = vperm.xlu0 %5417, %v4483
        %v5419 = vpop.permute.xlu0 %5418
        %5420 = vset.pattern.permute.xlu0 0
        %5421 = vperm.xlu0 %5420, %v4484
        %v5422 = vpop.permute.xlu0 %5421
        %5423 = vset.pattern.permute.xlu0 0
        %5424 = vperm.xlu0 %5423, %v4485
        %v5425 = vpop.permute.xlu0 %5424
        %5426 = vset.pattern.permute.xlu0 0
        %5427 = vperm.xlu0 %5426, %v4486
        %v5428 = vpop.permute.xlu0 %5427
        %5429 = vset.pattern.permute.xlu0 0
        %5430 = vperm.xlu0 %5429, %v4487
        %v5431 = vpop.permute.xlu0 %5430
        %5432 = vset.pattern.permute.xlu0 0
        %5433 = vperm.xlu0 %5432, %v4488
        %v5434 = vpop.permute.xlu0 %5433
        %5435 = vset.pattern.permute.xlu0 0
        %5436 = vperm.xlu0 %5435, %v4489
        %v5437 = vpop.permute.xlu0 %5436
        %5438 = vset.pattern.permute.xlu0 0
        %5439 = vperm.xlu0 %5438, %v4490
        %v5440 = vpop.permute.xlu0 %5439
        %5441 = vset.pattern.permute.xlu0 0
        %5442 = vperm.xlu0 %5441, %v4491
        %v5443 = vpop.permute.xlu0 %5442
        %5444 = vset.pattern.permute.xlu0 0
        %5445 = vperm.xlu0 %5444, %v4492
        %v5446 = vpop.permute.xlu0 %5445
        %5447 = vset.pattern.permute.xlu0 0
        %5448 = vperm.xlu0 %5447, %v4493
        %v5449 = vpop.permute.xlu0 %5448
        %5450 = vset.pattern.permute.xlu0 0
        %5451 = vperm.xlu0 %5450, %v4494
        %v5452 = vpop.permute.xlu0 %5451
        %5453 = vset.pattern.permute.xlu0 0
        %5454 = vperm.xlu0 %5453, %v4495
        %v5455 = vpop.permute.xlu0 %5454
        %5456 = vset.pattern.permute.xlu0 0
        %5457 = vperm.xlu0 %5456, %v4496
        %v5458 = vpop.permute.xlu0 %5457
        %5459 = vset.pattern.permute.xlu0 0
        %5460 = vperm.xlu0 %5459, %v4497
        %v5461 = vpop.permute.xlu0 %5460
        %5462 = vset.pattern.permute.xlu0 0
        %5463 = vperm.xlu0 %5462, %v4498
        %v5464 = vpop.permute.xlu0 %5463
        %5465 = vset.pattern.permute.xlu0 0
        %5466 = vperm.xlu0 %5465, %v4499
        %v5467 = vpop.permute.xlu0 %5466
        %5468 = vset.pattern.permute.xlu0 0
        %5469 = vperm.xlu0 %5468, %v4500
        %v5470 = vpop.permute.xlu0 %5469
        %5471 = vset.pattern.permute.xlu0 0
        %5472 = vperm.xlu0 %5471, %v4501
        %v5473 = vpop.permute.xlu0 %5472
        %5474 = vset.pattern.permute.xlu0 0
        %5475 = vperm.xlu0 %5474, %v4502
        %v5476 = vpop.permute.xlu0 %5475
        %5477 = vset.pattern.permute.xlu0 0
        %5478 = vperm.xlu0 %5477, %v4503
        %v5479 = vpop.permute.xlu0 %5478
        %5480 = vset.pattern.permute.xlu0 0
        %5481 = vperm.xlu0 %5480, %v4504
        %v5482 = vpop.permute.xlu0 %5481
        %5483 = vset.pattern.permute.xlu0 0
        %5484 = vperm.xlu0 %5483, %v4505
        %v5485 = vpop.permute.xlu0 %5484
        %5486 = vset.pattern.permute.xlu0 0
        %5487 = vperm.xlu0 %5486, %v4506
        %v5488 = vpop.permute.xlu0 %5487
        %5489 = vset.pattern.permute.xlu0 0
        %5490 = vperm.xlu0 %5489, %v4507
        %v5491 = vpop.permute.xlu0 %5490
        %5492 = vset.pattern.permute.xlu0 0
        %5493 = vperm.xlu0 %5492, %v4508
        %v5494 = vpop.permute.xlu0 %5493
        %5495 = vset.pattern.permute.xlu0 0
        %5496 = vperm.xlu0 %5495, %v4509
        %v5497 = vpop.permute.xlu0 %5496
        %5498 = vset.pattern.permute.xlu0 0
        %5499 = vperm.xlu0 %5498, %v4510
        %v5500 = vpop.permute.xlu0 %5499
        %5501 = vset.pattern.permute.xlu0 0
        %5502 = vperm.xlu0 %5501, %v4511
        %v5503 = vpop.permute.xlu0 %5502
        %5504 = vset.pattern.permute.xlu0 0
        %5505 = vperm.xlu0 %5504, %v4512
        %v5506 = vpop.permute.xlu0 %5505
        %5507 = vset.pattern.permute.xlu0 0
        %5508 = vperm.xlu0 %5507, %v4513
        %v5509 = vpop.permute.xlu0 %5508
        %5510 = vset.pattern.permute.xlu0 0
        %5511 = vperm.xlu0 %5510, %v4514
        %v5512 = vpop.permute.xlu0 %5511
        %5513 = vset.pattern.permute.xlu0 0
        %5514 = vperm.xlu0 %5513, %v4515
        %v5515 = vpop.permute.xlu0 %5514
        %5516 = vset.pattern.permute.xlu0 0
        %5517 = vperm.xlu0 %5516, %v4516
        %v5518 = vpop.permute.xlu0 %5517
        %5519 = vset.pattern.permute.xlu0 0
        %5520 = vperm.xlu0 %5519, %v4517
        %v5521 = vpop.permute.xlu0 %5520
        %5522 = vset.pattern.permute.xlu0 0
        %5523 = vperm.xlu0 %5522, %v4518
        %v5524 = vpop.permute.xlu0 %5523
        %5525 = vset.pattern.permute.xlu0 0
        %5526 = vperm.xlu0 %5525, %v4519
        %v5527 = vpop.permute.xlu0 %5526
        %5528 = vset.pattern.permute.xlu0 0
        %5529 = vperm.xlu0 %5528, %v4520
        %v5530 = vpop.permute.xlu0 %5529
        %5531 = vset.pattern.permute.xlu0 0
        %5532 = vperm.xlu0 %5531, %v4521
        %v5533 = vpop.permute.xlu0 %5532
        %5534 = vset.pattern.permute.xlu0 0
        %5535 = vperm.xlu0 %5534, %v4522
        %v5536 = vpop.permute.xlu0 %5535
        %5537 = vset.pattern.permute.xlu0 0
        %5538 = vperm.xlu0 %5537, %v4523
        %v5539 = vpop.permute.xlu0 %5538
        %5540 = vset.pattern.permute.xlu0 0
        %5541 = vperm.xlu0 %5540, %v4524
        %v5542 = vpop.permute.xlu0 %5541
        %5543 = vset.pattern.permute.xlu0 0
        %5544 = vperm.xlu0 %5543, %v4525
        %v5545 = vpop.permute.xlu0 %5544
        %5546 = vset.pattern.permute.xlu0 0
        %5547 = vperm.xlu0 %5546, %v4526
        %v5548 = vpop.permute.xlu0 %5547
        %5549 = vset.pattern.permute.xlu0 0
        %5550 = vperm.xlu0 %5549, %v4527
        %v5551 = vpop.permute.xlu0 %5550
        %v5552 = vlaneseq
        %v5553 = vshrl.u32 %v5552, 7
        %v5554 = vsub.s32 %v399, %v5553
        %v5555 = vrot.slane %v4786, %v5554
        %v5556 = vadd.s32 %v399, 4294967288
        %v5557 = vlaneseq
        %v5558 = vshrl.u32 %v5557, 7
        %v5559 = vsub.s32 %v5556, %v5558
        %v5560 = vrot.slane %v4789, %v5559
        %vm5561 = vcmask 130112
        %v5562 = vsel %vm5561, %v5560, %v5555
        %v5563 = vadd.s32 %v399, 4294967280
        %v5564 = vlaneseq
        %v5565 = vshrl.u32 %v5564, 7
        %v5566 = vsub.s32 %v5563, %v5565
        %v5567 = vrot.slane %v4792, %v5566
        %vm5568 = vcmask 195712
        %v5569 = vsel %vm5568, %v5567, %v5562
        %v5570 = vadd.s32 %v399, 4294967272
        %v5571 = vlaneseq
        %v5572 = vshrl.u32 %v5571, 7
        %v5573 = vsub.s32 %v5570, %v5572
        %v5574 = vrot.slane %v4795, %v5573
        %vm5575 = vcmask 261312
        %v5576 = vsel %vm5575, %v5574, %v5569
        %v5577 = vadd.s32 %v399, 4294967264
        %v5578 = vlaneseq
        %v5579 = vshrl.u32 %v5578, 7
        %v5580 = vsub.s32 %v5577, %v5579
        %v5581 = vrot.slane %v4798, %v5580
        %vm5582 = vcmask 326912
        %v5583 = vsel %vm5582, %v5581, %v5576
        %v5584 = vadd.s32 %v399, 4294967256
        %v5585 = vlaneseq
        %v5586 = vshrl.u32 %v5585, 7
        %v5587 = vsub.s32 %v5584, %v5586
        %v5588 = vrot.slane %v4801, %v5587
        %vm5589 = vcmask 392512
        %v5590 = vsel %vm5589, %v5588, %v5583
        %v5591 = vadd.s32 %v399, 4294967248
        %v5592 = vlaneseq
        %v5593 = vshrl.u32 %v5592, 7
        %v5594 = vsub.s32 %v5591, %v5593
        %v5595 = vrot.slane %v4804, %v5594
        %vm5596 = vcmask 458112
        %v5597 = vsel %vm5596, %v5595, %v5590
        %v5598 = vadd.s32 %v399, 4294967240
        %v5599 = vlaneseq
        %v5600 = vshrl.u32 %v5599, 7
        %v5601 = vsub.s32 %v5598, %v5600
        %v5602 = vrot.slane %v4807, %v5601
        %vm5603 = vcmask 523712
        %v5604 = vsel %vm5603, %v5602, %v5597
        %v5605 = vadd.s32 %v399, 4294967232
        %v5606 = vlaneseq
        %v5607 = vshrl.u32 %v5606, 7
        %v5608 = vsub.s32 %v5605, %v5607
        %v5609 = vrot.slane %v4810, %v5608
        %vm5610 = vcmask 589312
        %v5611 = vsel %vm5610, %v5609, %v5604
        %v5612 = vadd.s32 %v399, 4294967224
        %v5613 = vlaneseq
        %v5614 = vshrl.u32 %v5613, 7
        %v5615 = vsub.s32 %v5612, %v5614
        %v5616 = vrot.slane %v4813, %v5615
        %vm5617 = vcmask 654912
        %v5618 = vsel %vm5617, %v5616, %v5611
        %v5619 = vadd.s32 %v399, 4294967216
        %v5620 = vlaneseq
        %v5621 = vshrl.u32 %v5620, 7
        %v5622 = vsub.s32 %v5619, %v5621
        %v5623 = vrot.slane %v4816, %v5622
        %vm5624 = vcmask 720512
        %v5625 = vsel %vm5624, %v5623, %v5618
        %v5626 = vadd.s32 %v399, 4294967208
        %v5627 = vlaneseq
        %v5628 = vshrl.u32 %v5627, 7
        %v5629 = vsub.s32 %v5626, %v5628
        %v5630 = vrot.slane %v4819, %v5629
        %vm5631 = vcmask 786112
        %v5632 = vsel %vm5631, %v5630, %v5625
        %v5633 = vadd.s32 %v399, 4294967200
        %v5634 = vlaneseq
        %v5635 = vshrl.u32 %v5634, 7
        %v5636 = vsub.s32 %v5633, %v5635
        %v5637 = vrot.slane %v4822, %v5636
        %vm5638 = vcmask 851712
        %v5639 = vsel %vm5638, %v5637, %v5632
        %v5640 = vadd.s32 %v399, 4294967192
        %v5641 = vlaneseq
        %v5642 = vshrl.u32 %v5641, 7
        %v5643 = vsub.s32 %v5640, %v5642
        %v5644 = vrot.slane %v4825, %v5643
        %vm5645 = vcmask 917312
        %v5646 = vsel %vm5645, %v5644, %v5639
        %v5647 = vadd.s32 %v399, 4294967184
        %v5648 = vlaneseq
        %v5649 = vshrl.u32 %v5648, 7
        %v5650 = vsub.s32 %v5647, %v5649
        %v5651 = vrot.slane %v4828, %v5650
        %vm5652 = vcmask 982912
        %v5653 = vsel %vm5652, %v5651, %v5646
        %v5654 = vadd.s32 %v399, 4294967176
        %v5655 = vlaneseq
        %v5656 = vshrl.u32 %v5655, 7
        %v5657 = vsub.s32 %v5654, %v5656
        %v5658 = vrot.slane %v4831, %v5657
        %vm5659 = vcmask 1048512
        %v5660 = vsel %vm5659, %v5658, %v5653
        %v5661 = vlaneseq
        %v5662 = vshrl.u32 %v5661, 7
        %v5663 = vsub.s32 %v399, %v5662
        %v5664 = vrot.slane %v4834, %v5663
        %v5665 = vlaneseq
        %v5666 = vshrl.u32 %v5665, 7
        %v5667 = vsub.s32 %v5556, %v5666
        %v5668 = vrot.slane %v4837, %v5667
        %v5669 = vsel %vm5561, %v5668, %v5664
        %v5670 = vlaneseq
        %v5671 = vshrl.u32 %v5670, 7
        %v5672 = vsub.s32 %v5563, %v5671
        %v5673 = vrot.slane %v4840, %v5672
        %v5674 = vsel %vm5568, %v5673, %v5669
        %v5675 = vlaneseq
        %v5676 = vshrl.u32 %v5675, 7
        %v5677 = vsub.s32 %v5570, %v5676
        %v5678 = vrot.slane %v4843, %v5677
        %v5679 = vsel %vm5575, %v5678, %v5674
        %v5680 = vlaneseq
        %v5681 = vshrl.u32 %v5680, 7
        %v5682 = vsub.s32 %v5577, %v5681
        %v5683 = vrot.slane %v4846, %v5682
        %v5684 = vsel %vm5582, %v5683, %v5679
        %v5685 = vlaneseq
        %v5686 = vshrl.u32 %v5685, 7
        %v5687 = vsub.s32 %v5584, %v5686
        %v5688 = vrot.slane %v4849, %v5687
        %v5689 = vsel %vm5589, %v5688, %v5684
        %v5690 = vlaneseq
        %v5691 = vshrl.u32 %v5690, 7
        %v5692 = vsub.s32 %v5591, %v5691
        %v5693 = vrot.slane %v4852, %v5692
        %v5694 = vsel %vm5596, %v5693, %v5689
        %v5695 = vlaneseq
        %v5696 = vshrl.u32 %v5695, 7
        %v5697 = vsub.s32 %v5598, %v5696
        %v5698 = vrot.slane %v4855, %v5697
        %v5699 = vsel %vm5603, %v5698, %v5694
        %v5700 = vlaneseq
        %v5701 = vshrl.u32 %v5700, 7
        %v5702 = vsub.s32 %v5605, %v5701
        %v5703 = vrot.slane %v4858, %v5702
        %v5704 = vsel %vm5610, %v5703, %v5699
        %v5705 = vlaneseq
        %v5706 = vshrl.u32 %v5705, 7
        %v5707 = vsub.s32 %v5612, %v5706
        %v5708 = vrot.slane %v4861, %v5707
        %v5709 = vsel %vm5617, %v5708, %v5704
        %v5710 = vlaneseq
        %v5711 = vshrl.u32 %v5710, 7
        %v5712 = vsub.s32 %v5619, %v5711
        %v5713 = vrot.slane %v4864, %v5712
        %v5714 = vsel %vm5624, %v5713, %v5709
        %v5715 = vlaneseq
        %v5716 = vshrl.u32 %v5715, 7
        %v5717 = vsub.s32 %v5626, %v5716
        %v5718 = vrot.slane %v4867, %v5717
        %v5719 = vsel %vm5631, %v5718, %v5714
        %v5720 = vlaneseq
        %v5721 = vshrl.u32 %v5720, 7
        %v5722 = vsub.s32 %v5633, %v5721
        %v5723 = vrot.slane %v4870, %v5722
        %v5724 = vsel %vm5638, %v5723, %v5719
        %v5725 = vlaneseq
        %v5726 = vshrl.u32 %v5725, 7
        %v5727 = vsub.s32 %v5640, %v5726
        %v5728 = vrot.slane %v4873, %v5727
        %v5729 = vsel %vm5645, %v5728, %v5724
        %v5730 = vlaneseq
        %v5731 = vshrl.u32 %v5730, 7
        %v5732 = vsub.s32 %v5647, %v5731
        %v5733 = vrot.slane %v4876, %v5732
        %v5734 = vsel %vm5652, %v5733, %v5729
        %v5735 = vlaneseq
        %v5736 = vshrl.u32 %v5735, 7
        %v5737 = vsub.s32 %v5654, %v5736
        %v5738 = vrot.slane %v4879, %v5737
        %v5739 = vsel %vm5659, %v5738, %v5734
        %v5740 = vlaneseq
        %v5741 = vshrl.u32 %v5740, 7
        %v5742 = vsub.s32 %v399, %v5741
        %v5743 = vrot.slane %v4882, %v5742
        %v5744 = vlaneseq
        %v5745 = vshrl.u32 %v5744, 7
        %v5746 = vsub.s32 %v5556, %v5745
        %v5747 = vrot.slane %v4885, %v5746
        %v5748 = vsel %vm5561, %v5747, %v5743
        %v5749 = vlaneseq
        %v5750 = vshrl.u32 %v5749, 7
        %v5751 = vsub.s32 %v5563, %v5750
        %v5752 = vrot.slane %v4888, %v5751
        %v5753 = vsel %vm5568, %v5752, %v5748
        %v5754 = vlaneseq
        %v5755 = vshrl.u32 %v5754, 7
        %v5756 = vsub.s32 %v5570, %v5755
        %v5757 = vrot.slane %v4891, %v5756
        %v5758 = vsel %vm5575, %v5757, %v5753
        %v5759 = vlaneseq
        %v5760 = vshrl.u32 %v5759, 7
        %v5761 = vsub.s32 %v5577, %v5760
        %v5762 = vrot.slane %v4894, %v5761
        %v5763 = vsel %vm5582, %v5762, %v5758
        %v5764 = vlaneseq
        %v5765 = vshrl.u32 %v5764, 7
        %v5766 = vsub.s32 %v5584, %v5765
        %v5767 = vrot.slane %v4897, %v5766
        %v5768 = vsel %vm5589, %v5767, %v5763
        %v5769 = vlaneseq
        %v5770 = vshrl.u32 %v5769, 7
        %v5771 = vsub.s32 %v5591, %v5770
        %v5772 = vrot.slane %v4900, %v5771
        %v5773 = vsel %vm5596, %v5772, %v5768
        %v5774 = vlaneseq
        %v5775 = vshrl.u32 %v5774, 7
        %v5776 = vsub.s32 %v5598, %v5775
        %v5777 = vrot.slane %v4903, %v5776
        %v5778 = vsel %vm5603, %v5777, %v5773
        %v5779 = vlaneseq
        %v5780 = vshrl.u32 %v5779, 7
        %v5781 = vsub.s32 %v5605, %v5780
        %v5782 = vrot.slane %v4906, %v5781
        %v5783 = vsel %vm5610, %v5782, %v5778
        %v5784 = vlaneseq
        %v5785 = vshrl.u32 %v5784, 7
        %v5786 = vsub.s32 %v5612, %v5785
        %v5787 = vrot.slane %v4909, %v5786
        %v5788 = vsel %vm5617, %v5787, %v5783
        %v5789 = vlaneseq
        %v5790 = vshrl.u32 %v5789, 7
        %v5791 = vsub.s32 %v5619, %v5790
        %v5792 = vrot.slane %v4912, %v5791
        %v5793 = vsel %vm5624, %v5792, %v5788
        %v5794 = vlaneseq
        %v5795 = vshrl.u32 %v5794, 7
        %v5796 = vsub.s32 %v5626, %v5795
        %v5797 = vrot.slane %v4915, %v5796
        %v5798 = vsel %vm5631, %v5797, %v5793
        %v5799 = vlaneseq
        %v5800 = vshrl.u32 %v5799, 7
        %v5801 = vsub.s32 %v5633, %v5800
        %v5802 = vrot.slane %v4918, %v5801
        %v5803 = vsel %vm5638, %v5802, %v5798
        %v5804 = vlaneseq
        %v5805 = vshrl.u32 %v5804, 7
        %v5806 = vsub.s32 %v5640, %v5805
        %v5807 = vrot.slane %v4921, %v5806
        %v5808 = vsel %vm5645, %v5807, %v5803
        %v5809 = vlaneseq
        %v5810 = vshrl.u32 %v5809, 7
        %v5811 = vsub.s32 %v5647, %v5810
        %v5812 = vrot.slane %v4924, %v5811
        %v5813 = vsel %vm5652, %v5812, %v5808
        %v5814 = vlaneseq
        %v5815 = vshrl.u32 %v5814, 7
        %v5816 = vsub.s32 %v5654, %v5815
        %v5817 = vrot.slane %v4927, %v5816
        %v5818 = vsel %vm5659, %v5817, %v5813
        %v5819 = vlaneseq
        %v5820 = vshrl.u32 %v5819, 7
        %v5821 = vsub.s32 %v399, %v5820
        %v5822 = vrot.slane %v4930, %v5821
        %v5823 = vlaneseq
        %v5824 = vshrl.u32 %v5823, 7
        %v5825 = vsub.s32 %v5556, %v5824
        %v5826 = vrot.slane %v4933, %v5825
        %v5827 = vsel %vm5561, %v5826, %v5822
        %v5828 = vlaneseq
        %v5829 = vshrl.u32 %v5828, 7
        %v5830 = vsub.s32 %v5563, %v5829
        %v5831 = vrot.slane %v4936, %v5830
        %v5832 = vsel %vm5568, %v5831, %v5827
        %v5833 = vlaneseq
        %v5834 = vshrl.u32 %v5833, 7
        %v5835 = vsub.s32 %v5570, %v5834
        %v5836 = vrot.slane %v4939, %v5835
        %v5837 = vsel %vm5575, %v5836, %v5832
        %v5838 = vlaneseq
        %v5839 = vshrl.u32 %v5838, 7
        %v5840 = vsub.s32 %v5577, %v5839
        %v5841 = vrot.slane %v4942, %v5840
        %v5842 = vsel %vm5582, %v5841, %v5837
        %v5843 = vlaneseq
        %v5844 = vshrl.u32 %v5843, 7
        %v5845 = vsub.s32 %v5584, %v5844
        %v5846 = vrot.slane %v4945, %v5845
        %v5847 = vsel %vm5589, %v5846, %v5842
        %v5848 = vlaneseq
        %v5849 = vshrl.u32 %v5848, 7
        %v5850 = vsub.s32 %v5591, %v5849
        %v5851 = vrot.slane %v4948, %v5850
        %v5852 = vsel %vm5596, %v5851, %v5847
        %v5853 = vlaneseq
        %v5854 = vshrl.u32 %v5853, 7
        %v5855 = vsub.s32 %v5598, %v5854
        %v5856 = vrot.slane %v4951, %v5855
        %v5857 = vsel %vm5603, %v5856, %v5852
        %v5858 = vlaneseq
        %v5859 = vshrl.u32 %v5858, 7
        %v5860 = vsub.s32 %v5605, %v5859
        %v5861 = vrot.slane %v4954, %v5860
        %v5862 = vsel %vm5610, %v5861, %v5857
        %v5863 = vlaneseq
        %v5864 = vshrl.u32 %v5863, 7
        %v5865 = vsub.s32 %v5612, %v5864
        %v5866 = vrot.slane %v4957, %v5865
        %v5867 = vsel %vm5617, %v5866, %v5862
        %v5868 = vlaneseq
        %v5869 = vshrl.u32 %v5868, 7
        %v5870 = vsub.s32 %v5619, %v5869
        %v5871 = vrot.slane %v4960, %v5870
        %v5872 = vsel %vm5624, %v5871, %v5867
        %v5873 = vlaneseq
        %v5874 = vshrl.u32 %v5873, 7
        %v5875 = vsub.s32 %v5626, %v5874
        %v5876 = vrot.slane %v4963, %v5875
        %v5877 = vsel %vm5631, %v5876, %v5872
        %v5878 = vlaneseq
        %v5879 = vshrl.u32 %v5878, 7
        %v5880 = vsub.s32 %v5633, %v5879
        %v5881 = vrot.slane %v4966, %v5880
        %v5882 = vsel %vm5638, %v5881, %v5877
        %v5883 = vlaneseq
        %v5884 = vshrl.u32 %v5883, 7
        %v5885 = vsub.s32 %v5640, %v5884
        %v5886 = vrot.slane %v4969, %v5885
        %v5887 = vsel %vm5645, %v5886, %v5882
        %v5888 = vlaneseq
        %v5889 = vshrl.u32 %v5888, 7
        %v5890 = vsub.s32 %v5647, %v5889
        %v5891 = vrot.slane %v4972, %v5890
        %v5892 = vsel %vm5652, %v5891, %v5887
        %v5893 = vlaneseq
        %v5894 = vshrl.u32 %v5893, 7
        %v5895 = vsub.s32 %v5654, %v5894
        %v5896 = vrot.slane %v4975, %v5895
        %v5897 = vsel %vm5659, %v5896, %v5892
        %v5898 = vlaneseq
        %v5899 = vshrl.u32 %v5898, 7
        %v5900 = vsub.s32 %v399, %v5899
        %v5901 = vrot.slane %v4978, %v5900
        %v5902 = vlaneseq
        %v5903 = vshrl.u32 %v5902, 7
        %v5904 = vsub.s32 %v5556, %v5903
        %v5905 = vrot.slane %v4981, %v5904
        %v5906 = vsel %vm5561, %v5905, %v5901
        %v5907 = vlaneseq
        %v5908 = vshrl.u32 %v5907, 7
        %v5909 = vsub.s32 %v5563, %v5908
        %v5910 = vrot.slane %v4984, %v5909
        %v5911 = vsel %vm5568, %v5910, %v5906
        %v5912 = vlaneseq
        %v5913 = vshrl.u32 %v5912, 7
        %v5914 = vsub.s32 %v5570, %v5913
        %v5915 = vrot.slane %v4987, %v5914
        %v5916 = vsel %vm5575, %v5915, %v5911
        %v5917 = vlaneseq
        %v5918 = vshrl.u32 %v5917, 7
        %v5919 = vsub.s32 %v5577, %v5918
        %v5920 = vrot.slane %v4990, %v5919
        %v5921 = vsel %vm5582, %v5920, %v5916
        %v5922 = vlaneseq
        %v5923 = vshrl.u32 %v5922, 7
        %v5924 = vsub.s32 %v5584, %v5923
        %v5925 = vrot.slane %v4993, %v5924
        %v5926 = vsel %vm5589, %v5925, %v5921
        %v5927 = vlaneseq
        %v5928 = vshrl.u32 %v5927, 7
        %v5929 = vsub.s32 %v5591, %v5928
        %v5930 = vrot.slane %v4996, %v5929
        %v5931 = vsel %vm5596, %v5930, %v5926
        %v5932 = vlaneseq
        %v5933 = vshrl.u32 %v5932, 7
        %v5934 = vsub.s32 %v5598, %v5933
        %v5935 = vrot.slane %v4999, %v5934
        %v5936 = vsel %vm5603, %v5935, %v5931
        %v5937 = vlaneseq
        %v5938 = vshrl.u32 %v5937, 7
        %v5939 = vsub.s32 %v5605, %v5938
        %v5940 = vrot.slane %v5002, %v5939
        %v5941 = vsel %vm5610, %v5940, %v5936
        %v5942 = vlaneseq
        %v5943 = vshrl.u32 %v5942, 7
        %v5944 = vsub.s32 %v5612, %v5943
        %v5945 = vrot.slane %v5005, %v5944
        %v5946 = vsel %vm5617, %v5945, %v5941
        %v5947 = vlaneseq
        %v5948 = vshrl.u32 %v5947, 7
        %v5949 = vsub.s32 %v5619, %v5948
        %v5950 = vrot.slane %v5008, %v5949
        %v5951 = vsel %vm5624, %v5950, %v5946
        %v5952 = vlaneseq
        %v5953 = vshrl.u32 %v5952, 7
        %v5954 = vsub.s32 %v5626, %v5953
        %v5955 = vrot.slane %v5011, %v5954
        %v5956 = vsel %vm5631, %v5955, %v5951
        %v5957 = vlaneseq
        %v5958 = vshrl.u32 %v5957, 7
        %v5959 = vsub.s32 %v5633, %v5958
        %v5960 = vrot.slane %v5014, %v5959
        %v5961 = vsel %vm5638, %v5960, %v5956
        %v5962 = vlaneseq
        %v5963 = vshrl.u32 %v5962, 7
        %v5964 = vsub.s32 %v5640, %v5963
        %v5965 = vrot.slane %v5017, %v5964
        %v5966 = vsel %vm5645, %v5965, %v5961
        %v5967 = vlaneseq
        %v5968 = vshrl.u32 %v5967, 7
        %v5969 = vsub.s32 %v5647, %v5968
        %v5970 = vrot.slane %v5020, %v5969
        %v5971 = vsel %vm5652, %v5970, %v5966
        %v5972 = vlaneseq
        %v5973 = vshrl.u32 %v5972, 7
        %v5974 = vsub.s32 %v5654, %v5973
        %v5975 = vrot.slane %v5023, %v5974
        %v5976 = vsel %vm5659, %v5975, %v5971
        %v5977 = vlaneseq
        %v5978 = vshrl.u32 %v5977, 7
        %v5979 = vsub.s32 %v399, %v5978
        %v5980 = vrot.slane %v5026, %v5979
        %v5981 = vlaneseq
        %v5982 = vshrl.u32 %v5981, 7
        %v5983 = vsub.s32 %v5556, %v5982
        %v5984 = vrot.slane %v5029, %v5983
        %v5985 = vsel %vm5561, %v5984, %v5980
        %v5986 = vlaneseq
        %v5987 = vshrl.u32 %v5986, 7
        %v5988 = vsub.s32 %v5563, %v5987
        %v5989 = vrot.slane %v5032, %v5988
        %v5990 = vsel %vm5568, %v5989, %v5985
        %v5991 = vlaneseq
        %v5992 = vshrl.u32 %v5991, 7
        %v5993 = vsub.s32 %v5570, %v5992
        %v5994 = vrot.slane %v5035, %v5993
        %v5995 = vsel %vm5575, %v5994, %v5990
        %v5996 = vlaneseq
        %v5997 = vshrl.u32 %v5996, 7
        %v5998 = vsub.s32 %v5577, %v5997
        %v5999 = vrot.slane %v5038, %v5998
        %v6000 = vsel %vm5582, %v5999, %v5995
        %v6001 = vlaneseq
        %v6002 = vshrl.u32 %v6001, 7
        %v6003 = vsub.s32 %v5584, %v6002
        %v6004 = vrot.slane %v5041, %v6003
        %v6005 = vsel %vm5589, %v6004, %v6000
        %v6006 = vlaneseq
        %v6007 = vshrl.u32 %v6006, 7
        %v6008 = vsub.s32 %v5591, %v6007
        %v6009 = vrot.slane %v5044, %v6008
        %v6010 = vsel %vm5596, %v6009, %v6005
        %v6011 = vlaneseq
        %v6012 = vshrl.u32 %v6011, 7
        %v6013 = vsub.s32 %v5598, %v6012
        %v6014 = vrot.slane %v5047, %v6013
        %v6015 = vsel %vm5603, %v6014, %v6010
        %v6016 = vlaneseq
        %v6017 = vshrl.u32 %v6016, 7
        %v6018 = vsub.s32 %v5605, %v6017
        %v6019 = vrot.slane %v5050, %v6018
        %v6020 = vsel %vm5610, %v6019, %v6015
        %v6021 = vlaneseq
        %v6022 = vshrl.u32 %v6021, 7
        %v6023 = vsub.s32 %v5612, %v6022
        %v6024 = vrot.slane %v5053, %v6023
        %v6025 = vsel %vm5617, %v6024, %v6020
        %v6026 = vlaneseq
        %v6027 = vshrl.u32 %v6026, 7
        %v6028 = vsub.s32 %v5619, %v6027
        %v6029 = vrot.slane %v5056, %v6028
        %v6030 = vsel %vm5624, %v6029, %v6025
        %v6031 = vlaneseq
        %v6032 = vshrl.u32 %v6031, 7
        %v6033 = vsub.s32 %v5626, %v6032
        %v6034 = vrot.slane %v5059, %v6033
        %v6035 = vsel %vm5631, %v6034, %v6030
        %v6036 = vlaneseq
        %v6037 = vshrl.u32 %v6036, 7
        %v6038 = vsub.s32 %v5633, %v6037
        %v6039 = vrot.slane %v5062, %v6038
        %v6040 = vsel %vm5638, %v6039, %v6035
        %v6041 = vlaneseq
        %v6042 = vshrl.u32 %v6041, 7
        %v6043 = vsub.s32 %v5640, %v6042
        %v6044 = vrot.slane %v5065, %v6043
        %v6045 = vsel %vm5645, %v6044, %v6040
        %v6046 = vlaneseq
        %v6047 = vshrl.u32 %v6046, 7
        %v6048 = vsub.s32 %v5647, %v6047
        %v6049 = vrot.slane %v5068, %v6048
        %v6050 = vsel %vm5652, %v6049, %v6045
        %v6051 = vlaneseq
        %v6052 = vshrl.u32 %v6051, 7
        %v6053 = vsub.s32 %v5654, %v6052
        %v6054 = vrot.slane %v5071, %v6053
        %v6055 = vsel %vm5659, %v6054, %v6050
        %v6056 = vlaneseq
        %v6057 = vshrl.u32 %v6056, 7
        %v6058 = vsub.s32 %v399, %v6057
        %v6059 = vrot.slane %v5074, %v6058
        %v6060 = vlaneseq
        %v6061 = vshrl.u32 %v6060, 7
        %v6062 = vsub.s32 %v5556, %v6061
        %v6063 = vrot.slane %v5077, %v6062
        %v6064 = vsel %vm5561, %v6063, %v6059
        %v6065 = vlaneseq
        %v6066 = vshrl.u32 %v6065, 7
        %v6067 = vsub.s32 %v5563, %v6066
        %v6068 = vrot.slane %v5080, %v6067
        %v6069 = vsel %vm5568, %v6068, %v6064
        %v6070 = vlaneseq
        %v6071 = vshrl.u32 %v6070, 7
        %v6072 = vsub.s32 %v5570, %v6071
        %v6073 = vrot.slane %v5083, %v6072
        %v6074 = vsel %vm5575, %v6073, %v6069
        %v6075 = vlaneseq
        %v6076 = vshrl.u32 %v6075, 7
        %v6077 = vsub.s32 %v5577, %v6076
        %v6078 = vrot.slane %v5086, %v6077
        %v6079 = vsel %vm5582, %v6078, %v6074
        %v6080 = vlaneseq
        %v6081 = vshrl.u32 %v6080, 7
        %v6082 = vsub.s32 %v5584, %v6081
        %v6083 = vrot.slane %v5089, %v6082
        %v6084 = vsel %vm5589, %v6083, %v6079
        %v6085 = vlaneseq
        %v6086 = vshrl.u32 %v6085, 7
        %v6087 = vsub.s32 %v5591, %v6086
        %v6088 = vrot.slane %v5092, %v6087
        %v6089 = vsel %vm5596, %v6088, %v6084
        %v6090 = vlaneseq
        %v6091 = vshrl.u32 %v6090, 7
        %v6092 = vsub.s32 %v5598, %v6091
        %v6093 = vrot.slane %v5095, %v6092
        %v6094 = vsel %vm5603, %v6093, %v6089
        %v6095 = vlaneseq
        %v6096 = vshrl.u32 %v6095, 7
        %v6097 = vsub.s32 %v5605, %v6096
        %v6098 = vrot.slane %v5098, %v6097
        %v6099 = vsel %vm5610, %v6098, %v6094
        %v6100 = vlaneseq
        %v6101 = vshrl.u32 %v6100, 7
        %v6102 = vsub.s32 %v5612, %v6101
        %v6103 = vrot.slane %v5101, %v6102
        %v6104 = vsel %vm5617, %v6103, %v6099
        %v6105 = vlaneseq
        %v6106 = vshrl.u32 %v6105, 7
        %v6107 = vsub.s32 %v5619, %v6106
        %v6108 = vrot.slane %v5104, %v6107
        %v6109 = vsel %vm5624, %v6108, %v6104
        %v6110 = vlaneseq
        %v6111 = vshrl.u32 %v6110, 7
        %v6112 = vsub.s32 %v5626, %v6111
        %v6113 = vrot.slane %v5107, %v6112
        %v6114 = vsel %vm5631, %v6113, %v6109
        %v6115 = vlaneseq
        %v6116 = vshrl.u32 %v6115, 7
        %v6117 = vsub.s32 %v5633, %v6116
        %v6118 = vrot.slane %v5110, %v6117
        %v6119 = vsel %vm5638, %v6118, %v6114
        %v6120 = vlaneseq
        %v6121 = vshrl.u32 %v6120, 7
        %v6122 = vsub.s32 %v5640, %v6121
        %v6123 = vrot.slane %v5113, %v6122
        %v6124 = vsel %vm5645, %v6123, %v6119
        %v6125 = vlaneseq
        %v6126 = vshrl.u32 %v6125, 7
        %v6127 = vsub.s32 %v5647, %v6126
        %v6128 = vrot.slane %v5116, %v6127
        %v6129 = vsel %vm5652, %v6128, %v6124
        %v6130 = vlaneseq
        %v6131 = vshrl.u32 %v6130, 7
        %v6132 = vsub.s32 %v5654, %v6131
        %v6133 = vrot.slane %v5119, %v6132
        %v6134 = vsel %vm5659, %v6133, %v6129
        %v6135 = vlaneseq
        %v6136 = vshrl.u32 %v6135, 7
        %v6137 = vsub.s32 %v399, %v6136
        %v6138 = vrot.slane %v5122, %v6137
        %v6139 = vlaneseq
        %v6140 = vshrl.u32 %v6139, 7
        %v6141 = vsub.s32 %v5556, %v6140
        %v6142 = vrot.slane %v5125, %v6141
        %v6143 = vsel %vm5561, %v6142, %v6138
        %v6144 = vlaneseq
        %v6145 = vshrl.u32 %v6144, 7
        %v6146 = vsub.s32 %v5563, %v6145
        %v6147 = vrot.slane %v5128, %v6146
        %v6148 = vsel %vm5568, %v6147, %v6143
        %v6149 = vlaneseq
        %v6150 = vshrl.u32 %v6149, 7
        %v6151 = vsub.s32 %v5570, %v6150
        %v6152 = vrot.slane %v5131, %v6151
        %v6153 = vsel %vm5575, %v6152, %v6148
        %v6154 = vlaneseq
        %v6155 = vshrl.u32 %v6154, 7
        %v6156 = vsub.s32 %v5577, %v6155
        %v6157 = vrot.slane %v5134, %v6156
        %v6158 = vsel %vm5582, %v6157, %v6153
        %v6159 = vlaneseq
        %v6160 = vshrl.u32 %v6159, 7
        %v6161 = vsub.s32 %v5584, %v6160
        %v6162 = vrot.slane %v5137, %v6161
        %v6163 = vsel %vm5589, %v6162, %v6158
        %v6164 = vlaneseq
        %v6165 = vshrl.u32 %v6164, 7
        %v6166 = vsub.s32 %v5591, %v6165
        %v6167 = vrot.slane %v5140, %v6166
        %v6168 = vsel %vm5596, %v6167, %v6163
        %v6169 = vlaneseq
        %v6170 = vshrl.u32 %v6169, 7
        %v6171 = vsub.s32 %v5598, %v6170
        %v6172 = vrot.slane %v5143, %v6171
        %v6173 = vsel %vm5603, %v6172, %v6168
        %v6174 = vlaneseq
        %v6175 = vshrl.u32 %v6174, 7
        %v6176 = vsub.s32 %v5605, %v6175
        %v6177 = vrot.slane %v5146, %v6176
        %v6178 = vsel %vm5610, %v6177, %v6173
        %v6179 = vlaneseq
        %v6180 = vshrl.u32 %v6179, 7
        %v6181 = vsub.s32 %v5612, %v6180
        %v6182 = vrot.slane %v5149, %v6181
        %v6183 = vsel %vm5617, %v6182, %v6178
        %v6184 = vlaneseq
        %v6185 = vshrl.u32 %v6184, 7
        %v6186 = vsub.s32 %v5619, %v6185
        %v6187 = vrot.slane %v5152, %v6186
        %v6188 = vsel %vm5624, %v6187, %v6183
        %v6189 = vlaneseq
        %v6190 = vshrl.u32 %v6189, 7
        %v6191 = vsub.s32 %v5626, %v6190
        %v6192 = vrot.slane %v5155, %v6191
        %v6193 = vsel %vm5631, %v6192, %v6188
        %v6194 = vlaneseq
        %v6195 = vshrl.u32 %v6194, 7
        %v6196 = vsub.s32 %v5633, %v6195
        %v6197 = vrot.slane %v5158, %v6196
        %v6198 = vsel %vm5638, %v6197, %v6193
        %v6199 = vlaneseq
        %v6200 = vshrl.u32 %v6199, 7
        %v6201 = vsub.s32 %v5640, %v6200
        %v6202 = vrot.slane %v5161, %v6201
        %v6203 = vsel %vm5645, %v6202, %v6198
        %v6204 = vlaneseq
        %v6205 = vshrl.u32 %v6204, 7
        %v6206 = vsub.s32 %v5647, %v6205
        %v6207 = vrot.slane %v5164, %v6206
        %v6208 = vsel %vm5652, %v6207, %v6203
        %v6209 = vlaneseq
        %v6210 = vshrl.u32 %v6209, 7
        %v6211 = vsub.s32 %v5654, %v6210
        %v6212 = vrot.slane %v5167, %v6211
        %v6213 = vsel %vm5659, %v6212, %v6208
        %v6214 = vlaneseq
        %v6215 = vshrl.u32 %v6214, 7
        %v6216 = vsub.s32 %v399, %v6215
        %v6217 = vrot.slane %v5170, %v6216
        %v6218 = vlaneseq
        %v6219 = vshrl.u32 %v6218, 7
        %v6220 = vsub.s32 %v5556, %v6219
        %v6221 = vrot.slane %v5173, %v6220
        %v6222 = vsel %vm5561, %v6221, %v6217
        %v6223 = vlaneseq
        %v6224 = vshrl.u32 %v6223, 7
        %v6225 = vsub.s32 %v5563, %v6224
        %v6226 = vrot.slane %v5176, %v6225
        %v6227 = vsel %vm5568, %v6226, %v6222
        %v6228 = vlaneseq
        %v6229 = vshrl.u32 %v6228, 7
        %v6230 = vsub.s32 %v5570, %v6229
        %v6231 = vrot.slane %v5179, %v6230
        %v6232 = vsel %vm5575, %v6231, %v6227
        %v6233 = vlaneseq
        %v6234 = vshrl.u32 %v6233, 7
        %v6235 = vsub.s32 %v5577, %v6234
        %v6236 = vrot.slane %v5182, %v6235
        %v6237 = vsel %vm5582, %v6236, %v6232
        %v6238 = vlaneseq
        %v6239 = vshrl.u32 %v6238, 7
        %v6240 = vsub.s32 %v5584, %v6239
        %v6241 = vrot.slane %v5185, %v6240
        %v6242 = vsel %vm5589, %v6241, %v6237
        %v6243 = vlaneseq
        %v6244 = vshrl.u32 %v6243, 7
        %v6245 = vsub.s32 %v5591, %v6244
        %v6246 = vrot.slane %v5188, %v6245
        %v6247 = vsel %vm5596, %v6246, %v6242
        %v6248 = vlaneseq
        %v6249 = vshrl.u32 %v6248, 7
        %v6250 = vsub.s32 %v5598, %v6249
        %v6251 = vrot.slane %v5191, %v6250
        %v6252 = vsel %vm5603, %v6251, %v6247
        %v6253 = vlaneseq
        %v6254 = vshrl.u32 %v6253, 7
        %v6255 = vsub.s32 %v5605, %v6254
        %v6256 = vrot.slane %v5194, %v6255
        %v6257 = vsel %vm5610, %v6256, %v6252
        %v6258 = vlaneseq
        %v6259 = vshrl.u32 %v6258, 7
        %v6260 = vsub.s32 %v5612, %v6259
        %v6261 = vrot.slane %v5197, %v6260
        %v6262 = vsel %vm5617, %v6261, %v6257
        %v6263 = vlaneseq
        %v6264 = vshrl.u32 %v6263, 7
        %v6265 = vsub.s32 %v5619, %v6264
        %v6266 = vrot.slane %v5200, %v6265
        %v6267 = vsel %vm5624, %v6266, %v6262
        %v6268 = vlaneseq
        %v6269 = vshrl.u32 %v6268, 7
        %v6270 = vsub.s32 %v5626, %v6269
        %v6271 = vrot.slane %v5203, %v6270
        %v6272 = vsel %vm5631, %v6271, %v6267
        %v6273 = vlaneseq
        %v6274 = vshrl.u32 %v6273, 7
        %v6275 = vsub.s32 %v5633, %v6274
        %v6276 = vrot.slane %v5206, %v6275
        %v6277 = vsel %vm5638, %v6276, %v6272
        %v6278 = vlaneseq
        %v6279 = vshrl.u32 %v6278, 7
        %v6280 = vsub.s32 %v5640, %v6279
        %v6281 = vrot.slane %v5209, %v6280
        %v6282 = vsel %vm5645, %v6281, %v6277
        %v6283 = vlaneseq
        %v6284 = vshrl.u32 %v6283, 7
        %v6285 = vsub.s32 %v5647, %v6284
        %v6286 = vrot.slane %v5212, %v6285
        %v6287 = vsel %vm5652, %v6286, %v6282
        %v6288 = vlaneseq
        %v6289 = vshrl.u32 %v6288, 7
        %v6290 = vsub.s32 %v5654, %v6289
        %v6291 = vrot.slane %v5215, %v6290
        %v6292 = vsel %vm5659, %v6291, %v6287
        %v6293 = vlaneseq
        %v6294 = vshrl.u32 %v6293, 7
        %v6295 = vsub.s32 %v399, %v6294
        %v6296 = vrot.slane %v5218, %v6295
        %v6297 = vlaneseq
        %v6298 = vshrl.u32 %v6297, 7
        %v6299 = vsub.s32 %v5556, %v6298
        %v6300 = vrot.slane %v5221, %v6299
        %v6301 = vsel %vm5561, %v6300, %v6296
        %v6302 = vlaneseq
        %v6303 = vshrl.u32 %v6302, 7
        %v6304 = vsub.s32 %v5563, %v6303
        %v6305 = vrot.slane %v5224, %v6304
        %v6306 = vsel %vm5568, %v6305, %v6301
        %v6307 = vlaneseq
        %v6308 = vshrl.u32 %v6307, 7
        %v6309 = vsub.s32 %v5570, %v6308
        %v6310 = vrot.slane %v5227, %v6309
        %v6311 = vsel %vm5575, %v6310, %v6306
        %v6312 = vlaneseq
        %v6313 = vshrl.u32 %v6312, 7
        %v6314 = vsub.s32 %v5577, %v6313
        %v6315 = vrot.slane %v5230, %v6314
        %v6316 = vsel %vm5582, %v6315, %v6311
        %v6317 = vlaneseq
        %v6318 = vshrl.u32 %v6317, 7
        %v6319 = vsub.s32 %v5584, %v6318
        %v6320 = vrot.slane %v5233, %v6319
        %v6321 = vsel %vm5589, %v6320, %v6316
        %v6322 = vlaneseq
        %v6323 = vshrl.u32 %v6322, 7
        %v6324 = vsub.s32 %v5591, %v6323
        %v6325 = vrot.slane %v5236, %v6324
        %v6326 = vsel %vm5596, %v6325, %v6321
        %v6327 = vlaneseq
        %v6328 = vshrl.u32 %v6327, 7
        %v6329 = vsub.s32 %v5598, %v6328
        %v6330 = vrot.slane %v5239, %v6329
        %v6331 = vsel %vm5603, %v6330, %v6326
        %v6332 = vlaneseq
        %v6333 = vshrl.u32 %v6332, 7
        %v6334 = vsub.s32 %v5605, %v6333
        %v6335 = vrot.slane %v5242, %v6334
        %v6336 = vsel %vm5610, %v6335, %v6331
        %v6337 = vlaneseq
        %v6338 = vshrl.u32 %v6337, 7
        %v6339 = vsub.s32 %v5612, %v6338
        %v6340 = vrot.slane %v5245, %v6339
        %v6341 = vsel %vm5617, %v6340, %v6336
        %v6342 = vlaneseq
        %v6343 = vshrl.u32 %v6342, 7
        %v6344 = vsub.s32 %v5619, %v6343
        %v6345 = vrot.slane %v5248, %v6344
        %v6346 = vsel %vm5624, %v6345, %v6341
        %v6347 = vlaneseq
        %v6348 = vshrl.u32 %v6347, 7
        %v6349 = vsub.s32 %v5626, %v6348
        %v6350 = vrot.slane %v5251, %v6349
        %v6351 = vsel %vm5631, %v6350, %v6346
        %v6352 = vlaneseq
        %v6353 = vshrl.u32 %v6352, 7
        %v6354 = vsub.s32 %v5633, %v6353
        %v6355 = vrot.slane %v5254, %v6354
        %v6356 = vsel %vm5638, %v6355, %v6351
        %v6357 = vlaneseq
        %v6358 = vshrl.u32 %v6357, 7
        %v6359 = vsub.s32 %v5640, %v6358
        %v6360 = vrot.slane %v5257, %v6359
        %v6361 = vsel %vm5645, %v6360, %v6356
        %v6362 = vlaneseq
        %v6363 = vshrl.u32 %v6362, 7
        %v6364 = vsub.s32 %v5647, %v6363
        %v6365 = vrot.slane %v5260, %v6364
        %v6366 = vsel %vm5652, %v6365, %v6361
        %v6367 = vlaneseq
        %v6368 = vshrl.u32 %v6367, 7
        %v6369 = vsub.s32 %v5654, %v6368
        %v6370 = vrot.slane %v5263, %v6369
        %v6371 = vsel %vm5659, %v6370, %v6366
        %v6372 = vlaneseq
        %v6373 = vshrl.u32 %v6372, 7
        %v6374 = vsub.s32 %v399, %v6373
        %v6375 = vrot.slane %v5266, %v6374
        %v6376 = vlaneseq
        %v6377 = vshrl.u32 %v6376, 7
        %v6378 = vsub.s32 %v5556, %v6377
        %v6379 = vrot.slane %v5269, %v6378
        %v6380 = vsel %vm5561, %v6379, %v6375
        %v6381 = vlaneseq
        %v6382 = vshrl.u32 %v6381, 7
        %v6383 = vsub.s32 %v5563, %v6382
        %v6384 = vrot.slane %v5272, %v6383
        %v6385 = vsel %vm5568, %v6384, %v6380
        %v6386 = vlaneseq
        %v6387 = vshrl.u32 %v6386, 7
        %v6388 = vsub.s32 %v5570, %v6387
        %v6389 = vrot.slane %v5275, %v6388
        %v6390 = vsel %vm5575, %v6389, %v6385
        %v6391 = vlaneseq
        %v6392 = vshrl.u32 %v6391, 7
        %v6393 = vsub.s32 %v5577, %v6392
        %v6394 = vrot.slane %v5278, %v6393
        %v6395 = vsel %vm5582, %v6394, %v6390
        %v6396 = vlaneseq
        %v6397 = vshrl.u32 %v6396, 7
        %v6398 = vsub.s32 %v5584, %v6397
        %v6399 = vrot.slane %v5281, %v6398
        %v6400 = vsel %vm5589, %v6399, %v6395
        %v6401 = vlaneseq
        %v6402 = vshrl.u32 %v6401, 7
        %v6403 = vsub.s32 %v5591, %v6402
        %v6404 = vrot.slane %v5284, %v6403
        %v6405 = vsel %vm5596, %v6404, %v6400
        %v6406 = vlaneseq
        %v6407 = vshrl.u32 %v6406, 7
        %v6408 = vsub.s32 %v5598, %v6407
        %v6409 = vrot.slane %v5287, %v6408
        %v6410 = vsel %vm5603, %v6409, %v6405
        %v6411 = vlaneseq
        %v6412 = vshrl.u32 %v6411, 7
        %v6413 = vsub.s32 %v5605, %v6412
        %v6414 = vrot.slane %v5290, %v6413
        %v6415 = vsel %vm5610, %v6414, %v6410
        %v6416 = vlaneseq
        %v6417 = vshrl.u32 %v6416, 7
        %v6418 = vsub.s32 %v5612, %v6417
        %v6419 = vrot.slane %v5293, %v6418
        %v6420 = vsel %vm5617, %v6419, %v6415
        %v6421 = vlaneseq
        %v6422 = vshrl.u32 %v6421, 7
        %v6423 = vsub.s32 %v5619, %v6422
        %v6424 = vrot.slane %v5296, %v6423
        %v6425 = vsel %vm5624, %v6424, %v6420
        %v6426 = vlaneseq
        %v6427 = vshrl.u32 %v6426, 7
        %v6428 = vsub.s32 %v5626, %v6427
        %v6429 = vrot.slane %v5299, %v6428
        %v6430 = vsel %vm5631, %v6429, %v6425
        %v6431 = vlaneseq
        %v6432 = vshrl.u32 %v6431, 7
        %v6433 = vsub.s32 %v5633, %v6432
        %v6434 = vrot.slane %v5302, %v6433
        %v6435 = vsel %vm5638, %v6434, %v6430
        %v6436 = vlaneseq
        %v6437 = vshrl.u32 %v6436, 7
        %v6438 = vsub.s32 %v5640, %v6437
        %v6439 = vrot.slane %v5305, %v6438
        %v6440 = vsel %vm5645, %v6439, %v6435
        %v6441 = vlaneseq
        %v6442 = vshrl.u32 %v6441, 7
        %v6443 = vsub.s32 %v5647, %v6442
        %v6444 = vrot.slane %v5308, %v6443
        %v6445 = vsel %vm5652, %v6444, %v6440
        %v6446 = vlaneseq
        %v6447 = vshrl.u32 %v6446, 7
        %v6448 = vsub.s32 %v5654, %v6447
        %v6449 = vrot.slane %v5311, %v6448
        %v6450 = vsel %vm5659, %v6449, %v6445
        %v6451 = vlaneseq
        %v6452 = vshrl.u32 %v6451, 7
        %v6453 = vsub.s32 %v399, %v6452
        %v6454 = vrot.slane %v5314, %v6453
        %v6455 = vlaneseq
        %v6456 = vshrl.u32 %v6455, 7
        %v6457 = vsub.s32 %v5556, %v6456
        %v6458 = vrot.slane %v5317, %v6457
        %v6459 = vsel %vm5561, %v6458, %v6454
        %v6460 = vlaneseq
        %v6461 = vshrl.u32 %v6460, 7
        %v6462 = vsub.s32 %v5563, %v6461
        %v6463 = vrot.slane %v5320, %v6462
        %v6464 = vsel %vm5568, %v6463, %v6459
        %v6465 = vlaneseq
        %v6466 = vshrl.u32 %v6465, 7
        %v6467 = vsub.s32 %v5570, %v6466
        %v6468 = vrot.slane %v5323, %v6467
        %v6469 = vsel %vm5575, %v6468, %v6464
        %v6470 = vlaneseq
        %v6471 = vshrl.u32 %v6470, 7
        %v6472 = vsub.s32 %v5577, %v6471
        %v6473 = vrot.slane %v5326, %v6472
        %v6474 = vsel %vm5582, %v6473, %v6469
        %v6475 = vlaneseq
        %v6476 = vshrl.u32 %v6475, 7
        %v6477 = vsub.s32 %v5584, %v6476
        %v6478 = vrot.slane %v5329, %v6477
        %v6479 = vsel %vm5589, %v6478, %v6474
        %v6480 = vlaneseq
        %v6481 = vshrl.u32 %v6480, 7
        %v6482 = vsub.s32 %v5591, %v6481
        %v6483 = vrot.slane %v5332, %v6482
        %v6484 = vsel %vm5596, %v6483, %v6479
        %v6485 = vlaneseq
        %v6486 = vshrl.u32 %v6485, 7
        %v6487 = vsub.s32 %v5598, %v6486
        %v6488 = vrot.slane %v5335, %v6487
        %v6489 = vsel %vm5603, %v6488, %v6484
        %v6490 = vlaneseq
        %v6491 = vshrl.u32 %v6490, 7
        %v6492 = vsub.s32 %v5605, %v6491
        %v6493 = vrot.slane %v5338, %v6492
        %v6494 = vsel %vm5610, %v6493, %v6489
        %v6495 = vlaneseq
        %v6496 = vshrl.u32 %v6495, 7
        %v6497 = vsub.s32 %v5612, %v6496
        %v6498 = vrot.slane %v5341, %v6497
        %v6499 = vsel %vm5617, %v6498, %v6494
        %v6500 = vlaneseq
        %v6501 = vshrl.u32 %v6500, 7
        %v6502 = vsub.s32 %v5619, %v6501
        %v6503 = vrot.slane %v5344, %v6502
        %v6504 = vsel %vm5624, %v6503, %v6499
        %v6505 = vlaneseq
        %v6506 = vshrl.u32 %v6505, 7
        %v6507 = vsub.s32 %v5626, %v6506
        %v6508 = vrot.slane %v5347, %v6507
        %v6509 = vsel %vm5631, %v6508, %v6504
        %v6510 = vlaneseq
        %v6511 = vshrl.u32 %v6510, 7
        %v6512 = vsub.s32 %v5633, %v6511
        %v6513 = vrot.slane %v5350, %v6512
        %v6514 = vsel %vm5638, %v6513, %v6509
        %v6515 = vlaneseq
        %v6516 = vshrl.u32 %v6515, 7
        %v6517 = vsub.s32 %v5640, %v6516
        %v6518 = vrot.slane %v5353, %v6517
        %v6519 = vsel %vm5645, %v6518, %v6514
        %v6520 = vlaneseq
        %v6521 = vshrl.u32 %v6520, 7
        %v6522 = vsub.s32 %v5647, %v6521
        %v6523 = vrot.slane %v5356, %v6522
        %v6524 = vsel %vm5652, %v6523, %v6519
        %v6525 = vlaneseq
        %v6526 = vshrl.u32 %v6525, 7
        %v6527 = vsub.s32 %v5654, %v6526
        %v6528 = vrot.slane %v5359, %v6527
        %v6529 = vsel %vm5659, %v6528, %v6524
        %v6530 = vlaneseq
        %v6531 = vshrl.u32 %v6530, 7
        %v6532 = vsub.s32 %v399, %v6531
        %v6533 = vrot.slane %v5362, %v6532
        %v6534 = vlaneseq
        %v6535 = vshrl.u32 %v6534, 7
        %v6536 = vsub.s32 %v5556, %v6535
        %v6537 = vrot.slane %v5365, %v6536
        %v6538 = vsel %vm5561, %v6537, %v6533
        %v6539 = vlaneseq
        %v6540 = vshrl.u32 %v6539, 7
        %v6541 = vsub.s32 %v5563, %v6540
        %v6542 = vrot.slane %v5368, %v6541
        %v6543 = vsel %vm5568, %v6542, %v6538
        %v6544 = vlaneseq
        %v6545 = vshrl.u32 %v6544, 7
        %v6546 = vsub.s32 %v5570, %v6545
        %v6547 = vrot.slane %v5371, %v6546
        %v6548 = vsel %vm5575, %v6547, %v6543
        %v6549 = vlaneseq
        %v6550 = vshrl.u32 %v6549, 7
        %v6551 = vsub.s32 %v5577, %v6550
        %v6552 = vrot.slane %v5374, %v6551
        %v6553 = vsel %vm5582, %v6552, %v6548
        %v6554 = vlaneseq
        %v6555 = vshrl.u32 %v6554, 7
        %v6556 = vsub.s32 %v5584, %v6555
        %v6557 = vrot.slane %v5377, %v6556
        %v6558 = vsel %vm5589, %v6557, %v6553
        %v6559 = vlaneseq
        %v6560 = vshrl.u32 %v6559, 7
        %v6561 = vsub.s32 %v5591, %v6560
        %v6562 = vrot.slane %v5380, %v6561
        %v6563 = vsel %vm5596, %v6562, %v6558
        %v6564 = vlaneseq
        %v6565 = vshrl.u32 %v6564, 7
        %v6566 = vsub.s32 %v5598, %v6565
        %v6567 = vrot.slane %v5383, %v6566
        %v6568 = vsel %vm5603, %v6567, %v6563
        %v6569 = vlaneseq
        %v6570 = vshrl.u32 %v6569, 7
        %v6571 = vsub.s32 %v5605, %v6570
        %v6572 = vrot.slane %v5386, %v6571
        %v6573 = vsel %vm5610, %v6572, %v6568
        %v6574 = vlaneseq
        %v6575 = vshrl.u32 %v6574, 7
        %v6576 = vsub.s32 %v5612, %v6575
        %v6577 = vrot.slane %v5389, %v6576
        %v6578 = vsel %vm5617, %v6577, %v6573
        %v6579 = vlaneseq
        %v6580 = vshrl.u32 %v6579, 7
        %v6581 = vsub.s32 %v5619, %v6580
        %v6582 = vrot.slane %v5392, %v6581
        %v6583 = vsel %vm5624, %v6582, %v6578
        %v6584 = vlaneseq
        %v6585 = vshrl.u32 %v6584, 7
        %v6586 = vsub.s32 %v5626, %v6585
        %v6587 = vrot.slane %v5395, %v6586
        %v6588 = vsel %vm5631, %v6587, %v6583
        %v6589 = vlaneseq
        %v6590 = vshrl.u32 %v6589, 7
        %v6591 = vsub.s32 %v5633, %v6590
        %v6592 = vrot.slane %v5398, %v6591
        %v6593 = vsel %vm5638, %v6592, %v6588
        %v6594 = vlaneseq
        %v6595 = vshrl.u32 %v6594, 7
        %v6596 = vsub.s32 %v5640, %v6595
        %v6597 = vrot.slane %v5401, %v6596
        %v6598 = vsel %vm5645, %v6597, %v6593
        %v6599 = vlaneseq
        %v6600 = vshrl.u32 %v6599, 7
        %v6601 = vsub.s32 %v5647, %v6600
        %v6602 = vrot.slane %v5404, %v6601
        %v6603 = vsel %vm5652, %v6602, %v6598
        %v6604 = vlaneseq
        %v6605 = vshrl.u32 %v6604, 7
        %v6606 = vsub.s32 %v5654, %v6605
        %v6607 = vrot.slane %v5407, %v6606
        %v6608 = vsel %vm5659, %v6607, %v6603
        %v6609 = vlaneseq
        %v6610 = vshrl.u32 %v6609, 7
        %v6611 = vsub.s32 %v399, %v6610
        %v6612 = vrot.slane %v5410, %v6611
        %v6613 = vlaneseq
        %v6614 = vshrl.u32 %v6613, 7
        %v6615 = vsub.s32 %v5556, %v6614
        %v6616 = vrot.slane %v5413, %v6615
        %v6617 = vsel %vm5561, %v6616, %v6612
        %v6618 = vlaneseq
        %v6619 = vshrl.u32 %v6618, 7
        %v6620 = vsub.s32 %v5563, %v6619
        %v6621 = vrot.slane %v5416, %v6620
        %v6622 = vsel %vm5568, %v6621, %v6617
        %v6623 = vlaneseq
        %v6624 = vshrl.u32 %v6623, 7
        %v6625 = vsub.s32 %v5570, %v6624
        %v6626 = vrot.slane %v5419, %v6625
        %v6627 = vsel %vm5575, %v6626, %v6622
        %v6628 = vlaneseq
        %v6629 = vshrl.u32 %v6628, 7
        %v6630 = vsub.s32 %v5577, %v6629
        %v6631 = vrot.slane %v5422, %v6630
        %v6632 = vsel %vm5582, %v6631, %v6627
        %v6633 = vlaneseq
        %v6634 = vshrl.u32 %v6633, 7
        %v6635 = vsub.s32 %v5584, %v6634
        %v6636 = vrot.slane %v5425, %v6635
        %v6637 = vsel %vm5589, %v6636, %v6632
        %v6638 = vlaneseq
        %v6639 = vshrl.u32 %v6638, 7
        %v6640 = vsub.s32 %v5591, %v6639
        %v6641 = vrot.slane %v5428, %v6640
        %v6642 = vsel %vm5596, %v6641, %v6637
        %v6643 = vlaneseq
        %v6644 = vshrl.u32 %v6643, 7
        %v6645 = vsub.s32 %v5598, %v6644
        %v6646 = vrot.slane %v5431, %v6645
        %v6647 = vsel %vm5603, %v6646, %v6642
        %v6648 = vlaneseq
        %v6649 = vshrl.u32 %v6648, 7
        %v6650 = vsub.s32 %v5605, %v6649
        %v6651 = vrot.slane %v5434, %v6650
        %v6652 = vsel %vm5610, %v6651, %v6647
        %v6653 = vlaneseq
        %v6654 = vshrl.u32 %v6653, 7
        %v6655 = vsub.s32 %v5612, %v6654
        %v6656 = vrot.slane %v5437, %v6655
        %v6657 = vsel %vm5617, %v6656, %v6652
        %v6658 = vlaneseq
        %v6659 = vshrl.u32 %v6658, 7
        %v6660 = vsub.s32 %v5619, %v6659
        %v6661 = vrot.slane %v5440, %v6660
        %v6662 = vsel %vm5624, %v6661, %v6657
        %v6663 = vlaneseq
        %v6664 = vshrl.u32 %v6663, 7
        %v6665 = vsub.s32 %v5626, %v6664
        %v6666 = vrot.slane %v5443, %v6665
        %v6667 = vsel %vm5631, %v6666, %v6662
        %v6668 = vlaneseq
        %v6669 = vshrl.u32 %v6668, 7
        %v6670 = vsub.s32 %v5633, %v6669
        %v6671 = vrot.slane %v5446, %v6670
        %v6672 = vsel %vm5638, %v6671, %v6667
        %v6673 = vlaneseq
        %v6674 = vshrl.u32 %v6673, 7
        %v6675 = vsub.s32 %v5640, %v6674
        %v6676 = vrot.slane %v5449, %v6675
        %v6677 = vsel %vm5645, %v6676, %v6672
        %v6678 = vlaneseq
        %v6679 = vshrl.u32 %v6678, 7
        %v6680 = vsub.s32 %v5647, %v6679
        %v6681 = vrot.slane %v5452, %v6680
        %v6682 = vsel %vm5652, %v6681, %v6677
        %v6683 = vlaneseq
        %v6684 = vshrl.u32 %v6683, 7
        %v6685 = vsub.s32 %v5654, %v6684
        %v6686 = vrot.slane %v5455, %v6685
        %v6687 = vsel %vm5659, %v6686, %v6682
        %v6688 = vlaneseq
        %v6689 = vshrl.u32 %v6688, 7
        %v6690 = vsub.s32 %v399, %v6689
        %v6691 = vrot.slane %v5458, %v6690
        %v6692 = vlaneseq
        %v6693 = vshrl.u32 %v6692, 7
        %v6694 = vsub.s32 %v5556, %v6693
        %v6695 = vrot.slane %v5461, %v6694
        %v6696 = vsel %vm5561, %v6695, %v6691
        %v6697 = vlaneseq
        %v6698 = vshrl.u32 %v6697, 7
        %v6699 = vsub.s32 %v5563, %v6698
        %v6700 = vrot.slane %v5464, %v6699
        %v6701 = vsel %vm5568, %v6700, %v6696
        %v6702 = vlaneseq
        %v6703 = vshrl.u32 %v6702, 7
        %v6704 = vsub.s32 %v5570, %v6703
        %v6705 = vrot.slane %v5467, %v6704
        %v6706 = vsel %vm5575, %v6705, %v6701
        %v6707 = vlaneseq
        %v6708 = vshrl.u32 %v6707, 7
        %v6709 = vsub.s32 %v5577, %v6708
        %v6710 = vrot.slane %v5470, %v6709
        %v6711 = vsel %vm5582, %v6710, %v6706
        %v6712 = vlaneseq
        %v6713 = vshrl.u32 %v6712, 7
        %v6714 = vsub.s32 %v5584, %v6713
        %v6715 = vrot.slane %v5473, %v6714
        %v6716 = vsel %vm5589, %v6715, %v6711
        %v6717 = vlaneseq
        %v6718 = vshrl.u32 %v6717, 7
        %v6719 = vsub.s32 %v5591, %v6718
        %v6720 = vrot.slane %v5476, %v6719
        %v6721 = vsel %vm5596, %v6720, %v6716
        %v6722 = vlaneseq
        %v6723 = vshrl.u32 %v6722, 7
        %v6724 = vsub.s32 %v5598, %v6723
        %v6725 = vrot.slane %v5479, %v6724
        %v6726 = vsel %vm5603, %v6725, %v6721
        %v6727 = vlaneseq
        %v6728 = vshrl.u32 %v6727, 7
        %v6729 = vsub.s32 %v5605, %v6728
        %v6730 = vrot.slane %v5482, %v6729
        %v6731 = vsel %vm5610, %v6730, %v6726
        %v6732 = vlaneseq
        %v6733 = vshrl.u32 %v6732, 7
        %v6734 = vsub.s32 %v5612, %v6733
        %v6735 = vrot.slane %v5485, %v6734
        %v6736 = vsel %vm5617, %v6735, %v6731
        %v6737 = vlaneseq
        %v6738 = vshrl.u32 %v6737, 7
        %v6739 = vsub.s32 %v5619, %v6738
        %v6740 = vrot.slane %v5488, %v6739
        %v6741 = vsel %vm5624, %v6740, %v6736
        %v6742 = vlaneseq
        %v6743 = vshrl.u32 %v6742, 7
        %v6744 = vsub.s32 %v5626, %v6743
        %v6745 = vrot.slane %v5491, %v6744
        %v6746 = vsel %vm5631, %v6745, %v6741
        %v6747 = vlaneseq
        %v6748 = vshrl.u32 %v6747, 7
        %v6749 = vsub.s32 %v5633, %v6748
        %v6750 = vrot.slane %v5494, %v6749
        %v6751 = vsel %vm5638, %v6750, %v6746
        %v6752 = vlaneseq
        %v6753 = vshrl.u32 %v6752, 7
        %v6754 = vsub.s32 %v5640, %v6753
        %v6755 = vrot.slane %v5497, %v6754
        %v6756 = vsel %vm5645, %v6755, %v6751
        %v6757 = vlaneseq
        %v6758 = vshrl.u32 %v6757, 7
        %v6759 = vsub.s32 %v5647, %v6758
        %v6760 = vrot.slane %v5500, %v6759
        %v6761 = vsel %vm5652, %v6760, %v6756
        %v6762 = vlaneseq
        %v6763 = vshrl.u32 %v6762, 7
        %v6764 = vsub.s32 %v5654, %v6763
        %v6765 = vrot.slane %v5503, %v6764
        %v6766 = vsel %vm5659, %v6765, %v6761
        %v6767 = vlaneseq
        %v6768 = vshrl.u32 %v6767, 7
        %v6769 = vsub.s32 %v399, %v6768
        %v6770 = vrot.slane %v5506, %v6769
        %v6771 = vlaneseq
        %v6772 = vshrl.u32 %v6771, 7
        %v6773 = vsub.s32 %v5556, %v6772
        %v6774 = vrot.slane %v5509, %v6773
        %v6775 = vsel %vm5561, %v6774, %v6770
        %v6776 = vlaneseq
        %v6777 = vshrl.u32 %v6776, 7
        %v6778 = vsub.s32 %v5563, %v6777
        %v6779 = vrot.slane %v5512, %v6778
        %v6780 = vsel %vm5568, %v6779, %v6775
        %v6781 = vlaneseq
        %v6782 = vshrl.u32 %v6781, 7
        %v6783 = vsub.s32 %v5570, %v6782
        %v6784 = vrot.slane %v5515, %v6783
        %v6785 = vsel %vm5575, %v6784, %v6780
        %v6786 = vlaneseq
        %v6787 = vshrl.u32 %v6786, 7
        %v6788 = vsub.s32 %v5577, %v6787
        %v6789 = vrot.slane %v5518, %v6788
        %v6790 = vsel %vm5582, %v6789, %v6785
        %v6791 = vlaneseq
        %v6792 = vshrl.u32 %v6791, 7
        %v6793 = vsub.s32 %v5584, %v6792
        %v6794 = vrot.slane %v5521, %v6793
        %v6795 = vsel %vm5589, %v6794, %v6790
        %v6796 = vlaneseq
        %v6797 = vshrl.u32 %v6796, 7
        %v6798 = vsub.s32 %v5591, %v6797
        %v6799 = vrot.slane %v5524, %v6798
        %v6800 = vsel %vm5596, %v6799, %v6795
        %v6801 = vlaneseq
        %v6802 = vshrl.u32 %v6801, 7
        %v6803 = vsub.s32 %v5598, %v6802
        %v6804 = vrot.slane %v5527, %v6803
        %v6805 = vsel %vm5603, %v6804, %v6800
        %v6806 = vlaneseq
        %v6807 = vshrl.u32 %v6806, 7
        %v6808 = vsub.s32 %v5605, %v6807
        %v6809 = vrot.slane %v5530, %v6808
        %v6810 = vsel %vm5610, %v6809, %v6805
        %v6811 = vlaneseq
        %v6812 = vshrl.u32 %v6811, 7
        %v6813 = vsub.s32 %v5612, %v6812
        %v6814 = vrot.slane %v5533, %v6813
        %v6815 = vsel %vm5617, %v6814, %v6810
        %v6816 = vlaneseq
        %v6817 = vshrl.u32 %v6816, 7
        %v6818 = vsub.s32 %v5619, %v6817
        %v6819 = vrot.slane %v5536, %v6818
        %v6820 = vsel %vm5624, %v6819, %v6815
        %v6821 = vlaneseq
        %v6822 = vshrl.u32 %v6821, 7
        %v6823 = vsub.s32 %v5626, %v6822
        %v6824 = vrot.slane %v5539, %v6823
        %v6825 = vsel %vm5631, %v6824, %v6820
        %v6826 = vlaneseq
        %v6827 = vshrl.u32 %v6826, 7
        %v6828 = vsub.s32 %v5633, %v6827
        %v6829 = vrot.slane %v5542, %v6828
        %v6830 = vsel %vm5638, %v6829, %v6825
        %v6831 = vlaneseq
        %v6832 = vshrl.u32 %v6831, 7
        %v6833 = vsub.s32 %v5640, %v6832
        %v6834 = vrot.slane %v5545, %v6833
        %v6835 = vsel %vm5645, %v6834, %v6830
        %v6836 = vlaneseq
        %v6837 = vshrl.u32 %v6836, 7
        %v6838 = vsub.s32 %v5647, %v6837
        %v6839 = vrot.slane %v5548, %v6838
        %v6840 = vsel %vm5652, %v6839, %v6835
        %v6841 = vlaneseq
        %v6842 = vshrl.u32 %v6841, 7
        %v6843 = vsub.s32 %v5654, %v6842
        %v6844 = vrot.slane %v5551, %v6843
        %v6845 = vsel %vm5659, %v6844, %v6840
        %vm6846 = vcmask 1041409
        %v6847 = vsel %vm6846, %v5739, %v5660
        %vm6848 = vcmask 1042434
        %v6849 = vsel %vm6848, %v5818, %v6847
        %vm6850 = vcmask 1043459
        %v6851 = vsel %vm6850, %v5897, %v6849
        %vm6852 = vcmask 1044484
        %v6853 = vsel %vm6852, %v5976, %v6851
        %vm6854 = vcmask 1045509
        %v6855 = vsel %vm6854, %v6055, %v6853
        %vm6856 = vcmask 1046534
        %v6857 = vsel %vm6856, %v6134, %v6855
        %vm6858 = vcmask 1047559
        %v6859 = vsel %vm6858, %v6213, %v6857
        %v6860 = vsel %vm6846, %v6371, %v6292
        %v6861 = vsel %vm6848, %v6450, %v6860
        %v6862 = vsel %vm6850, %v6529, %v6861
        %v6863 = vsel %vm6852, %v6608, %v6862
        %v6864 = vsel %vm6854, %v6687, %v6863
        %v6865 = vsel %vm6856, %v6766, %v6864
        %v6866 = vsel %vm6858, %v6845, %v6865
        %6869 = vmax.xlane.f32.xlu0 %v6859
        %v6870 = vpop.xlane.xlu0 %6869
        %6871 = vmax.xlane.f32.xlu0 %v6866
        %v6872 = vpop.xlane.xlu0 %6871
        %v6873 = vmul.f32 %v388, %v402
        %v6874 = vmul.f32 %v397, %v402
        %6875 = vadd.xlane.f32.xlu0 %v6873
        %v6876 = vpop.xlane.xlu0 %6875
        %6877 = vadd.xlane.f32.xlu0 %v6874
        %v6878 = vpop.xlane.xlu0 %6877
        %v6879 = vadd.f32 %v6876, %v6878
        %v6880 = vmul.f32 %v6879, 0.00390625
        %v6881 = vsub.f32 %v388, %v6880
        %v6882 = vsub.f32 %v397, %v6880
        %v6883 = vmul.f32 %v6881, %v402
        %v6884 = vmul.f32 %v6882, %v402
        %v6885 = vmul.f32 %v6883, %v6883
        %v6886 = vmul.f32 %v6884, %v6884
        %6887 = vadd.xlane.f32.xlu0 %v6885
        %v6888 = vpop.xlane.xlu0 %6887
        %6889 = vadd.xlane.f32.xlu0 %v6886
        %v6890 = vpop.xlane.xlu0 %6889
        %v6891 = vadd.f32 %v6888, %v6890
        %v6892 = vmul.f32 %v6891, 0.00390625
        %v6893 = vsub.f32 %v388, %v6870
        %v6894 = vsub.f32 %v397, %v6872
        %v6895 = vmul.f32 %v6893, %v402
        %v6896 = vmul.f32 %v6894, %v402
        %6897 = vadd.xlane.f32.xlu0 %v6895
        %v6898 = vpop.xlane.xlu0 %6897
        %6899 = vadd.xlane.f32.xlu0 %v6896
        %v6900 = vpop.xlane.xlu0 %6899
        %v6901 = vadd.f32 %v6898, %v6900
        %v6902 = vmul.f32 %v6901, 0.00390625
        %v6903 = vsub.f32 %v6895, %v6902
        %v6904 = vsub.f32 %v6896, %v6902
        %v6905 = vmul.f32 %v6903, %v402
        %v6906 = vmul.f32 %v6904, %v402
        %v6907 = vmul.f32 %v6905, %v6905
        %v6908 = vmul.f32 %v6906, %v6906
        %6909 = vadd.xlane.f32.xlu0 %v6907
        %v6910 = vpop.xlane.xlu0 %6909
        %6911 = vadd.xlane.f32.xlu0 %v6908
        %v6912 = vpop.xlane.xlu0 %6911
        %v6913 = vadd.f32 %v6910, %v6912
        %v6914 = vmul.f32 %v6913, 0.00390625
        %v6915 = vld [vmem:[%s321] sm:$0xff]
        %v6916 = vld [vmem:[%s328] sm:$0xff]
        %s6917 = scalar_lea.vmem %s321, 8 [#allocation4]
        %v6918 = vld [vmem:[%s6917] sm:$0xff]
        %s6919 = scalar_lea.vmem %s328, 8 [#allocation5]
        %v6920 = vld [vmem:[%s6919] sm:$0xff]
        %v6921 = vadd.f32 %v6892, 1e-05
        %v6922 = vrsqrt.pop %v6921
        %v6923 = vmul.f32 %v6922, %v6915
        %v6924 = vmul.f32 %v6880, %v6923
        %v6925 = vsub.f32 %v6916, %v6924
        %v6926 = vadd.f32 %v6914, 1e-05
        %v6927 = vrsqrt.pop %v6926
        %v6928 = vmul.f32 %v6927, %v6918
        %v6929 = vadd.f32 %v6902, %v6870
        %v6930 = vadd.f32 %v6902, %v6872
        %v6931 = vmul.f32 %v6929, %v6928
        %v6932 = vmul.f32 %v6930, %v6928
        %v6933 = vsub.f32 %v6920, %v6931
        %v6934 = vsub.f32 %v6920, %v6932
        %6936 = vset.pattern.permute.xlu0 0
        %6937 = vperm.xlu0 %6936, %v6923
        %v6938 = vpop.permute.xlu0 %6937
        %v6940 = vmul.f32 %v388, %v6938
        %v6941 = vmul.f32 %v397, %v6938
        %6943 = vset.pattern.permute.xlu0 0
        %6944 = vperm.xlu0 %6943, %v6925
        %v6945 = vpop.permute.xlu0 %6944
        %v6947 = vadd.f32 %v6940, %v6945
        %v6948 = vadd.f32 %v6941, %v6945
        %6949 = vst [vmem:[%s362] sm:$0xff] %v6947
        %6950 = vst [vmem:[%s362 + $0x10] sm:$0xff] %v6948
        %6952 = vset.pattern.permute.xlu0 0
        %6953 = vperm.xlu0 %6952, %v6928
        %v6954 = vpop.permute.xlu0 %6953
        %v6956 = vmul.f32 %v388, %v6954
        %v6957 = vmul.f32 %v397, %v6954
        %6959 = vset.pattern.permute.xlu0 0
        %6960 = vperm.xlu0 %6959, %v6933
        %v6961 = vpop.permute.xlu0 %6960
        %6964 = vset.pattern.permute.xlu0 0
        %6965 = vperm.xlu0 %6964, %v6934
        %v6966 = vpop.permute.xlu0 %6965
        %v6968 = vadd.f32 %v6956, %v6961
        %v6969 = vadd.f32 %v6957, %v6966
        %s6970 = scalar_lea.vmem %s362, 8 [#allocation6]
        %6971 = vst [vmem:[%s6970] sm:$0xff] %v6968
        %6972 = vst [vmem:[%s6970 + $0x10] sm:$0xff] %v6969
        %s6973 = sand.u32 %s130, 1
        %s6974 = scalar_lea.sflag [#allocation7], %s6973
        %s6975 = sand.u32 %s130, 1
        %s6976 = smul.addr %s6975, 32
        %s6977 = scalar_lea.vmem [#allocation6], %s6976
        // Predicated region
        $region151: #{tpu_custom_call.1} parent=137 // pred_check
          %p6978 = pneg %p140
        $region152: #{tpu_custom_call.1} parent=137 // pred_check_branch
          %6980 = sbr.rel (%p6978) target = $region154
        $region153: #{tpu_custom_call.1} parent=137 // pred_region
          %s6982 = ssub.s32 512, 512
          %6983 = vsyncadd %s6974, %s6982
          %s6984 = smul.addr %s18, 128
          %s6985 = scalar_lea.hbm %s4, %s6984
          %s6986 = sshll.u32 %s6977, 4
          %s6987 = int_to_ptr.vmem [resolvable:$true] %s6986
          %6992 = dma.vmem_to_hbm [thread:$0]  %s6987, 512, %s6985, %s6974, 128, 256, 8
        $region154: #{tpu_custom_call.1} parent=137 // pred_fallthru
          _
      $region138: #{tpu_custom_call.1} parent=5 // pred_fallthru
        _
      %p6993 = scmp.le.s32.totalorder 2, %s13
      // Predicated region
      $region155: #{tpu_custom_call.1} parent=5 // pred_check
        %p6994 = pneg %p6993
      $region156: #{tpu_custom_call.1} parent=5 // pred_check_branch
        %6996 = sbr.rel (%p6994) target = $region158
      $region157: #{tpu_custom_call.1} parent=5 // pred_region
        %s6997 = ssub.s32 %s13, 2
        // Predicated region
        $region159: #{tpu_custom_call.1} parent=157 // pred_check
          %p6998 = pneg %p146
        $region160: #{tpu_custom_call.1} parent=157 // pred_check_branch
          %7000 = sbr.rel (%p6998) target = $region162
        $region161: #{tpu_custom_call.1} parent=157 // pred_region
          %s7001 = sand.u32 %s131, 1
          %s7002 = scalar_lea.sflag [#allocation7], %s7001
          %s7003 = sand.u32 %s131, 1
          %s7004 = smul.addr %s7003, 32
          %s7005 = scalar_lea.vmem [#allocation6], %s7004
          %7006 = dma.done %s7002, 512
        $region162: #{tpu_custom_call.1} parent=157 // pred_fallthru
          _
      $region158: #{tpu_custom_call.1} parent=5 // pred_fallthru
        _
    $region6: #{tpu_custom_call.1} parent=1 // loop_footer
      %s17 = sadd.s32 1, %s13
    $region7: #{tpu_custom_call.1} parent=1 // loop_footer_branch
      %12 = sbr.rel target = $region3
    $region8: #{tpu_custom_call.1} parent=1 // loop_exit
      _
    %7007 = vsyncpa [#allocation7], 1
    %s7008 = scalar_lea.sflag [#allocation7], 1
    %7009 = vsyncpa %s7008, 1

</llo_original>
